<compile_context>
chip_gen: v6e
topology: v6e:2x2x1
jax: 0.10.0
libtpu: 0.0.40
codegen_flags: <defaults>
</compile_context>

<pallas_src>
import functools

import jax
import jax.numpy as jnp
from jax import lax
from jax.experimental import pallas as pl
from jax.experimental.pallas import tpu as pltpu

LEAKY_SLOPE = 0.2
COMPUTE_DTYPE = jnp.bfloat16          # MXU operand dtype (weights + patch tiles)


def _conv_out(h, K, S, pad):
    return (h + 2 * pad - K) // S + 1


# ------------------------------ Pallas kernel ------------------------------ #
def _conv_kernel(hval_ref, w_ref, b_ref, x_ref, y_ref, *,
                 K, S, halo_out, h_out_max, apply_input_act):
    """One Conv2d((K,1), stride (S,1)) for one period (grid step).

    x_ref : [Cin,  Hbuf_in,  B*Wmax]   previous layer's pre-activation buffer
    w_ref : [K, Cout, Cin]             bf16 weights for this period
    b_ref : [Cout, 1]                  f32 bias
    y_ref : [Cout, Hbuf_out, B*Wmax]   pre-activation output + zero halo rows
    hval_ref (SMEM): [P] int32         valid output height per period
    """
    Cin, _, BW = x_ref.shape
    Cout = y_ref.shape[0]
    M = h_out_max * BW

    acc = jnp.zeros((Cout, M), jnp.float32)
    for k in range(K):                                    # static, unrolled taps
        # in-kernel im2col: strided sublane read of tap k (rows k, k+S, ...)
        if S == 1:
            xk = x_ref[:, pl.ds(k, h_out_max), :]
        else:
            xk = x_ref[:, pl.ds(k, h_out_max, stride=S), :]
        xk = xk.astype(jnp.float32)
        if apply_input_act:                               # prev layer's LeakyReLU, fused
            xk = jnp.maximum(xk, LEAKY_SLOPE * xk)
        xk = xk.reshape(Cin, M).astype(COMPUTE_DTYPE)     # lane-dense M for the MXU
        acc = acc + jnp.dot(w_ref[k], xk, preferred_element_type=jnp.float32)

    y = acc + b_ref[...].astype(jnp.float32)              # [Cout, M]

    # Zero every row past this period's valid output height so the shared
    # padded buffer is numerically identical to per-period zero padding.
    h_valid = hval_ref[pl.program_id(0)]
    col = lax.broadcasted_iota(jnp.int32, (1, M), 1)
    y = jnp.where(col < h_valid * BW, y, 0.0)
    y = y.reshape(Cout, h_out_max, BW).astype(y_ref.dtype)

    if halo_out > 0:
        # write the next conv's zero-padding halo directly (no inter-layer pad)
        zeros = jnp.zeros((Cout, halo_out, BW), y_ref.dtype)
        y_ref[:, pl.ds(0, halo_out), :] = zeros
        y_ref[:, pl.ds(halo_out, h_out_max), :] = y
        y_ref[:, pl.ds(halo_out + h_out_max, halo_out), :] = zeros
    else:
        y_ref[...] = y


def conv_layer_pallas(x_buf, w, b, h_out_valid, *, K, S, halo_out, h_out_max,
                      apply_input_act, act_dtype):
    """All periods of one conv depth in a single pallas_call (grid over P)."""
    P, Cin, Hbuf_in, BW = x_buf.shape
    Cout = w.shape[2]
    Hbuf_out = h_out_max + 2 * halo_out

    kernel = functools.partial(
        _conv_kernel, K=K, S=S, halo_out=halo_out, h_out_max=h_out_max,
        apply_input_act=apply_input_act)

    flops = 2 * P * K * Cout * Cin * h_out_max * BW
    bytes_accessed = int(
        x_buf.size * x_buf.dtype.itemsize
        + w.size * w.dtype.itemsize
        + b.size * b.dtype.itemsize
        + h_out_valid.size * 4
        + P * Cout * Hbuf_out * BW * jnp.dtype(act_dtype).itemsize)

    return pl.pallas_call(
        kernel,
        grid=(P,),
        in_specs=[
            pl.BlockSpec(memory_space=pltpu.MemorySpace.SMEM),            # valid H / period
            pl.BlockSpec((None, K, Cout, Cin), lambda p: (p, 0, 0, 0)),    # weights
            pl.BlockSpec((None, Cout, 1), lambda p: (p, 0, 0)),            # bias
            pl.BlockSpec((None, Cin, Hbuf_in, BW), lambda p: (p, 0, 0, 0)),  # raw activations
        ],
        out_specs=pl.BlockSpec((None, Cout, Hbuf_out, BW), lambda p: (p, 0, 0, 0)),
        out_shape=jax.ShapeDtypeStruct((P, Cout, Hbuf_out, BW), act_dtype),
        compiler_params=pltpu.CompilerParams(
            dimension_semantics=("parallel",),      # v7x: periods split over 2 TCs
            vmem_limit_bytes=32 * 1024 * 1024),
        cost_estimate=pl.CostEstimate(
            flops=flops, transcendentals=0, bytes_accessed=bytes_accessed),
    )(h_out_valid, w, b, x_buf)


# --------------------------------- params ---------------------------------- #
def init_mpd_params(key, periods, n_channels, out_size, capacity, n_layers,
                    kernel_size, stride):
    """Per-depth parameters stacked across periods.
    w: [P, K, Cout, Cin] bf16, b: [P, Cout, 1] f32 (PyTorch Conv2d-style init)."""
    P = len(periods)
    channels = [n_channels] + [capacity * 2 ** i for i in range(n_layers)]
    layers = []
    for c in range(n_layers + 1):
        if c < n_layers:
            Cin, Cout = channels[c], channels[c + 1]
            K, S, pad = kernel_size, stride, kernel_size // 2
        else:                                   # final 1x1 conv
            Cin, Cout = channels[-1], out_size
            K, S, pad = 1, 1, 0
        bound = 1.0 / (Cin * K) ** 0.5
        ws, bs = [], []
        for _ in range(P):
            key, kw, kb = jax.random.split(key, 3)
            wv = jax.random.uniform(kw, (Cout, Cin, K), jnp.float32, -bound, bound)
            bv = jax.random.uniform(kb, (Cout,), jnp.float32, -bound, bound)
            ws.append(jnp.transpose(wv, (2, 0, 1)))             # [K, Cout, Cin]
            bs.append(bv.reshape(Cout, 1))
        layers.append(dict(
            w=jnp.stack(ws).astype(COMPUTE_DTYPE),              # [P, K, Cout, Cin]
            b=jnp.stack(bs),                                    # [P, Cout, 1] f32
            K=K, S=S, pad=pad))
    return layers


# ------------------------ MultiPeriodDiscriminator -------------------------- #
def multi_period_discriminator(x, *, periods, layers,
                               act_dtype=jnp.float32, features_nchw=False):
    """x: [B, C, T].  Returns list (per period) of lists (per conv) of
    pre-activation feature maps, CBHW [Cout, B, H, W] by default
    (NCHW via features_nchw=True)."""
    B, C, T = x.shape
    P = len(periods)
    Wmax = max(periods)
    BW = B * Wmax

    # fold(x, n) per period and pack all periods into one zero-padded
    # [P, C, Hbuf0, B*Wmax] buffer: valid rows [pad0, pad0 + H_p), valid lanes
    # b*Wmax + w with w < period.  Done once, in XLA, on the tiny raw input.
    h_in = [-(-T // n) for n in periods]                  # ceil(T / n)
    h_max = max(h_in)
    pad0 = layers[0]["pad"]
    hbuf0 = h_max + 2 * pad0
    slabs = []
    for n, hp in zip(periods, h_in):
        xf = jnp.pad(x, ((0, 0), (0, 0), (0, hp * n - T)))        # fold: zero-pad T
        xf = xf.reshape(B, C, hp, n)
        xf = jnp.pad(xf, ((0, 0), (0, 0), (0, 0), (0, Wmax - n)))
        xf = jnp.transpose(xf, (1, 2, 0, 3)).reshape(C, hp, BW)
        xf = jnp.pad(xf, ((0, 0), (pad0, hbuf0 - pad0 - hp), (0, 0)))
        slabs.append(xf)
    buf = jnp.stack(slabs).astype(act_dtype)              # [P, C, Hbuf0, BW]

    features = [[] for _ in range(P)]
    n_total = len(layers)
    for c, layer in enumerate(layers):
        K, S, pad = layer["K"], layer["S"], layer["pad"]
        h_out = [_conv_out(h, K, S, pad) for h in h_in]
        h_out_max = _conv_out(h_max, K, S, pad)
        halo_out = layers[c + 1]["pad"] if c + 1 < n_total else 0

        buf = conv_layer_pallas(
            buf, layer["w"], layer["b"], jnp.asarray(h_out, dtype=jnp.int32),
            K=K, S=S, halo_out=halo_out, h_out_max=h_out_max,
            apply_input_act=(c > 0), act_dtype=act_dtype)

        # slice each period's valid pre-activation feature map (output only;
        # the layer-to-layer hot path never leaves the shared buffer layout).
        Cout = layer["w"].shape[2]
        for p, (n, hp) in enumerate(zip(periods, h_out)):
            f = buf[p, :, halo_out:halo_out + hp, :]
            f = f.reshape(Cout, hp, B, Wmax)[:, :, :, :n]
            f = jnp.transpose(f, (0, 2, 1, 3))                   # CBHW
            if features_nchw:
                f = jnp.transpose(f, (1, 0, 2, 3))               # PyTorch NCHW
            features[p].append(f)

        h_in, h_max = h_out, h_out_max
    return features


# ----------------------------------- main ----------------------------------- #
if __name__ == "__main__":
    periods = (2, 3, 5)
    n_channels, out_size = 1, 1
    capacity, n_layers, kernel_size, stride = 4, 3, 5, 3

    key = jax.random.PRNGKey(0)
    key, xkey, pkey = jax.random.split(key, 3)
    x = jax.random.normal(xkey, (2, n_channels, 64), jnp.float32)   # [B, C, T]

    params = init_mpd_params(pkey, periods, n_channels, out_size,
                             capacity, n_layers, kernel_size, stride)

    fwd = jax.jit(functools.partial(multi_period_discriminator,
                                    periods=periods, layers=params))
    out = fwd(x)
    jax.block_until_ready(out)

    # one feature list per period, n_layers+1 conv (pre-activation) maps each,
    # CBHW layout [Cout, B, H, W]; period 2: H = 32 -> 11 -> 4 -> 2 -> 2.
    assert len(out) == len(periods)
    assert all(len(f) == n_layers + 1 for f in out)
    assert out[0][0].shape == (capacity, 2, 11, 2)
    assert out[0][-1].shape == (out_size, 2, 2, 2)
    assert out[2][0].shape == (capacity, 2, 5, 5)
    assert all(bool(jnp.all(jnp.isfinite(fm.astype(jnp.float32))))
               for feats in out for fm in feats)

    print("KERNEL_OK")
</pallas_src>

<mosaic_0001>
module attributes {stable_mosaic.version = 11 : i64} {
  func.func @_conv_kernel(%arg0: i32, %arg1: memref<3xi32, #tpu.memory_space<smem>>, %arg2: memref<1x5x4x1xbf16, #tpu.memory_space<vmem>>, %arg3: memref<1x4x1xf32, #tpu.memory_space<vmem>>, %arg4: memref<1x1x36x10xf32, #tpu.memory_space<vmem>>, %arg5: memref<1x4x15x10xf32, #tpu.memory_space<vmem>>) attributes {dimension_semantics = [#tpu.dimension_semantics<parallel>], iteration_bounds = array<i64: 3>, scalar_prefetch = 0 : i64, scratch_operands = 0 : i64, tpu.core_type = #tpu.core_type<tc>, window_params = [{transform_indices = @transform_0, window_bounds = array<i64: 3>}, {transform_indices = @transform_1, window_bounds = array<i64: 1, 5, 4, 1>}, {transform_indices = @transform_2, window_bounds = array<i64: 1, 4, 1>}, {transform_indices = @transform_3, window_bounds = array<i64: 1, 1, 36, 10>}, {transform_indices = @transform_4, window_bounds = array<i64: 1, 4, 15, 10>}]} {
    %cst = arith.constant 0.000000e+00 : f32
    %0 = vector.broadcast %cst : f32 to vector<4x110xf32>
    %c0 = arith.constant 0 : index
    %c0_0 = arith.constant 0 : index
    %c0_1 = arith.constant 0 : index
    %c0_2 = arith.constant 0 : index
    %1 = tpu.strided_load %arg4[%c0, %c0_0, %c0_1, %c0_2] {strides = array<i32: 1, 1, 3, 1>} : memref<1x1x36x10xf32, #tpu.memory_space<vmem>>, vector<1x1x11x10xf32>
    %2 = vector.shape_cast %1 : vector<1x1x11x10xf32> to vector<1x11x10xf32>
    %3 = vector.shape_cast %2 : vector<1x11x10xf32> to vector<1x110xf32>
    %4 = arith.truncf %3 : vector<1x110xf32> to vector<1x110xbf16>
    %c0_3 = arith.constant 0 : index
    %c0_4 = arith.constant 0 : index
    %c0_5 = arith.constant 0 : index
    %c0_6 = arith.constant 0 : index
    %5 = vector.load %arg2[%c0_3, %c0_4, %c0_5, %c0_6] : memref<1x5x4x1xbf16, #tpu.memory_space<vmem>>, vector<1x1x4x1xbf16>
    %6 = vector.shape_cast %5 : vector<1x1x4x1xbf16> to vector<4x1xbf16>
    %cst_7 = arith.constant dense<0.000000e+00> : vector<4x110xf32>
    %7 = tpu.matmul %6, %4, %cst_7 {dimension_numbers = #tpu.dot_dimension_numbers<[1], [0], [0], [1], [0, 0, 1, 1], [], []>} : vector<4x1xbf16>, vector<1x110xbf16>, vector<4x110xf32> -> vector<4x110xf32>
    %8 = arith.addf %0, %7 : vector<4x110xf32>
    %c0_8 = arith.constant 0 : index
    %c0_9 = arith.constant 0 : index
    %c1 = arith.constant 1 : index
    %c0_10 = arith.constant 0 : index
    %9 = tpu.strided_load %arg4[%c0_8, %c0_9, %c1, %c0_10] {strides = array<i32: 1, 1, 3, 1>} : memref<1x1x36x10xf32, #tpu.memory_space<vmem>>, vector<1x1x11x10xf32>
    %10 = vector.shape_cast %9 : vector<1x1x11x10xf32> to vector<1x11x10xf32>
    %11 = vector.shape_cast %10 : vector<1x11x10xf32> to vector<1x110xf32>
    %12 = arith.truncf %11 : vector<1x110xf32> to vector<1x110xbf16>
    %c0_11 = arith.constant 0 : index
    %c1_12 = arith.constant 1 : index
    %c0_13 = arith.constant 0 : index
    %c0_14 = arith.constant 0 : index
    %13 = vector.load %arg2[%c0_11, %c1_12, %c0_13, %c0_14] : memref<1x5x4x1xbf16, #tpu.memory_space<vmem>>, vector<1x1x4x1xbf16>
    %14 = vector.shape_cast %13 : vector<1x1x4x1xbf16> to vector<4x1xbf16>
    %cst_15 = arith.constant dense<0.000000e+00> : vector<4x110xf32>
    %15 = tpu.matmul %14, %12, %cst_15 {dimension_numbers = #tpu.dot_dimension_numbers<[1], [0], [0], [1], [0, 0, 1, 1], [], []>} : vector<4x1xbf16>, vector<1x110xbf16>, vector<4x110xf32> -> vector<4x110xf32>
    %16 = arith.addf %8, %15 : vector<4x110xf32>
    %c0_16 = arith.constant 0 : index
    %c0_17 = arith.constant 0 : index
    %c2 = arith.constant 2 : index
    %c0_18 = arith.constant 0 : index
    %17 = tpu.strided_load %arg4[%c0_16, %c0_17, %c2, %c0_18] {strides = array<i32: 1, 1, 3, 1>} : memref<1x1x36x10xf32, #tpu.memory_space<vmem>>, vector<1x1x11x10xf32>
    %18 = vector.shape_cast %17 : vector<1x1x11x10xf32> to vector<1x11x10xf32>
    %19 = vector.shape_cast %18 : vector<1x11x10xf32> to vector<1x110xf32>
    %20 = arith.truncf %19 : vector<1x110xf32> to vector<1x110xbf16>
    %c0_19 = arith.constant 0 : index
    %c2_20 = arith.constant 2 : index
    %c0_21 = arith.constant 0 : index
    %c0_22 = arith.constant 0 : index
    %21 = vector.load %arg2[%c0_19, %c2_20, %c0_21, %c0_22] : memref<1x5x4x1xbf16, #tpu.memory_space<vmem>>, vector<1x1x4x1xbf16>
    %22 = vector.shape_cast %21 : vector<1x1x4x1xbf16> to vector<4x1xbf16>
    %cst_23 = arith.constant dense<0.000000e+00> : vector<4x110xf32>
    %23 = tpu.matmul %22, %20, %cst_23 {dimension_numbers = #tpu.dot_dimension_numbers<[1], [0], [0], [1], [0, 0, 1, 1], [], []>} : vector<4x1xbf16>, vector<1x110xbf16>, vector<4x110xf32> -> vector<4x110xf32>
    %24 = arith.addf %16, %23 : vector<4x110xf32>
    %c0_24 = arith.constant 0 : index
    %c0_25 = arith.constant 0 : index
    %c3 = arith.constant 3 : index
    %c0_26 = arith.constant 0 : index
    %25 = tpu.strided_load %arg4[%c0_24, %c0_25, %c3, %c0_26] {strides = array<i32: 1, 1, 3, 1>} : memref<1x1x36x10xf32, #tpu.memory_space<vmem>>, vector<1x1x11x10xf32>
    %26 = vector.shape_cast %25 : vector<1x1x11x10xf32> to vector<1x11x10xf32>
    %27 = vector.shape_cast %26 : vector<1x11x10xf32> to vector<1x110xf32>
    %28 = arith.truncf %27 : vector<1x110xf32> to vector<1x110xbf16>
    %c0_27 = arith.constant 0 : index
    %c3_28 = arith.constant 3 : index
    %c0_29 = arith.constant 0 : index
    %c0_30 = arith.constant 0 : index
    %29 = vector.load %arg2[%c0_27, %c3_28, %c0_29, %c0_30] : memref<1x5x4x1xbf16, #tpu.memory_space<vmem>>, vector<1x1x4x1xbf16>
    %30 = vector.shape_cast %29 : vector<1x1x4x1xbf16> to vector<4x1xbf16>
    %cst_31 = arith.constant dense<0.000000e+00> : vector<4x110xf32>
    %31 = tpu.matmul %30, %28, %cst_31 {dimension_numbers = #tpu.dot_dimension_numbers<[1], [0], [0], [1], [0, 0, 1, 1], [], []>} : vector<4x1xbf16>, vector<1x110xbf16>, vector<4x110xf32> -> vector<4x110xf32>
    %32 = arith.addf %24, %31 : vector<4x110xf32>
    %c0_32 = arith.constant 0 : index
    %c0_33 = arith.constant 0 : index
    %c4 = arith.constant 4 : index
    %c0_34 = arith.constant 0 : index
    %33 = tpu.strided_load %arg4[%c0_32, %c0_33, %c4, %c0_34] {strides = array<i32: 1, 1, 3, 1>} : memref<1x1x36x10xf32, #tpu.memory_space<vmem>>, vector<1x1x11x10xf32>
    %34 = vector.shape_cast %33 : vector<1x1x11x10xf32> to vector<1x11x10xf32>
    %35 = vector.shape_cast %34 : vector<1x11x10xf32> to vector<1x110xf32>
    %36 = arith.truncf %35 : vector<1x110xf32> to vector<1x110xbf16>
    %c0_35 = arith.constant 0 : index
    %c4_36 = arith.constant 4 : index
    %c0_37 = arith.constant 0 : index
    %c0_38 = arith.constant 0 : index
    %37 = vector.load %arg2[%c0_35, %c4_36, %c0_37, %c0_38] : memref<1x5x4x1xbf16, #tpu.memory_space<vmem>>, vector<1x1x4x1xbf16>
    %38 = vector.shape_cast %37 : vector<1x1x4x1xbf16> to vector<4x1xbf16>
    %cst_39 = arith.constant dense<0.000000e+00> : vector<4x110xf32>
    %39 = tpu.matmul %38, %36, %cst_39 {dimension_numbers = #tpu.dot_dimension_numbers<[1], [0], [0], [1], [0, 0, 1, 1], [], []>} : vector<4x1xbf16>, vector<1x110xbf16>, vector<4x110xf32> -> vector<4x110xf32>
    %40 = arith.addf %32, %39 : vector<4x110xf32>
    %c0_40 = arith.constant 0 : index
    %c0_41 = arith.constant 0 : index
    %c0_42 = arith.constant 0 : index
    %41 = vector.load %arg3[%c0_40, %c0_41, %c0_42] : memref<1x4x1xf32, #tpu.memory_space<vmem>>, vector<1x4x1xf32>
    %42 = vector.shape_cast %41 : vector<1x4x1xf32> to vector<4x1xf32>
    %43 = vector.broadcast %42 : vector<4x1xf32> to vector<4x110xf32>
    %44 = arith.addf %40, %43 : vector<4x110xf32>
    %45 = arith.index_cast %arg0 : i32 to index
    %46 = memref.load %arg1[%45] : memref<3xi32, #tpu.memory_space<smem>>
    %47 = tpu.iota {dimensions = array<i32: 1>} : vector<1x110xi32>
    %c10_i32 = arith.constant 10 : i32
    %48 = arith.muli %46, %c10_i32 : i32
    %49 = vector.broadcast %48 : i32 to vector<1x110xi32>
    %50 = arith.cmpi slt, %47, %49 : vector<1x110xi32>
    %cst_43 = arith.constant 0.000000e+00 : f32
    %51 = vector.shape_cast %50 : vector<1x110xi1> to vector<1x110xi1>
    %52 = vector.broadcast %51 : vector<1x110xi1> to vector<4x110xi1>
    %53 = vector.broadcast %cst_43 : f32 to vector<4x110xf32>
    %54 = arith.select %52, %44, %53 : vector<4x110xi1>, vector<4x110xf32>
    %55 = vector.shape_cast %54 : vector<4x110xf32> to vector<4x11x10xf32>
    %cst_44 = arith.constant 0.000000e+00 : f32
    %56 = vector.broadcast %cst_44 : f32 to vector<4x2x10xf32>
    %c0_45 = arith.constant 0 : index
    %c0_46 = arith.constant 0 : index
    %c0_47 = arith.constant 0 : index
    %c0_48 = arith.constant 0 : index
    %57 = vector.load %arg5[%c0_45, %c0_46, %c0_47, %c0_48] : memref<1x4x15x10xf32, #tpu.memory_space<vmem>>, vector<1x4x2x10xf32>
    %58 = vector.shape_cast %57 : vector<1x4x2x10xf32> to vector<4x2x10xf32>
    %59 = vector.shape_cast %56 : vector<4x2x10xf32> to vector<1x4x2x10xf32>
    tpu.vector_store %arg5[%c0_45, %c0_46, %c0_47, %c0_48], %59 {strides = array<i32>} : memref<1x4x15x10xf32, #tpu.memory_space<vmem>>, vector<1x4x2x10xf32>,
    %c0_49 = arith.constant 0 : index
    %c0_50 = arith.constant 0 : index
    %c2_51 = arith.constant 2 : index
    %c0_52 = arith.constant 0 : index
    %60 = vector.load %arg5[%c0_49, %c0_50, %c2_51, %c0_52] : memref<1x4x15x10xf32, #tpu.memory_space<vmem>>, vector<1x4x11x10xf32>
    %61 = vector.shape_cast %60 : vector<1x4x11x10xf32> to vector<4x11x10xf32>
    %62 = vector.shape_cast %55 : vector<4x11x10xf32> to vector<1x4x11x10xf32>
    tpu.vector_store %arg5[%c0_49, %c0_50, %c2_51, %c0_52], %62 {strides = array<i32>} : memref<1x4x15x10xf32, #tpu.memory_space<vmem>>, vector<1x4x11x10xf32>,
    %c0_53 = arith.constant 0 : index
    %c0_54 = arith.constant 0 : index
    %c13 = arith.constant 13 : index
    %c0_55 = arith.constant 0 : index
    %63 = vector.load %arg5[%c0_53, %c0_54, %c13, %c0_55] : memref<1x4x15x10xf32, #tpu.memory_space<vmem>>, vector<1x4x2x10xf32>
    %64 = vector.shape_cast %63 : vector<1x4x2x10xf32> to vector<4x2x10xf32>
    %65 = vector.shape_cast %56 : vector<4x2x10xf32> to vector<1x4x2x10xf32>
    tpu.vector_store %arg5[%c0_53, %c0_54, %c13, %c0_55], %65 {strides = array<i32>} : memref<1x4x15x10xf32, #tpu.memory_space<vmem>>, vector<1x4x2x10xf32>,
    return
  }
  func.func @transform_0(%arg0: i32) -> i32 {
    %c0_i32 = arith.constant 0 : i32
    %c0_i32_0 = arith.constant 0 : i32
    return %c0_i32 : i32
  }
  func.func @transform_1(%arg0: i32) -> (i32, i32, i32, i32) {
    %c0_i32 = arith.constant 0 : i32
    %c0_i32_0 = arith.constant 0 : i32
    %c0_i32_1 = arith.constant 0 : i32
    %c0_i32_2 = arith.constant 0 : i32
    return %arg0, %c0_i32, %c0_i32_0, %c0_i32_1 : i32, i32, i32, i32
  }
  func.func @transform_2(%arg0: i32) -> (i32, i32, i32) {
    %c0_i32 = arith.constant 0 : i32
    %c0_i32_0 = arith.constant 0 : i32
    %c0_i32_1 = arith.constant 0 : i32
    return %arg0, %c0_i32, %c0_i32_0 : i32, i32, i32
  }
  func.func @transform_3(%arg0: i32) -> (i32, i32, i32, i32) {
    %c0_i32 = arith.constant 0 : i32
    %c0_i32_0 = arith.constant 0 : i32
    %c0_i32_1 = arith.constant 0 : i32
    %c0_i32_2 = arith.constant 0 : i32
    return %arg0, %c0_i32, %c0_i32_0, %c0_i32_1 : i32, i32, i32, i32
  }
  func.func @transform_4(%arg0: i32) -> (i32, i32, i32, i32) {
    %c0_i32 = arith.constant 0 : i32
    %c0_i32_0 = arith.constant 0 : i32
    %c0_i32_1 = arith.constant 0 : i32
    %c0_i32_2 = arith.constant 0 : i32
    return %arg0, %c0_i32, %c0_i32_0, %c0_i32_1 : i32, i32, i32, i32
  }
}

module attributes {stable_mosaic.version = 11 : i64} {
  func.func @_conv_kernel(%arg0: i32, %arg1: memref<3xi32, #tpu.memory_space<smem>>, %arg2: memref<1x5x8x4xbf16, #tpu.memory_space<vmem>>, %arg3: memref<1x8x1xf32, #tpu.memory_space<vmem>>, %arg4: memref<1x4x15x10xf32, #tpu.memory_space<vmem>>, %arg5: memref<1x8x8x10xf32, #tpu.memory_space<vmem>>) attributes {dimension_semantics = [#tpu.dimension_semantics<parallel>], iteration_bounds = array<i64: 3>, scalar_prefetch = 0 : i64, scratch_operands = 0 : i64, tpu.core_type = #tpu.core_type<tc>, window_params = [{transform_indices = @transform_0, window_bounds = array<i64: 3>}, {transform_indices = @transform_1, window_bounds = array<i64: 1, 5, 8, 4>}, {transform_indices = @transform_2, window_bounds = array<i64: 1, 8, 1>}, {transform_indices = @transform_3, window_bounds = array<i64: 1, 4, 15, 10>}, {transform_indices = @transform_4, window_bounds = array<i64: 1, 8, 8, 10>}]} {
    %cst = arith.constant 0.000000e+00 : f32
    %0 = vector.broadcast %cst : f32 to vector<8x40xf32>
    %c0 = arith.constant 0 : index
    %c0_0 = arith.constant 0 : index
    %c0_1 = arith.constant 0 : index
    %c0_2 = arith.constant 0 : index
    %1 = tpu.strided_load %arg4[%c0, %c0_0, %c0_1, %c0_2] {strides = array<i32: 1, 1, 3, 1>} : memref<1x4x15x10xf32, #tpu.memory_space<vmem>>, vector<1x4x4x10xf32>
    %2 = vector.shape_cast %1 : vector<1x4x4x10xf32> to vector<4x4x10xf32>
    %cst_3 = arith.constant 2.000000e-01 : f32
    %3 = vector.broadcast %cst_3 : f32 to vector<4x4x10xf32>
    %4 = arith.mulf %3, %2 : vector<4x4x10xf32>
    %5 = arith.maximumf %2, %4 : vector<4x4x10xf32>
    %6 = vector.shape_cast %5 : vector<4x4x10xf32> to vector<4x40xf32>
    %7 = arith.truncf %6 : vector<4x40xf32> to vector<4x40xbf16>
    %c0_4 = arith.constant 0 : index
    %c0_5 = arith.constant 0 : index
    %c0_6 = arith.constant 0 : index
    %c0_7 = arith.constant 0 : index
    %8 = vector.load %arg2[%c0_4, %c0_5, %c0_6, %c0_7] : memref<1x5x8x4xbf16, #tpu.memory_space<vmem>>, vector<1x1x8x4xbf16>
    %9 = vector.shape_cast %8 : vector<1x1x8x4xbf16> to vector<8x4xbf16>
    %cst_8 = arith.constant dense<0.000000e+00> : vector<8x40xf32>
    %10 = tpu.matmul %9, %7, %cst_8 {dimension_numbers = #tpu.dot_dimension_numbers<[1], [0], [0], [1], [0, 0, 1, 1], [], []>} : vector<8x4xbf16>, vector<4x40xbf16>, vector<8x40xf32> -> vector<8x40xf32>
    %11 = arith.addf %0, %10 : vector<8x40xf32>
    %c0_9 = arith.constant 0 : index
    %c0_10 = arith.constant 0 : index
    %c1 = arith.constant 1 : index
    %c0_11 = arith.constant 0 : index
    %12 = tpu.strided_load %arg4[%c0_9, %c0_10, %c1, %c0_11] {strides = array<i32: 1, 1, 3, 1>} : memref<1x4x15x10xf32, #tpu.memory_space<vmem>>, vector<1x4x4x10xf32>
    %13 = vector.shape_cast %12 : vector<1x4x4x10xf32> to vector<4x4x10xf32>
    %cst_12 = arith.constant 2.000000e-01 : f32
    %14 = vector.broadcast %cst_12 : f32 to vector<4x4x10xf32>
    %15 = arith.mulf %14, %13 : vector<4x4x10xf32>
    %16 = arith.maximumf %13, %15 : vector<4x4x10xf32>
    %17 = vector.shape_cast %16 : vector<4x4x10xf32> to vector<4x40xf32>
    %18 = arith.truncf %17 : vector<4x40xf32> to vector<4x40xbf16>
    %c0_13 = arith.constant 0 : index
    %c1_14 = arith.constant 1 : index
    %c0_15 = arith.constant 0 : index
    %c0_16 = arith.constant 0 : index
    %19 = vector.load %arg2[%c0_13, %c1_14, %c0_15, %c0_16] : memref<1x5x8x4xbf16, #tpu.memory_space<vmem>>, vector<1x1x8x4xbf16>
    %20 = vector.shape_cast %19 : vector<1x1x8x4xbf16> to vector<8x4xbf16>
    %cst_17 = arith.constant dense<0.000000e+00> : vector<8x40xf32>
    %21 = tpu.matmul %20, %18, %cst_17 {dimension_numbers = #tpu.dot_dimension_numbers<[1], [0], [0], [1], [0, 0, 1, 1], [], []>} : vector<8x4xbf16>, vector<4x40xbf16>, vector<8x40xf32> -> vector<8x40xf32>
    %22 = arith.addf %11, %21 : vector<8x40xf32>
    %c0_18 = arith.constant 0 : index
    %c0_19 = arith.constant 0 : index
    %c2 = arith.constant 2 : index
    %c0_20 = arith.constant 0 : index
    %23 = tpu.strided_load %arg4[%c0_18, %c0_19, %c2, %c0_20] {strides = array<i32: 1, 1, 3, 1>} : memref<1x4x15x10xf32, #tpu.memory_space<vmem>>, vector<1x4x4x10xf32>
    %24 = vector.shape_cast %23 : vector<1x4x4x10xf32> to vector<4x4x10xf32>
    %cst_21 = arith.constant 2.000000e-01 : f32
    %25 = vector.broadcast %cst_21 : f32 to vector<4x4x10xf32>
    %26 = arith.mulf %25, %24 : vector<4x4x10xf32>
    %27 = arith.maximumf %24, %26 : vector<4x4x10xf32>
    %28 = vector.shape_cast %27 : vector<4x4x10xf32> to vector<4x40xf32>
    %29 = arith.truncf %28 : vector<4x40xf32> to vector<4x40xbf16>
    %c0_22 = arith.constant 0 : index
    %c2_23 = arith.constant 2 : index
    %c0_24 = arith.constant 0 : index
    %c0_25 = arith.constant 0 : index
    %30 = vector.load %arg2[%c0_22, %c2_23, %c0_24, %c0_25] : memref<1x5x8x4xbf16, #tpu.memory_space<vmem>>, vector<1x1x8x4xbf16>
    %31 = vector.shape_cast %30 : vector<1x1x8x4xbf16> to vector<8x4xbf16>
    %cst_26 = arith.constant dense<0.000000e+00> : vector<8x40xf32>
    %32 = tpu.matmul %31, %29, %cst_26 {dimension_numbers = #tpu.dot_dimension_numbers<[1], [0], [0], [1], [0, 0, 1, 1], [], []>} : vector<8x4xbf16>, vector<4x40xbf16>, vector<8x40xf32> -> vector<8x40xf32>
    %33 = arith.addf %22, %32 : vector<8x40xf32>
    %c0_27 = arith.constant 0 : index
    %c0_28 = arith.constant 0 : index
    %c3 = arith.constant 3 : index
    %c0_29 = arith.constant 0 : index
    %34 = tpu.strided_load %arg4[%c0_27, %c0_28, %c3, %c0_29] {strides = array<i32: 1, 1, 3, 1>} : memref<1x4x15x10xf32, #tpu.memory_space<vmem>>, vector<1x4x4x10xf32>
    %35 = vector.shape_cast %34 : vector<1x4x4x10xf32> to vector<4x4x10xf32>
    %cst_30 = arith.constant 2.000000e-01 : f32
    %36 = vector.broadcast %cst_30 : f32 to vector<4x4x10xf32>
    %37 = arith.mulf %36, %35 : vector<4x4x10xf32>
    %38 = arith.maximumf %35, %37 : vector<4x4x10xf32>
    %39 = vector.shape_cast %38 : vector<4x4x10xf32> to vector<4x40xf32>
    %40 = arith.truncf %39 : vector<4x40xf32> to vector<4x40xbf16>
    %c0_31 = arith.constant 0 : index
    %c3_32 = arith.constant 3 : index
    %c0_33 = arith.constant 0 : index
    %c0_34 = arith.constant 0 : index
    %41 = vector.load %arg2[%c0_31, %c3_32, %c0_33, %c0_34] : memref<1x5x8x4xbf16, #tpu.memory_space<vmem>>, vector<1x1x8x4xbf16>
    %42 = vector.shape_cast %41 : vector<1x1x8x4xbf16> to vector<8x4xbf16>
    %cst_35 = arith.constant dense<0.000000e+00> : vector<8x40xf32>
    %43 = tpu.matmul %42, %40, %cst_35 {dimension_numbers = #tpu.dot_dimension_numbers<[1], [0], [0], [1], [0, 0, 1, 1], [], []>} : vector<8x4xbf16>, vector<4x40xbf16>, vector<8x40xf32> -> vector<8x40xf32>
    %44 = arith.addf %33, %43 : vector<8x40xf32>
    %c0_36 = arith.constant 0 : index
    %c0_37 = arith.constant 0 : index
    %c4 = arith.constant 4 : index
    %c0_38 = arith.constant 0 : index
    %45 = tpu.strided_load %arg4[%c0_36, %c0_37, %c4, %c0_38] {strides = array<i32: 1, 1, 3, 1>} : memref<1x4x15x10xf32, #tpu.memory_space<vmem>>, vector<1x4x4x10xf32>
    %46 = vector.shape_cast %45 : vector<1x4x4x10xf32> to vector<4x4x10xf32>
    %cst_39 = arith.constant 2.000000e-01 : f32
    %47 = vector.broadcast %cst_39 : f32 to vector<4x4x10xf32>
    %48 = arith.mulf %47, %46 : vector<4x4x10xf32>
    %49 = arith.maximumf %46, %48 : vector<4x4x10xf32>
    %50 = vector.shape_cast %49 : vector<4x4x10xf32> to vector<4x40xf32>
    %51 = arith.truncf %50 : vector<4x40xf32> to vector<4x40xbf16>
    %c0_40 = arith.constant 0 : index
    %c4_41 = arith.constant 4 : index
    %c0_42 = arith.constant 0 : index
    %c0_43 = arith.constant 0 : index
    %52 = vector.load %arg2[%c0_40, %c4_41, %c0_42, %c0_43] : memref<1x5x8x4xbf16, #tpu.memory_space<vmem>>, vector<1x1x8x4xbf16>
    %53 = vector.shape_cast %52 : vector<1x1x8x4xbf16> to vector<8x4xbf16>
    %cst_44 = arith.constant dense<0.000000e+00> : vector<8x40xf32>
    %54 = tpu.matmul %53, %51, %cst_44 {dimension_numbers = #tpu.dot_dimension_numbers<[1], [0], [0], [1], [0, 0, 1, 1], [], []>} : vector<8x4xbf16>, vector<4x40xbf16>, vector<8x40xf32> -> vector<8x40xf32>
    %55 = arith.addf %44, %54 : vector<8x40xf32>
    %c0_45 = arith.constant 0 : index
    %c0_46 = arith.constant 0 : index
    %c0_47 = arith.constant 0 : index
    %56 = vector.load %arg3[%c0_45, %c0_46, %c0_47] : memref<1x8x1xf32, #tpu.memory_space<vmem>>, vector<1x8x1xf32>
    %57 = vector.shape_cast %56 : vector<1x8x1xf32> to vector<8x1xf32>
    %58 = vector.broadcast %57 : vector<8x1xf32> to vector<8x40xf32>
    %59 = arith.addf %55, %58 : vector<8x40xf32>
    %60 = arith.index_cast %arg0 : i32 to index
    %61 = memref.load %arg1[%60] : memref<3xi32, #tpu.memory_space<smem>>
    %62 = tpu.iota {dimensions = array<i32: 1>} : vector<1x40xi32>
    %c10_i32 = arith.constant 10 : i32
    %63 = arith.muli %61, %c10_i32 : i32
    %64 = vector.broadcast %63 : i32 to vector<1x40xi32>
    %65 = arith.cmpi slt, %62, %64 : vector<1x40xi32>
    %cst_48 = arith.constant 0.000000e+00 : f32
    %66 = vector.shape_cast %65 : vector<1x40xi1> to vector<1x40xi1>
    %67 = vector.broadcast %66 : vector<1x40xi1> to vector<8x40xi1>
    %68 = vector.broadcast %cst_48 : f32 to vector<8x40xf32>
    %69 = arith.select %67, %59, %68 : vector<8x40xi1>, vector<8x40xf32>
    %70 = vector.shape_cast %69 : vector<8x40xf32> to vector<8x4x10xf32>
    %cst_49 = arith.constant 0.000000e+00 : f32
    %71 = vector.broadcast %cst_49 : f32 to vector<8x2x10xf32>
    %c0_50 = arith.constant 0 : index
    %c0_51 = arith.constant 0 : index
    %c0_52 = arith.constant 0 : index
    %c0_53 = arith.constant 0 : index
    %72 = vector.load %arg5[%c0_50, %c0_51, %c0_52, %c0_53] : memref<1x8x8x10xf32, #tpu.memory_space<vmem>>, vector<1x8x2x10xf32>
    %73 = vector.shape_cast %72 : vector<1x8x2x10xf32> to vector<8x2x10xf32>
    %74 = vector.shape_cast %71 : vector<8x2x10xf32> to vector<1x8x2x10xf32>
    tpu.vector_store %arg5[%c0_50, %c0_51, %c0_52, %c0_53], %74 {strides = array<i32>} : memref<1x8x8x10xf32, #tpu.memory_space<vmem>>, vector<1x8x2x10xf32>,
    %c0_54 = arith.constant 0 : index
    %c0_55 = arith.constant 0 : index
    %c2_56 = arith.constant 2 : index
    %c0_57 = arith.constant 0 : index
    %75 = vector.load %arg5[%c0_54, %c0_55, %c2_56, %c0_57] : memref<1x8x8x10xf32, #tpu.memory_space<vmem>>, vector<1x8x4x10xf32>
    %76 = vector.shape_cast %75 : vector<1x8x4x10xf32> to vector<8x4x10xf32>
    %77 = vector.shape_cast %70 : vector<8x4x10xf32> to vector<1x8x4x10xf32>
    tpu.vector_store %arg5[%c0_54, %c0_55, %c2_56, %c0_57], %77 {strides = array<i32>} : memref<1x8x8x10xf32, #tpu.memory_space<vmem>>, vector<1x8x4x10xf32>,
    %c0_58 = arith.constant 0 : index
    %c0_59 = arith.constant 0 : index
    %c6 = arith.constant 6 : index
    %c0_60 = arith.constant 0 : index
    %78 = vector.load %arg5[%c0_58, %c0_59, %c6, %c0_60] : memref<1x8x8x10xf32, #tpu.memory_space<vmem>>, vector<1x8x2x10xf32>
    %79 = vector.shape_cast %78 : vector<1x8x2x10xf32> to vector<8x2x10xf32>
    %80 = vector.shape_cast %71 : vector<8x2x10xf32> to vector<1x8x2x10xf32>
    tpu.vector_store %arg5[%c0_58, %c0_59, %c6, %c0_60], %80 {strides = array<i32>} : memref<1x8x8x10xf32, #tpu.memory_space<vmem>>, vector<1x8x2x10xf32>,
    return
  }
  func.func @transform_0(%arg0: i32) -> i32 {
    %c0_i32 = arith.constant 0 : i32
    %c0_i32_0 = arith.constant 0 : i32
    return %c0_i32 : i32
  }
  func.func @transform_1(%arg0: i32) -> (i32, i32, i32, i32) {
    %c0_i32 = arith.constant 0 : i32
    %c0_i32_0 = arith.constant 0 : i32
    %c0_i32_1 = arith.constant 0 : i32
    %c0_i32_2 = arith.constant 0 : i32
    return %arg0, %c0_i32, %c0_i32_0, %c0_i32_1 : i32, i32, i32, i32
  }
  func.func @transform_2(%arg0: i32) -> (i32, i32, i32) {
    %c0_i32 = arith.constant 0 : i32
    %c0_i32_0 = arith.constant 0 : i32
    %c0_i32_1 = arith.constant 0 : i32
    return %arg0, %c0_i32, %c0_i32_0 : i32, i32, i32
  }
  func.func @transform_3(%arg0: i32) -> (i32, i32, i32, i32) {
    %c0_i32 = arith.constant 0 : i32
    %c0_i32_0 = arith.constant 0 : i32
    %c0_i32_1 = arith.constant 0 : i32
    %c0_i32_2 = arith.constant 0 : i32
    return %arg0, %c0_i32, %c0_i32_0, %c0_i32_1 : i32, i32, i32, i32
  }
  func.func @transform_4(%arg0: i32) -> (i32, i32, i32, i32) {
    %c0_i32 = arith.constant 0 : i32
    %c0_i32_0 = arith.constant 0 : i32
    %c0_i32_1 = arith.constant 0 : i32
    %c0_i32_2 = arith.constant 0 : i32
    return %arg0, %c0_i32, %c0_i32_0, %c0_i32_1 : i32, i32, i32, i32
  }
}

module attributes {stable_mosaic.version = 11 : i64} {
  func.func @_conv_kernel(%arg0: i32, %arg1: memref<3xi32, #tpu.memory_space<smem>>, %arg2: memref<1x5x16x8xbf16, #tpu.memory_space<vmem>>, %arg3: memref<1x16x1xf32, #tpu.memory_space<vmem>>, %arg4: memref<1x8x8x10xf32, #tpu.memory_space<vmem>>, %arg5: memref<1x16x2x10xf32, #tpu.memory_space<vmem>>) attributes {dimension_semantics = [#tpu.dimension_semantics<parallel>], iteration_bounds = array<i64: 3>, scalar_prefetch = 0 : i64, scratch_operands = 0 : i64, tpu.core_type = #tpu.core_type<tc>, window_params = [{transform_indices = @transform_0, window_bounds = array<i64: 3>}, {transform_indices = @transform_1, window_bounds = array<i64: 1, 5, 16, 8>}, {transform_indices = @transform_2, window_bounds = array<i64: 1, 16, 1>}, {transform_indices = @transform_3, window_bounds = array<i64: 1, 8, 8, 10>}, {transform_indices = @transform_4, window_bounds = array<i64: 1, 16, 2, 10>}]} {
    %cst = arith.constant 0.000000e+00 : f32
    %0 = vector.broadcast %cst : f32 to vector<16x20xf32>
    %c0 = arith.constant 0 : index
    %c0_0 = arith.constant 0 : index
    %c0_1 = arith.constant 0 : index
    %c0_2 = arith.constant 0 : index
    %1 = tpu.strided_load %arg4[%c0, %c0_0, %c0_1, %c0_2] {strides = array<i32: 1, 1, 3, 1>} : memref<1x8x8x10xf32, #tpu.memory_space<vmem>>, vector<1x8x2x10xf32>
    %2 = vector.shape_cast %1 : vector<1x8x2x10xf32> to vector<8x2x10xf32>
    %cst_3 = arith.constant 2.000000e-01 : f32
    %3 = vector.broadcast %cst_3 : f32 to vector<8x2x10xf32>
    %4 = arith.mulf %3, %2 : vector<8x2x10xf32>
    %5 = arith.maximumf %2, %4 : vector<8x2x10xf32>
    %6 = vector.shape_cast %5 : vector<8x2x10xf32> to vector<8x20xf32>
    %7 = arith.truncf %6 : vector<8x20xf32> to vector<8x20xbf16>
    %c0_4 = arith.constant 0 : index
    %c0_5 = arith.constant 0 : index
    %c0_6 = arith.constant 0 : index
    %c0_7 = arith.constant 0 : index
    %8 = vector.load %arg2[%c0_4, %c0_5, %c0_6, %c0_7] : memref<1x5x16x8xbf16, #tpu.memory_space<vmem>>, vector<1x1x16x8xbf16>
    %9 = vector.shape_cast %8 : vector<1x1x16x8xbf16> to vector<16x8xbf16>
    %cst_8 = arith.constant dense<0.000000e+00> : vector<16x20xf32>
    %10 = tpu.matmul %9, %7, %cst_8 {dimension_numbers = #tpu.dot_dimension_numbers<[1], [0], [0], [1], [0, 0, 1, 1], [], []>} : vector<16x8xbf16>, vector<8x20xbf16>, vector<16x20xf32> -> vector<16x20xf32>
    %11 = arith.addf %0, %10 : vector<16x20xf32>
    %c0_9 = arith.constant 0 : index
    %c0_10 = arith.constant 0 : index
    %c1 = arith.constant 1 : index
    %c0_11 = arith.constant 0 : index
    %12 = tpu.strided_load %arg4[%c0_9, %c0_10, %c1, %c0_11] {strides = array<i32: 1, 1, 3, 1>} : memref<1x8x8x10xf32, #tpu.memory_space<vmem>>, vector<1x8x2x10xf32>
    %13 = vector.shape_cast %12 : vector<1x8x2x10xf32> to vector<8x2x10xf32>
    %cst_12 = arith.constant 2.000000e-01 : f32
    %14 = vector.broadcast %cst_12 : f32 to vector<8x2x10xf32>
    %15 = arith.mulf %14, %13 : vector<8x2x10xf32>
    %16 = arith.maximumf %13, %15 : vector<8x2x10xf32>
    %17 = vector.shape_cast %16 : vector<8x2x10xf32> to vector<8x20xf32>
    %18 = arith.truncf %17 : vector<8x20xf32> to vector<8x20xbf16>
    %c0_13 = arith.constant 0 : index
    %c1_14 = arith.constant 1 : index
    %c0_15 = arith.constant 0 : index
    %c0_16 = arith.constant 0 : index
    %19 = vector.load %arg2[%c0_13, %c1_14, %c0_15, %c0_16] : memref<1x5x16x8xbf16, #tpu.memory_space<vmem>>, vector<1x1x16x8xbf16>
    %20 = vector.shape_cast %19 : vector<1x1x16x8xbf16> to vector<16x8xbf16>
    %cst_17 = arith.constant dense<0.000000e+00> : vector<16x20xf32>
    %21 = tpu.matmul %20, %18, %cst_17 {dimension_numbers = #tpu.dot_dimension_numbers<[1], [0], [0], [1], [0, 0, 1, 1], [], []>} : vector<16x8xbf16>, vector<8x20xbf16>, vector<16x20xf32> -> vector<16x20xf32>
    %22 = arith.addf %11, %21 : vector<16x20xf32>
    %c0_18 = arith.constant 0 : index
    %c0_19 = arith.constant 0 : index
    %c2 = arith.constant 2 : index
    %c0_20 = arith.constant 0 : index
    %23 = tpu.strided_load %arg4[%c0_18, %c0_19, %c2, %c0_20] {strides = array<i32: 1, 1, 3, 1>} : memref<1x8x8x10xf32, #tpu.memory_space<vmem>>, vector<1x8x2x10xf32>
    %24 = vector.shape_cast %23 : vector<1x8x2x10xf32> to vector<8x2x10xf32>
    %cst_21 = arith.constant 2.000000e-01 : f32
    %25 = vector.broadcast %cst_21 : f32 to vector<8x2x10xf32>
    %26 = arith.mulf %25, %24 : vector<8x2x10xf32>
    %27 = arith.maximumf %24, %26 : vector<8x2x10xf32>
    %28 = vector.shape_cast %27 : vector<8x2x10xf32> to vector<8x20xf32>
    %29 = arith.truncf %28 : vector<8x20xf32> to vector<8x20xbf16>
    %c0_22 = arith.constant 0 : index
    %c2_23 = arith.constant 2 : index
    %c0_24 = arith.constant 0 : index
    %c0_25 = arith.constant 0 : index
    %30 = vector.load %arg2[%c0_22, %c2_23, %c0_24, %c0_25] : memref<1x5x16x8xbf16, #tpu.memory_space<vmem>>, vector<1x1x16x8xbf16>
    %31 = vector.shape_cast %30 : vector<1x1x16x8xbf16> to vector<16x8xbf16>
    %cst_26 = arith.constant dense<0.000000e+00> : vector<16x20xf32>
    %32 = tpu.matmul %31, %29, %cst_26 {dimension_numbers = #tpu.dot_dimension_numbers<[1], [0], [0], [1], [0, 0, 1, 1], [], []>} : vector<16x8xbf16>, vector<8x20xbf16>, vector<16x20xf32> -> vector<16x20xf32>
    %33 = arith.addf %22, %32 : vector<16x20xf32>
    %c0_27 = arith.constant 0 : index
    %c0_28 = arith.constant 0 : index
    %c3 = arith.constant 3 : index
    %c0_29 = arith.constant 0 : index
    %34 = tpu.strided_load %arg4[%c0_27, %c0_28, %c3, %c0_29] {strides = array<i32: 1, 1, 3, 1>} : memref<1x8x8x10xf32, #tpu.memory_space<vmem>>, vector<1x8x2x10xf32>
    %35 = vector.shape_cast %34 : vector<1x8x2x10xf32> to vector<8x2x10xf32>
    %cst_30 = arith.constant 2.000000e-01 : f32
    %36 = vector.broadcast %cst_30 : f32 to vector<8x2x10xf32>
    %37 = arith.mulf %36, %35 : vector<8x2x10xf32>
    %38 = arith.maximumf %35, %37 : vector<8x2x10xf32>
    %39 = vector.shape_cast %38 : vector<8x2x10xf32> to vector<8x20xf32>
    %40 = arith.truncf %39 : vector<8x20xf32> to vector<8x20xbf16>
    %c0_31 = arith.constant 0 : index
    %c3_32 = arith.constant 3 : index
    %c0_33 = arith.constant 0 : index
    %c0_34 = arith.constant 0 : index
    %41 = vector.load %arg2[%c0_31, %c3_32, %c0_33, %c0_34] : memref<1x5x16x8xbf16, #tpu.memory_space<vmem>>, vector<1x1x16x8xbf16>
    %42 = vector.shape_cast %41 : vector<1x1x16x8xbf16> to vector<16x8xbf16>
    %cst_35 = arith.constant dense<0.000000e+00> : vector<16x20xf32>
    %43 = tpu.matmul %42, %40, %cst_35 {dimension_numbers = #tpu.dot_dimension_numbers<[1], [0], [0], [1], [0, 0, 1, 1], [], []>} : vector<16x8xbf16>, vector<8x20xbf16>, vector<16x20xf32> -> vector<16x20xf32>
    %44 = arith.addf %33, %43 : vector<16x20xf32>
    %c0_36 = arith.constant 0 : index
    %c0_37 = arith.constant 0 : index
    %c4 = arith.constant 4 : index
    %c0_38 = arith.constant 0 : index
    %45 = tpu.strided_load %arg4[%c0_36, %c0_37, %c4, %c0_38] {strides = array<i32: 1, 1, 3, 1>} : memref<1x8x8x10xf32, #tpu.memory_space<vmem>>, vector<1x8x2x10xf32>
    %46 = vector.shape_cast %45 : vector<1x8x2x10xf32> to vector<8x2x10xf32>
    %cst_39 = arith.constant 2.000000e-01 : f32
    %47 = vector.broadcast %cst_39 : f32 to vector<8x2x10xf32>
    %48 = arith.mulf %47, %46 : vector<8x2x10xf32>
    %49 = arith.maximumf %46, %48 : vector<8x2x10xf32>
    %50 = vector.shape_cast %49 : vector<8x2x10xf32> to vector<8x20xf32>
    %51 = arith.truncf %50 : vector<8x20xf32> to vector<8x20xbf16>
    %c0_40 = arith.constant 0 : index
    %c4_41 = arith.constant 4 : index
    %c0_42 = arith.constant 0 : index
    %c0_43 = arith.constant 0 : index
    %52 = vector.load %arg2[%c0_40, %c4_41, %c0_42, %c0_43] : memref<1x5x16x8xbf16, #tpu.memory_space<vmem>>, vector<1x1x16x8xbf16>
    %53 = vector.shape_cast %52 : vector<1x1x16x8xbf16> to vector<16x8xbf16>
    %cst_44 = arith.constant dense<0.000000e+00> : vector<16x20xf32>
    %54 = tpu.matmul %53, %51, %cst_44 {dimension_numbers = #tpu.dot_dimension_numbers<[1], [0], [0], [1], [0, 0, 1, 1], [], []>} : vector<16x8xbf16>, vector<8x20xbf16>, vector<16x20xf32> -> vector<16x20xf32>
    %55 = arith.addf %44, %54 : vector<16x20xf32>
    %c0_45 = arith.constant 0 : index
    %c0_46 = arith.constant 0 : index
    %c0_47 = arith.constant 0 : index
    %56 = vector.load %arg3[%c0_45, %c0_46, %c0_47] : memref<1x16x1xf32, #tpu.memory_space<vmem>>, vector<1x16x1xf32>
    %57 = vector.shape_cast %56 : vector<1x16x1xf32> to vector<16x1xf32>
    %58 = vector.broadcast %57 : vector<16x1xf32> to vector<16x20xf32>
    %59 = arith.addf %55, %58 : vector<16x20xf32>
    %60 = arith.index_cast %arg0 : i32 to index
    %61 = memref.load %arg1[%60] : memref<3xi32, #tpu.memory_space<smem>>
    %62 = tpu.iota {dimensions = array<i32: 1>} : vector<1x20xi32>
    %c10_i32 = arith.constant 10 : i32
    %63 = arith.muli %61, %c10_i32 : i32
    %64 = vector.broadcast %63 : i32 to vector<1x20xi32>
    %65 = arith.cmpi slt, %62, %64 : vector<1x20xi32>
    %cst_48 = arith.constant 0.000000e+00 : f32
    %66 = vector.shape_cast %65 : vector<1x20xi1> to vector<1x20xi1>
    %67 = vector.broadcast %66 : vector<1x20xi1> to vector<16x20xi1>
    %68 = vector.broadcast %cst_48 : f32 to vector<16x20xf32>
    %69 = arith.select %67, %59, %68 : vector<16x20xi1>, vector<16x20xf32>
    %70 = vector.shape_cast %69 : vector<16x20xf32> to vector<16x2x10xf32>
    %c0_49 = arith.constant 0 : index
    %c0_50 = arith.constant 0 : index
    %c0_51 = arith.constant 0 : index
    %c0_52 = arith.constant 0 : index
    %71 = vector.load %arg5[%c0_49, %c0_50, %c0_51, %c0_52] : memref<1x16x2x10xf32, #tpu.memory_space<vmem>>, vector<1x16x2x10xf32>
    %72 = vector.shape_cast %71 : vector<1x16x2x10xf32> to vector<16x2x10xf32>
    %73 = vector.shape_cast %70 : vector<16x2x10xf32> to vector<1x16x2x10xf32>
    tpu.vector_store %arg5[%c0_49, %c0_50, %c0_51, %c0_52], %73 {strides = array<i32>} : memref<1x16x2x10xf32, #tpu.memory_space<vmem>>, vector<1x16x2x10xf32>,
    return
  }
  func.func @transform_0(%arg0: i32) -> i32 {
    %c0_i32 = arith.constant 0 : i32
    %c0_i32_0 = arith.constant 0 : i32
    return %c0_i32 : i32
  }
  func.func @transform_1(%arg0: i32) -> (i32, i32, i32, i32) {
    %c0_i32 = arith.constant 0 : i32
    %c0_i32_0 = arith.constant 0 : i32
    %c0_i32_1 = arith.constant 0 : i32
    %c0_i32_2 = arith.constant 0 : i32
    return %arg0, %c0_i32, %c0_i32_0, %c0_i32_1 : i32, i32, i32, i32
  }
  func.func @transform_2(%arg0: i32) -> (i32, i32, i32) {
    %c0_i32 = arith.constant 0 : i32
    %c0_i32_0 = arith.constant 0 : i32
    %c0_i32_1 = arith.constant 0 : i32
    return %arg0, %c0_i32, %c0_i32_0 : i32, i32, i32
  }
  func.func @transform_3(%arg0: i32) -> (i32, i32, i32, i32) {
    %c0_i32 = arith.constant 0 : i32
    %c0_i32_0 = arith.constant 0 : i32
    %c0_i32_1 = arith.constant 0 : i32
    %c0_i32_2 = arith.constant 0 : i32
    return %arg0, %c0_i32, %c0_i32_0, %c0_i32_1 : i32, i32, i32, i32
  }
  func.func @transform_4(%arg0: i32) -> (i32, i32, i32, i32) {
    %c0_i32 = arith.constant 0 : i32
    %c0_i32_0 = arith.constant 0 : i32
    %c0_i32_1 = arith.constant 0 : i32
    %c0_i32_2 = arith.constant 0 : i32
    return %arg0, %c0_i32, %c0_i32_0, %c0_i32_1 : i32, i32, i32, i32
  }
}

module attributes {stable_mosaic.version = 11 : i64} {
  func.func @_conv_kernel(%arg0: i32, %arg1: memref<3xi32, #tpu.memory_space<smem>>, %arg2: memref<1x1x1x16xbf16, #tpu.memory_space<vmem>>, %arg3: memref<1x1x1xf32, #tpu.memory_space<vmem>>, %arg4: memref<1x16x2x10xf32, #tpu.memory_space<vmem>>, %arg5: memref<1x1x2x10xf32, #tpu.memory_space<vmem>>) attributes {dimension_semantics = [#tpu.dimension_semantics<parallel>], iteration_bounds = array<i64: 3>, scalar_prefetch = 0 : i64, scratch_operands = 0 : i64, tpu.core_type = #tpu.core_type<tc>, window_params = [{transform_indices = @transform_0, window_bounds = array<i64: 3>}, {transform_indices = @transform_1, window_bounds = array<i64: 1, 1, 1, 16>}, {transform_indices = @transform_2, window_bounds = array<i64: 1, 1, 1>}, {transform_indices = @transform_3, window_bounds = array<i64: 1, 16, 2, 10>}, {transform_indices = @transform_4, window_bounds = array<i64: 1, 1, 2, 10>}]} {
    %cst = arith.constant 0.000000e+00 : f32
    %0 = vector.broadcast %cst : f32 to vector<1x20xf32>
    %c0 = arith.constant 0 : index
    %c0_0 = arith.constant 0 : index
    %c0_1 = arith.constant 0 : index
    %c0_2 = arith.constant 0 : index
    %1 = vector.load %arg4[%c0, %c0_0, %c0_1, %c0_2] : memref<1x16x2x10xf32, #tpu.memory_space<vmem>>, vector<1x16x2x10xf32>
    %2 = vector.shape_cast %1 : vector<1x16x2x10xf32> to vector<16x2x10xf32>
    %cst_3 = arith.constant 2.000000e-01 : f32
    %3 = vector.broadcast %cst_3 : f32 to vector<16x2x10xf32>
    %4 = arith.mulf %3, %2 : vector<16x2x10xf32>
    %5 = arith.maximumf %2, %4 : vector<16x2x10xf32>
    %6 = vector.shape_cast %5 : vector<16x2x10xf32> to vector<16x20xf32>
    %7 = arith.truncf %6 : vector<16x20xf32> to vector<16x20xbf16>
    %c0_4 = arith.constant 0 : index
    %c0_5 = arith.constant 0 : index
    %c0_6 = arith.constant 0 : index
    %c0_7 = arith.constant 0 : index
    %8 = vector.load %arg2[%c0_4, %c0_5, %c0_6, %c0_7] : memref<1x1x1x16xbf16, #tpu.memory_space<vmem>>, vector<1x1x1x16xbf16>
    %9 = vector.shape_cast %8 : vector<1x1x1x16xbf16> to vector<1x16xbf16>
    %cst_8 = arith.constant dense<0.000000e+00> : vector<1x20xf32>
    %10 = tpu.matmul %9, %7, %cst_8 {dimension_numbers = #tpu.dot_dimension_numbers<[1], [0], [0], [1], [0, 0, 1, 1], [], []>} : vector<1x16xbf16>, vector<16x20xbf16>, vector<1x20xf32> -> vector<1x20xf32>
    %11 = arith.addf %0, %10 : vector<1x20xf32>
    %c0_9 = arith.constant 0 : index
    %c0_10 = arith.constant 0 : index
    %c0_11 = arith.constant 0 : index
    %12 = vector.load %arg3[%c0_9, %c0_10, %c0_11] : memref<1x1x1xf32, #tpu.memory_space<vmem>>, vector<1x1x1xf32>
    %13 = vector.shape_cast %12 : vector<1x1x1xf32> to vector<1x1xf32>
    %14 = vector.broadcast %13 : vector<1x1xf32> to vector<1x20xf32>
    %15 = arith.addf %11, %14 : vector<1x20xf32>
    %16 = arith.index_cast %arg0 : i32 to index
    %17 = memref.load %arg1[%16] : memref<3xi32, #tpu.memory_space<smem>>
    %18 = tpu.iota {dimensions = array<i32: 1>} : vector<1x20xi32>
    %c10_i32 = arith.constant 10 : i32
    %19 = arith.muli %17, %c10_i32 : i32
    %20 = vector.broadcast %19 : i32 to vector<1x20xi32>
    %21 = arith.cmpi slt, %18, %20 : vector<1x20xi32>
    %cst_12 = arith.constant 0.000000e+00 : f32
    %22 = vector.broadcast %cst_12 : f32 to vector<1x20xf32>
    %23 = arith.select %21, %15, %22 : vector<1x20xi1>, vector<1x20xf32>
    %24 = vector.shape_cast %23 : vector<1x20xf32> to vector<1x2x10xf32>
    %c0_13 = arith.constant 0 : index
    %c0_14 = arith.constant 0 : index
    %c0_15 = arith.constant 0 : index
    %c0_16 = arith.constant 0 : index
    %25 = vector.load %arg5[%c0_13, %c0_14, %c0_15, %c0_16] : memref<1x1x2x10xf32, #tpu.memory_space<vmem>>, vector<1x1x2x10xf32>
    %26 = vector.shape_cast %25 : vector<1x1x2x10xf32> to vector<1x2x10xf32>
    %27 = vector.shape_cast %24 : vector<1x2x10xf32> to vector<1x1x2x10xf32>
    tpu.vector_store %arg5[%c0_13, %c0_14, %c0_15, %c0_16], %27 {strides = array<i32>} : memref<1x1x2x10xf32, #tpu.memory_space<vmem>>, vector<1x1x2x10xf32>,
    return
  }
  func.func @transform_0(%arg0: i32) -> i32 {
    %c0_i32 = arith.constant 0 : i32
    %c0_i32_0 = arith.constant 0 : i32
    return %c0_i32 : i32
  }
  func.func @transform_1(%arg0: i32) -> (i32, i32, i32, i32) {
    %c0_i32 = arith.constant 0 : i32
    %c0_i32_0 = arith.constant 0 : i32
    %c0_i32_1 = arith.constant 0 : i32
    %c0_i32_2 = arith.constant 0 : i32
    return %arg0, %c0_i32, %c0_i32_0, %c0_i32_1 : i32, i32, i32, i32
  }
  func.func @transform_2(%arg0: i32) -> (i32, i32, i32) {
    %c0_i32 = arith.constant 0 : i32
    %c0_i32_0 = arith.constant 0 : i32
    %c0_i32_1 = arith.constant 0 : i32
    return %arg0, %c0_i32, %c0_i32_0 : i32, i32, i32
  }
  func.func @transform_3(%arg0: i32) -> (i32, i32, i32, i32) {
    %c0_i32 = arith.constant 0 : i32
    %c0_i32_0 = arith.constant 0 : i32
    %c0_i32_1 = arith.constant 0 : i32
    %c0_i32_2 = arith.constant 0 : i32
    return %arg0, %c0_i32, %c0_i32_0, %c0_i32_1 : i32, i32, i32, i32
  }
  func.func @transform_4(%arg0: i32) -> (i32, i32, i32, i32) {
    %c0_i32 = arith.constant 0 : i32
    %c0_i32_0 = arith.constant 0 : i32
    %c0_i32_1 = arith.constant 0 : i32
    %c0_i32_2 = arith.constant 0 : i32
    return %arg0, %c0_i32, %c0_i32_0, %c0_i32_1 : i32, i32, i32, i32
  }
}

</mosaic_0001>

<llo_original>
// kernel: squeeze.14
$region0: #{squeeze.14}
  %s0 = inlined_call_operand.vmem [shape: f32[1,4,5,10], index: 0, kind: input, shape index: {}]
  %s1 = inlined_call_operand.vmem [shape: f32[4,5,2,5], index: 1, kind: output, shape index: {}]
  $region1: #{squeeze.14} parent=0
    #allocation0 [shape = 'u8[81920]{0}', space=vmem, size = 0x14000, scoped, tag = 'scoped mem for output reshape']
    #allocation1 [shape = 'u8[20480]{0}', space=vmem, size = 0x5000, scoped, tag = 'scoped mem for input reshape']
    %s3 = sshll.u32 1, 4
    %s4 = ssub.s32 %s3, 1
    %s5 = smul.addr 4, 4
    %s6 = scalar_lea.vmem %s0, %s5
    %v7 = vld [vmem:[%s6] sm:%s4]
    %s8 = scalar_lea.vmem [#allocation1], 32
    %9 = vst [vmem:[%s8] sm:%s4] %v7
    %s10 = smul.addr 4, 3
    %s11 = scalar_lea.vmem %s0, %s10
    %v12 = vld [vmem:[%s11] sm:%s4]
    %s13 = scalar_lea.vmem [#allocation1], 24
    %14 = vst [vmem:[%s13] sm:%s4] %v12
    %s15 = smul.addr 4, 2
    %s16 = scalar_lea.vmem %s0, %s15
    %v17 = vld [vmem:[%s16] sm:%s4]
    %s18 = scalar_lea.vmem [#allocation1], 16
    %19 = vst [vmem:[%s18] sm:%s4] %v17
    %s20 = scalar_lea.vmem %s0, 4
    %v21 = vld [vmem:[%s20] sm:%s4]
    %s22 = scalar_lea.vmem [#allocation1], 8
    %23 = vst [vmem:[%s22] sm:%s4] %v21
    %v24 = vld [vmem:[%s0] sm:%s4]
    %25 = vst [vmem:[#allocation1] sm:%s4] %v24
    %v26 = vld [vmem:[#allocation1] sm:$0xf]
    %vm27 = vcmask 39936
    %28 = vst.msk [vmem:[#allocation0] ss:$8 sm:$0xf] %vm27, %v26
    %s29 = scalar_lea.vmem [#allocation1], 8
    %v30 = vld [vmem:[%s29] sm:$0xf]
    %vm31 = vcmask 39936
    %s32 = scalar_lea.vmem [#allocation0], 32
    %33 = vst.msk [vmem:[%s32] ss:$8 sm:$0xf] %vm31, %v30
    %s34 = scalar_lea.vmem [#allocation1], 16
    %v35 = vld [vmem:[%s34] sm:$0xf]
    %vm36 = vcmask 39936
    %s37 = scalar_lea.vmem [#allocation0], 64
    %38 = vst.msk [vmem:[%s37] ss:$8 sm:$0xf] %vm36, %v35
    %s39 = scalar_lea.vmem [#allocation1], 24
    %v40 = vld [vmem:[%s39] sm:$0xf]
    %vm41 = vcmask 39936
    %s42 = scalar_lea.vmem [#allocation0], 96
    %43 = vst.msk [vmem:[%s42] ss:$8 sm:$0xf] %vm41, %v40
    %s44 = scalar_lea.vmem [#allocation1], 32
    %v45 = vld [vmem:[%s44] sm:$0xf]
    %vm46 = vcmask 39936
    %s47 = scalar_lea.vmem [#allocation0], 128
    %48 = vst.msk [vmem:[%s47] ss:$8 sm:$0xf] %vm46, %v45
    %v49 = vld.sshfl [vmem:[#allocation1] sm:$0xff pattern:$0xba983210]
    %50 = vrot.lane.b32.xlu0 %v49, 123
    %v51 = vpop.permute.xlu0 %50
    %vm52 = vcmask 39936
    %s53 = scalar_lea.vmem [#allocation0], 1
    %54 = vst.msk [vmem:[%s53] ss:$8 sm:$0xf] %vm52, %v51
    %s55 = scalar_lea.vmem [#allocation0], 1
    %56 = vst.msk [vmem:[%s55] ss:$8 sm:$0xf0] %vm52, %v51
    %s57 = scalar_lea.vmem [#allocation1], 16
    %v58 = vld.sshfl [vmem:[%s57] sm:$0xff pattern:$0xba983210]
    %59 = vrot.lane.b32.xlu0 %v58, 123
    %v60 = vpop.permute.xlu0 %59
    %vm61 = vcmask 39936
    %s62 = scalar_lea.vmem [#allocation0], 65
    %63 = vst.msk [vmem:[%s62] ss:$8 sm:$0xf] %vm61, %v60
    %s64 = scalar_lea.vmem [#allocation0], 65
    %65 = vst.msk [vmem:[%s64] ss:$8 sm:$0xf0] %vm61, %v60
    %s66 = scalar_lea.vmem [#allocation1], 32
    %v67 = vld [vmem:[%s66] sm:$0xf]
    %68 = vrot.lane.b32.xlu0 %v67, 123
    %v69 = vpop.permute.xlu0 %68
    %vm70 = vcmask 39936
    %s71 = scalar_lea.vmem [#allocation0], 129
    %72 = vst.msk [vmem:[%s71] ss:$8 sm:$0xf] %vm70, %v69
    %s74 = sshll.u32 1, 2
    %s75 = ssub.s32 %s74, 1
    %v77 = vld [vmem:[#allocation0] sm:%s75]
    %s78 = sshll.u32 1, 2
    %s79 = ssub.s32 %s78, 1
    %80 = vst [vmem:[%s1] sm:%s79] %v77
    %s81 = scalar_lea.vmem [#allocation0], 8
    %v82 = vld [vmem:[%s81] sm:%s75]
    %s83 = sshll.u32 1, 2
    %s84 = ssub.s32 %s83, 1
    %s85 = scalar_lea.vmem %s1, 2
    %86 = vst [vmem:[%s85] sm:%s84] %v82
    %s87 = scalar_lea.vmem [#allocation0], 16
    %v88 = vld [vmem:[%s87] sm:%s75]
    %s89 = sshll.u32 1, 2
    %s90 = ssub.s32 %s89, 1
    %s91 = smul.addr 2, 2
    %s92 = scalar_lea.vmem %s1, %s91
    %93 = vst [vmem:[%s92] sm:%s90] %v88
    %s94 = scalar_lea.vmem [#allocation0], 24
    %v95 = vld [vmem:[%s94] sm:%s75]
    %s96 = sshll.u32 1, 2
    %s97 = ssub.s32 %s96, 1
    %s98 = smul.addr 2, 3
    %s99 = scalar_lea.vmem %s1, %s98
    %100 = vst [vmem:[%s99] sm:%s97] %v95
    %s101 = scalar_lea.vmem [#allocation0], 32
    %v102 = vld [vmem:[%s101] sm:%s75]
    %s103 = sshll.u32 1, 2
    %s104 = ssub.s32 %s103, 1
    %s105 = smul.addr 2, 4
    %s106 = scalar_lea.vmem %s1, %s105
    %107 = vst [vmem:[%s106] sm:%s104] %v102
    %s108 = scalar_lea.vmem [#allocation0], 40
    %v109 = vld [vmem:[%s108] sm:%s75]
    %s110 = sshll.u32 1, 2
    %s111 = ssub.s32 %s110, 1
    %s112 = smul.addr 2, 5
    %s113 = scalar_lea.vmem %s1, %s112
    %114 = vst [vmem:[%s113] sm:%s111] %v109
    %s115 = scalar_lea.vmem [#allocation0], 48
    %v116 = vld [vmem:[%s115] sm:%s75]
    %s117 = sshll.u32 1, 2
    %s118 = ssub.s32 %s117, 1
    %s119 = smul.addr 2, 6
    %s120 = scalar_lea.vmem %s1, %s119
    %121 = vst [vmem:[%s120] sm:%s118] %v116
    %s122 = scalar_lea.vmem [#allocation0], 56
    %v123 = vld [vmem:[%s122] sm:%s75]
    %s124 = sshll.u32 1, 2
    %s125 = ssub.s32 %s124, 1
    %s126 = smul.addr 2, 7
    %s127 = scalar_lea.vmem %s1, %s126
    %128 = vst [vmem:[%s127] sm:%s125] %v123
    %s129 = scalar_lea.vmem [#allocation0], 64
    %v130 = vld [vmem:[%s129] sm:%s75]
    %s131 = sshll.u32 1, 2
    %s132 = ssub.s32 %s131, 1
    %s133 = smul.addr 2, 8
    %s134 = scalar_lea.vmem %s1, %s133
    %135 = vst [vmem:[%s134] sm:%s132] %v130
    %s136 = scalar_lea.vmem [#allocation0], 72
    %v137 = vld [vmem:[%s136] sm:%s75]
    %s138 = sshll.u32 1, 2
    %s139 = ssub.s32 %s138, 1
    %s140 = smul.addr 2, 9
    %s141 = scalar_lea.vmem %s1, %s140
    %142 = vst [vmem:[%s141] sm:%s139] %v137
    %s143 = scalar_lea.vmem [#allocation0], 80
    %v144 = vld [vmem:[%s143] sm:%s75]
    %s145 = sshll.u32 1, 2
    %s146 = ssub.s32 %s145, 1
    %s147 = smul.addr 2, 10
    %s148 = scalar_lea.vmem %s1, %s147
    %149 = vst [vmem:[%s148] sm:%s146] %v144
    %s150 = scalar_lea.vmem [#allocation0], 88
    %v151 = vld [vmem:[%s150] sm:%s75]
    %s152 = sshll.u32 1, 2
    %s153 = ssub.s32 %s152, 1
    %s154 = smul.addr 2, 11
    %s155 = scalar_lea.vmem %s1, %s154
    %156 = vst [vmem:[%s155] sm:%s153] %v151
    %s157 = scalar_lea.vmem [#allocation0], 96
    %v158 = vld [vmem:[%s157] sm:%s75]
    %s159 = sshll.u32 1, 2
    %s160 = ssub.s32 %s159, 1
    %s161 = smul.addr 2, 12
    %s162 = scalar_lea.vmem %s1, %s161
    %163 = vst [vmem:[%s162] sm:%s160] %v158
    %s164 = scalar_lea.vmem [#allocation0], 104
    %v165 = vld [vmem:[%s164] sm:%s75]
    %s166 = sshll.u32 1, 2
    %s167 = ssub.s32 %s166, 1
    %s168 = smul.addr 2, 13
    %s169 = scalar_lea.vmem %s1, %s168
    %170 = vst [vmem:[%s169] sm:%s167] %v165
    %s171 = scalar_lea.vmem [#allocation0], 112
    %v172 = vld [vmem:[%s171] sm:%s75]
    %s173 = sshll.u32 1, 2
    %s174 = ssub.s32 %s173, 1
    %s175 = smul.addr 2, 14
    %s176 = scalar_lea.vmem %s1, %s175
    %177 = vst [vmem:[%s176] sm:%s174] %v172
    %s178 = scalar_lea.vmem [#allocation0], 120
    %v179 = vld [vmem:[%s178] sm:%s75]
    %s180 = sshll.u32 1, 2
    %s181 = ssub.s32 %s180, 1
    %s182 = smul.addr 2, 15
    %s183 = scalar_lea.vmem %s1, %s182
    %184 = vst [vmem:[%s183] sm:%s181] %v179
    %s185 = scalar_lea.vmem [#allocation0], 128
    %v186 = vld [vmem:[%s185] sm:%s75]
    %s187 = sshll.u32 1, 2
    %s188 = ssub.s32 %s187, 1
    %s189 = smul.addr 2, 16
    %s190 = scalar_lea.vmem %s1, %s189
    %191 = vst [vmem:[%s190] sm:%s188] %v186
    %s192 = scalar_lea.vmem [#allocation0], 136
    %v193 = vld [vmem:[%s192] sm:%s75]
    %s194 = sshll.u32 1, 2
    %s195 = ssub.s32 %s194, 1
    %s196 = smul.addr 2, 17
    %s197 = scalar_lea.vmem %s1, %s196
    %198 = vst [vmem:[%s197] sm:%s195] %v193
    %s199 = scalar_lea.vmem [#allocation0], 144
    %v200 = vld [vmem:[%s199] sm:%s75]
    %s201 = sshll.u32 1, 2
    %s202 = ssub.s32 %s201, 1
    %s203 = smul.addr 2, 18
    %s204 = scalar_lea.vmem %s1, %s203
    %205 = vst [vmem:[%s204] sm:%s202] %v200
    %s206 = scalar_lea.vmem [#allocation0], 152
    %v207 = vld [vmem:[%s206] sm:%s75]
    %s208 = sshll.u32 1, 2
    %s209 = ssub.s32 %s208, 1
    %s210 = smul.addr 2, 19
    %s211 = scalar_lea.vmem %s1, %s210
    %212 = vst [vmem:[%s211] sm:%s209] %v207

// kernel: squeeze.16
$region0: #{squeeze.16}
  %s0 = inlined_call_operand.vmem [shape: f32[1,8,3,10], index: 0, kind: input, shape index: {}]
  %s1 = inlined_call_operand.vmem [shape: f32[8,3,2,5], index: 1, kind: output, shape index: {}]
  $region1: #{squeeze.16} parent=0
    #allocation0 [shape = 'u8[98304]{0}', space=vmem, size = 0x18000, scoped, tag = 'scoped mem for output reshape']
    %v2 = vld [vmem:[%s0] sm:$0xff]
    %vm3 = vcmask 39936
    %4 = vst.msk [vmem:[#allocation0] ss:$8 sm:$0xf] %vm3, %v2
    %5 = vst.msk [vmem:[#allocation0] ss:$8 sm:$0xf0] %vm3, %v2
    %s6 = scalar_lea.vmem %s0, 8
    %v7 = vld [vmem:[%s6] sm:$0xff]
    %vm8 = vcmask 39936
    %s9 = scalar_lea.vmem [#allocation0], 64
    %10 = vst.msk [vmem:[%s9] ss:$8 sm:$0xf] %vm8, %v7
    %s11 = scalar_lea.vmem [#allocation0], 64
    %12 = vst.msk [vmem:[%s11] ss:$8 sm:$0xf0] %vm8, %v7
    %s13 = scalar_lea.vmem %s0, 16
    %v14 = vld [vmem:[%s13] sm:$0xff]
    %vm15 = vcmask 39936
    %s16 = scalar_lea.vmem [#allocation0], 128
    %17 = vst.msk [vmem:[%s16] ss:$8 sm:$0xf] %vm15, %v14
    %s18 = scalar_lea.vmem [#allocation0], 128
    %19 = vst.msk [vmem:[%s18] ss:$8 sm:$0xf0] %vm15, %v14
    %v20 = vld [vmem:[%s0] sm:$0xff]
    %21 = vrot.lane.b32.xlu0 %v20, 123
    %v22 = vpop.permute.xlu0 %21
    %vm23 = vcmask 39936
    %s24 = scalar_lea.vmem [#allocation0], 1
    %25 = vst.msk [vmem:[%s24] ss:$8 sm:$0xf] %vm23, %v22
    %s26 = scalar_lea.vmem [#allocation0], 1
    %27 = vst.msk [vmem:[%s26] ss:$8 sm:$0xf0] %vm23, %v22
    %s28 = scalar_lea.vmem %s0, 8
    %v29 = vld [vmem:[%s28] sm:$0xff]
    %30 = vrot.lane.b32.xlu0 %v29, 123
    %v31 = vpop.permute.xlu0 %30
    %vm32 = vcmask 39936
    %s33 = scalar_lea.vmem [#allocation0], 65
    %34 = vst.msk [vmem:[%s33] ss:$8 sm:$0xf] %vm32, %v31
    %s35 = scalar_lea.vmem [#allocation0], 65
    %36 = vst.msk [vmem:[%s35] ss:$8 sm:$0xf0] %vm32, %v31
    %s37 = scalar_lea.vmem %s0, 16
    %v38 = vld [vmem:[%s37] sm:$0xff]
    %39 = vrot.lane.b32.xlu0 %v38, 123
    %v40 = vpop.permute.xlu0 %39
    %vm41 = vcmask 39936
    %s42 = scalar_lea.vmem [#allocation0], 129
    %43 = vst.msk [vmem:[%s42] ss:$8 sm:$0xf] %vm41, %v40
    %s44 = scalar_lea.vmem [#allocation0], 129
    %45 = vst.msk [vmem:[%s44] ss:$8 sm:$0xf0] %vm41, %v40
    %s47 = sshll.u32 1, 2
    %s48 = ssub.s32 %s47, 1
    %v50 = vld [vmem:[#allocation0] sm:%s48]
    %s51 = sshll.u32 1, 2
    %s52 = ssub.s32 %s51, 1
    %53 = vst [vmem:[%s1] sm:%s52] %v50
    %s54 = scalar_lea.vmem [#allocation0], 8
    %v55 = vld [vmem:[%s54] sm:%s48]
    %s56 = sshll.u32 1, 2
    %s57 = ssub.s32 %s56, 1
    %s58 = scalar_lea.vmem %s1, 2
    %59 = vst [vmem:[%s58] sm:%s57] %v55
    %s60 = scalar_lea.vmem [#allocation0], 16
    %v61 = vld [vmem:[%s60] sm:%s48]
    %s62 = sshll.u32 1, 2
    %s63 = ssub.s32 %s62, 1
    %s64 = smul.addr 2, 2
    %s65 = scalar_lea.vmem %s1, %s64
    %66 = vst [vmem:[%s65] sm:%s63] %v61
    %s67 = scalar_lea.vmem [#allocation0], 24
    %v68 = vld [vmem:[%s67] sm:%s48]
    %s69 = sshll.u32 1, 2
    %s70 = ssub.s32 %s69, 1
    %s71 = smul.addr 2, 3
    %s72 = scalar_lea.vmem %s1, %s71
    %73 = vst [vmem:[%s72] sm:%s70] %v68
    %s74 = scalar_lea.vmem [#allocation0], 32
    %v75 = vld [vmem:[%s74] sm:%s48]
    %s76 = sshll.u32 1, 2
    %s77 = ssub.s32 %s76, 1
    %s78 = smul.addr 2, 4
    %s79 = scalar_lea.vmem %s1, %s78
    %80 = vst [vmem:[%s79] sm:%s77] %v75
    %s81 = scalar_lea.vmem [#allocation0], 40
    %v82 = vld [vmem:[%s81] sm:%s48]
    %s83 = sshll.u32 1, 2
    %s84 = ssub.s32 %s83, 1
    %s85 = smul.addr 2, 5
    %s86 = scalar_lea.vmem %s1, %s85
    %87 = vst [vmem:[%s86] sm:%s84] %v82
    %s88 = scalar_lea.vmem [#allocation0], 48
    %v89 = vld [vmem:[%s88] sm:%s48]
    %s90 = sshll.u32 1, 2
    %s91 = ssub.s32 %s90, 1
    %s92 = smul.addr 2, 6
    %s93 = scalar_lea.vmem %s1, %s92
    %94 = vst [vmem:[%s93] sm:%s91] %v89
    %s95 = scalar_lea.vmem [#allocation0], 56
    %v96 = vld [vmem:[%s95] sm:%s48]
    %s97 = sshll.u32 1, 2
    %s98 = ssub.s32 %s97, 1
    %s99 = smul.addr 2, 7
    %s100 = scalar_lea.vmem %s1, %s99
    %101 = vst [vmem:[%s100] sm:%s98] %v96
    %s102 = scalar_lea.vmem [#allocation0], 64
    %v103 = vld [vmem:[%s102] sm:%s48]
    %s104 = sshll.u32 1, 2
    %s105 = ssub.s32 %s104, 1
    %s106 = smul.addr 2, 8
    %s107 = scalar_lea.vmem %s1, %s106
    %108 = vst [vmem:[%s107] sm:%s105] %v103
    %s109 = scalar_lea.vmem [#allocation0], 72
    %v110 = vld [vmem:[%s109] sm:%s48]
    %s111 = sshll.u32 1, 2
    %s112 = ssub.s32 %s111, 1
    %s113 = smul.addr 2, 9
    %s114 = scalar_lea.vmem %s1, %s113
    %115 = vst [vmem:[%s114] sm:%s112] %v110
    %s116 = scalar_lea.vmem [#allocation0], 80
    %v117 = vld [vmem:[%s116] sm:%s48]
    %s118 = sshll.u32 1, 2
    %s119 = ssub.s32 %s118, 1
    %s120 = smul.addr 2, 10
    %s121 = scalar_lea.vmem %s1, %s120
    %122 = vst [vmem:[%s121] sm:%s119] %v117
    %s123 = scalar_lea.vmem [#allocation0], 88
    %v124 = vld [vmem:[%s123] sm:%s48]
    %s125 = sshll.u32 1, 2
    %s126 = ssub.s32 %s125, 1
    %s127 = smul.addr 2, 11
    %s128 = scalar_lea.vmem %s1, %s127
    %129 = vst [vmem:[%s128] sm:%s126] %v124
    %s130 = scalar_lea.vmem [#allocation0], 96
    %v131 = vld [vmem:[%s130] sm:%s48]
    %s132 = sshll.u32 1, 2
    %s133 = ssub.s32 %s132, 1
    %s134 = smul.addr 2, 12
    %s135 = scalar_lea.vmem %s1, %s134
    %136 = vst [vmem:[%s135] sm:%s133] %v131
    %s137 = scalar_lea.vmem [#allocation0], 104
    %v138 = vld [vmem:[%s137] sm:%s48]
    %s139 = sshll.u32 1, 2
    %s140 = ssub.s32 %s139, 1
    %s141 = smul.addr 2, 13
    %s142 = scalar_lea.vmem %s1, %s141
    %143 = vst [vmem:[%s142] sm:%s140] %v138
    %s144 = scalar_lea.vmem [#allocation0], 112
    %v145 = vld [vmem:[%s144] sm:%s48]
    %s146 = sshll.u32 1, 2
    %s147 = ssub.s32 %s146, 1
    %s148 = smul.addr 2, 14
    %s149 = scalar_lea.vmem %s1, %s148
    %150 = vst [vmem:[%s149] sm:%s147] %v145
    %s151 = scalar_lea.vmem [#allocation0], 120
    %v152 = vld [vmem:[%s151] sm:%s48]
    %s153 = sshll.u32 1, 2
    %s154 = ssub.s32 %s153, 1
    %s155 = smul.addr 2, 15
    %s156 = scalar_lea.vmem %s1, %s155
    %157 = vst [vmem:[%s156] sm:%s154] %v152
    %s158 = scalar_lea.vmem [#allocation0], 128
    %v159 = vld [vmem:[%s158] sm:%s48]
    %s160 = sshll.u32 1, 2
    %s161 = ssub.s32 %s160, 1
    %s162 = smul.addr 2, 16
    %s163 = scalar_lea.vmem %s1, %s162
    %164 = vst [vmem:[%s163] sm:%s161] %v159
    %s165 = scalar_lea.vmem [#allocation0], 136
    %v166 = vld [vmem:[%s165] sm:%s48]
    %s167 = sshll.u32 1, 2
    %s168 = ssub.s32 %s167, 1
    %s169 = smul.addr 2, 17
    %s170 = scalar_lea.vmem %s1, %s169
    %171 = vst [vmem:[%s170] sm:%s168] %v166
    %s172 = scalar_lea.vmem [#allocation0], 144
    %v173 = vld [vmem:[%s172] sm:%s48]
    %s174 = sshll.u32 1, 2
    %s175 = ssub.s32 %s174, 1
    %s176 = smul.addr 2, 18
    %s177 = scalar_lea.vmem %s1, %s176
    %178 = vst [vmem:[%s177] sm:%s175] %v173
    %s179 = scalar_lea.vmem [#allocation0], 152
    %v180 = vld [vmem:[%s179] sm:%s48]
    %s181 = sshll.u32 1, 2
    %s182 = ssub.s32 %s181, 1
    %s183 = smul.addr 2, 19
    %s184 = scalar_lea.vmem %s1, %s183
    %185 = vst [vmem:[%s184] sm:%s182] %v180
    %s186 = scalar_lea.vmem [#allocation0], 160
    %v187 = vld [vmem:[%s186] sm:%s48]
    %s188 = sshll.u32 1, 2
    %s189 = ssub.s32 %s188, 1
    %s190 = smul.addr 2, 20
    %s191 = scalar_lea.vmem %s1, %s190
    %192 = vst [vmem:[%s191] sm:%s189] %v187
    %s193 = scalar_lea.vmem [#allocation0], 168
    %v194 = vld [vmem:[%s193] sm:%s48]
    %s195 = sshll.u32 1, 2
    %s196 = ssub.s32 %s195, 1
    %s197 = smul.addr 2, 21
    %s198 = scalar_lea.vmem %s1, %s197
    %199 = vst [vmem:[%s198] sm:%s196] %v194
    %s200 = scalar_lea.vmem [#allocation0], 176
    %v201 = vld [vmem:[%s200] sm:%s48]
    %s202 = sshll.u32 1, 2
    %s203 = ssub.s32 %s202, 1
    %s204 = smul.addr 2, 22
    %s205 = scalar_lea.vmem %s1, %s204
    %206 = vst [vmem:[%s205] sm:%s203] %v201
    %s207 = scalar_lea.vmem [#allocation0], 184
    %v208 = vld [vmem:[%s207] sm:%s48]
    %s209 = sshll.u32 1, 2
    %s210 = ssub.s32 %s209, 1
    %s211 = smul.addr 2, 23
    %s212 = scalar_lea.vmem %s1, %s211
    %213 = vst [vmem:[%s212] sm:%s210] %v208

// kernel: multi_period_discriminator.5
$region0: #{multi_period_discriminator.5}
  #allocation0 [shape = 'u32[]', space=smem, size = 0x4, offset = 0x4, fixed_abs, tag = 'smem constant byte address 0x4 - core index']
  #allocation1 [shape = 'u32[144,128]{1,0:T(1,128)}', space=vmem, size = 0x12000, scoped, tag = 'internal scratch']
  %s0 = inlined_call_operand.vmem [shape: s32[3], index: 0, kind: input, shape index: {}]
  %s1 = inlined_call_operand.vmem [shape: bf16[3,5,8,4], index: 1, kind: input, shape index: {}]
  %s2 = inlined_call_operand.vmem [shape: f32[3,8,1], index: 2, kind: input, shape index: {}]
  %s3 = inlined_call_operand.vmem [shape: f32[3,4,15,10], index: 3, kind: input, shape index: {}]
  %s4 = inlined_call_operand.vmem [shape: f32[3,8,8,10], index: 4, kind: output, shape index: {}]
  %s5 = sld [smem:[#allocation0]]
  $region53: #{multi_period_discriminator.5} parent=0
    _
  %s7 = ssub.s32 1, %s5
  %s8 = scalar_select 0, %s7, %s5
  $region1: #{multi_period_discriminator.5} parent=0
    #allocation2 [shape = 'u8[512]{0}', space=smem, size = 0x200, scoped, tag = 'input window, operand 0, single buffered']
    #allocation3 [shape = 's32[2]{0}', space=sflag, size = 0x8, scoped, tag = 'scoped memory for multi_period_discriminator.5']
    %9 = vsyncpa [#allocation3], 0
    loop: start=0, step=1, limit=5
    $region2: #{multi_period_discriminator.5} parent=1 // loop_pre_header
      _
    $region3: #{multi_period_discriminator.5} parent=1 // loop_header
      %s11 = sphi 0, %s15
      %p12 = scmp.ge.s32.totalorder %s11, 5
      %s19 = sphi 0, %s19
      %s21 = sphi 0, %s19
      %s22 = sphi 0, %s21
      %s36 = sphi 0, %s22
      %s42 = sphi 0, %s44
      %s45 = sphi 0, %s42
      %s46 = sphi 0, %s45
      %s62 = sphi 0, %s46
      %s68 = sphi 0, %s70
      %s71 = sphi 0, %s68
      %s72 = sphi 0, %s71
      %s88 = sphi 0, %s72
      %s94 = sphi 0, %s96
      %s97 = sphi 0, %s94
      %s98 = sphi 0, %s97
      %s114 = sphi 0, %s98
      %s120 = sphi 0, %s122
      %s123 = sphi 0, %s120
      %s124 = sphi 0, %s123
      %s140 = sphi 0, %s124
    $region4: #{multi_period_discriminator.5} parent=1 // loop_header_branch
      %14 = sbr.rel (%p12) target = $region8
    $region5: #{multi_period_discriminator.5} parent=1 // loop_body
      %s16 = ssub.s32 %s11, 1
      %s17 = ssub.s32 %s11, 2
      %s18 = sadd.s32 %s11, 1
      %s20 = sadd.s32 %s19, 1
      %p23 = scmp.eq.s32.totalorder %s11, 2
      %p24 = scmp.ne.s32.totalorder %s19, %s21
      %p25 = scmp.eq.s32.totalorder %s11, 0
      %p26 = por %p24, %p25
      %p27 = scmp.ne.s32.totalorder %s19, %s21
      %p28 = scmp.eq.s32.totalorder %s16, 2
      %p29 = por %p27, %p28
      %p30 = scmp.ne.s32.totalorder %s21, %s22
      %p31 = scmp.eq.s32.totalorder %s16, 0
      %p32 = por %p30, %p31
      %p33 = scmp.ne.s32.totalorder %s21, %s22
      %p34 = scmp.eq.s32.totalorder %s17, 2
      %p35 = por %p33, %p34
      %p37 = scmp.ne.s32.totalorder %s22, %s36
      %p38 = scmp.eq.s32.totalorder %s17, 0
      %p39 = por %p37, %p38
      %s40 = ssub.s32 %s11, %s18
      %p41 = scmp.eq.s32.totalorder %s40, 0
      %s43 = sadd.s32 %s42, 1
      %s44 = scalar_select %p41, %s42, %s43
      %p47 = pneg %p41
      %p48 = scmp.eq.s32.totalorder %s11, 2
      %p49 = por %p47, %p48
      %p50 = scmp.ne.s32.totalorder %s42, %s45
      %p51 = scmp.eq.s32.totalorder %s11, 0
      %p52 = por %p50, %p51
      %p53 = scmp.ne.s32.totalorder %s42, %s45
      %p54 = scmp.eq.s32.totalorder %s16, 2
      %p55 = por %p53, %p54
      %p56 = scmp.ne.s32.totalorder %s45, %s46
      %p57 = scmp.eq.s32.totalorder %s16, 0
      %p58 = por %p56, %p57
      %p59 = scmp.ne.s32.totalorder %s45, %s46
      %p60 = scmp.eq.s32.totalorder %s17, 2
      %p61 = por %p59, %p60
      %p63 = scmp.ne.s32.totalorder %s46, %s62
      %p64 = scmp.eq.s32.totalorder %s17, 0
      %p65 = por %p63, %p64
      %s66 = ssub.s32 %s11, %s18
      %p67 = scmp.eq.s32.totalorder %s66, 0
      %s69 = sadd.s32 %s68, 1
      %s70 = scalar_select %p67, %s68, %s69
      %p73 = pneg %p67
      %p74 = scmp.eq.s32.totalorder %s11, 2
      %p75 = por %p73, %p74
      %p76 = scmp.ne.s32.totalorder %s68, %s71
      %p77 = scmp.eq.s32.totalorder %s11, 0
      %p78 = por %p76, %p77
      %p79 = scmp.ne.s32.totalorder %s68, %s71
      %p80 = scmp.eq.s32.totalorder %s16, 2
      %p81 = por %p79, %p80
      %p82 = scmp.ne.s32.totalorder %s71, %s72
      %p83 = scmp.eq.s32.totalorder %s16, 0
      %p84 = por %p82, %p83
      %p85 = scmp.ne.s32.totalorder %s71, %s72
      %p86 = scmp.eq.s32.totalorder %s17, 2
      %p87 = por %p85, %p86
      %p89 = scmp.ne.s32.totalorder %s72, %s88
      %p90 = scmp.eq.s32.totalorder %s17, 0
      %p91 = por %p89, %p90
      %s92 = ssub.s32 %s11, %s18
      %p93 = scmp.eq.s32.totalorder %s92, 0
      %s95 = sadd.s32 %s94, 1
      %s96 = scalar_select %p93, %s94, %s95
      %p99 = pneg %p93
      %p100 = scmp.eq.s32.totalorder %s11, 2
      %p101 = por %p99, %p100
      %p102 = scmp.ne.s32.totalorder %s94, %s97
      %p103 = scmp.eq.s32.totalorder %s11, 0
      %p104 = por %p102, %p103
      %p105 = scmp.ne.s32.totalorder %s94, %s97
      %p106 = scmp.eq.s32.totalorder %s16, 2
      %p107 = por %p105, %p106
      %p108 = scmp.ne.s32.totalorder %s97, %s98
      %p109 = scmp.eq.s32.totalorder %s16, 0
      %p110 = por %p108, %p109
      %p111 = scmp.ne.s32.totalorder %s97, %s98
      %p112 = scmp.eq.s32.totalorder %s17, 2
      %p113 = por %p111, %p112
      %p115 = scmp.ne.s32.totalorder %s98, %s114
      %p116 = scmp.eq.s32.totalorder %s17, 0
      %p117 = por %p115, %p116
      %s118 = ssub.s32 %s11, %s18
      %p119 = scmp.eq.s32.totalorder %s118, 0
      %s121 = sadd.s32 %s120, 1
      %s122 = scalar_select %p119, %s120, %s121
      %p125 = pneg %p119
      %p126 = scmp.eq.s32.totalorder %s11, 2
      %p127 = por %p125, %p126
      %p128 = scmp.ne.s32.totalorder %s120, %s123
      %p129 = scmp.eq.s32.totalorder %s11, 0
      %p130 = por %p128, %p129
      %p131 = scmp.ne.s32.totalorder %s120, %s123
      %p132 = scmp.eq.s32.totalorder %s16, 2
      %p133 = por %p131, %p132
      %p134 = scmp.ne.s32.totalorder %s123, %s124
      %p135 = scmp.eq.s32.totalorder %s16, 0
      %p136 = por %p134, %p135
      %p137 = scmp.ne.s32.totalorder %s123, %s124
      %p138 = scmp.eq.s32.totalorder %s17, 2
      %p139 = por %p137, %p138
      %p141 = scmp.ne.s32.totalorder %s124, %s140
      %p142 = scmp.eq.s32.totalorder %s17, 0
      %p143 = por %p141, %p142
      %p144 = scmp.le.s32.totalorder 1, %s11
      %p145 = scmp.lt.s32.totalorder %s11, 4
      %p146 = pnand %p144, %p145
      %p147 = pneg %p146
      // Predicated region
      $region9: #{multi_period_discriminator.5} parent=5 // pred_check
        _
      $region10: #{multi_period_discriminator.5} parent=5 // pred_check_branch
        %149 = sbr.rel (%p146) target = $region12
      $region11: #{multi_period_discriminator.5} parent=5 // pred_region
        %s150 = ssub.s32 %s11, 1
        // Predicated region
        $region13: #{multi_period_discriminator.5} parent=11 // pred_check
          %p151 = pneg %p32
        $region14: #{multi_period_discriminator.5} parent=11 // pred_check_branch
          %153 = sbr.rel (%p151) target = $region16
        $region15: #{multi_period_discriminator.5} parent=11 // pred_region
          %s155 = ssub.s32 16, 16
          %156 = vsyncadd [#allocation3], %s155
          %s158 = sshll.u32 %s0, 4
          %s159 = int_to_ptr.vmem [resolvable:$true] %s158
          %161 = dma.vmem_to_smem %s159, 16, [#allocation2], [#allocation3]
        $region16: #{multi_period_discriminator.5} parent=11 // pred_fallthru
          _
      $region12: #{multi_period_discriminator.5} parent=5 // pred_fallthru
        _
      %p162 = scmp.lt.s32.totalorder %s11, 3
      // Predicated region
      $region17: #{multi_period_discriminator.5} parent=5 // pred_check
        %p163 = pneg %p162
      $region18: #{multi_period_discriminator.5} parent=5 // pred_check_branch
        %165 = sbr.rel (%p163) target = $region20
      $region19: #{multi_period_discriminator.5} parent=5 // pred_region
        // Predicated region
        $region21: #{multi_period_discriminator.5} parent=19 // pred_check
          %p166 = pneg %p52
        $region22: #{multi_period_discriminator.5} parent=19 // pred_check_branch
          %168 = sbr.rel (%p166) target = $region24
        $region23: #{multi_period_discriminator.5} parent=19 // pred_region
          %p169 = scmp.lt.s32.totalorder %s11, 2
          %s170 = scalar_select %p169, %s11, 2
          %s171 = smul.addr %s170, 5
          %s172 = smul.addr %s171, 4
          %s173 = scalar_lea.vmem %s1, %s172
        $region24: #{multi_period_discriminator.5} parent=19 // pred_fallthru
          _
        // Predicated region
        $region25: #{multi_period_discriminator.5} parent=19 // pred_check
          %p174 = pneg %p78
        $region26: #{multi_period_discriminator.5} parent=19 // pred_check_branch
          %176 = sbr.rel (%p174) target = $region28
        $region27: #{multi_period_discriminator.5} parent=19 // pred_region
          %p177 = scmp.lt.s32.totalorder %s11, 2
          %s178 = scalar_select %p177, %s11, 2
          %s179 = smul.addr %s178, 8
          %s180 = scalar_lea.vmem %s2, %s179
        $region28: #{multi_period_discriminator.5} parent=19 // pred_fallthru
          _
        // Predicated region
        $region29: #{multi_period_discriminator.5} parent=19 // pred_check
          %p181 = pneg %p104
        $region30: #{multi_period_discriminator.5} parent=19 // pred_check_branch
          %183 = sbr.rel (%p181) target = $region32
        $region31: #{multi_period_discriminator.5} parent=19 // pred_region
          %p184 = scmp.lt.s32.totalorder %s11, 2
          %s185 = scalar_select %p184, %s11, 2
          %s186 = smul.addr %s185, 8
          %s187 = smul.addr %s186, 8
          %s188 = scalar_lea.vmem %s3, %s187
        $region32: #{multi_period_discriminator.5} parent=19 // pred_fallthru
          _
      $region20: #{multi_period_discriminator.5} parent=5 // pred_fallthru
        _
      %p189 = scmp.le.s32.totalorder 1, %s11
      %p190 = scmp.lt.s32.totalorder %s11, 4
      %p191 = pnand %p189, %p190
      %p192 = pneg %p191
      // Predicated region
      $region33: #{multi_period_discriminator.5} parent=5 // pred_check
        _
      $region34: #{multi_period_discriminator.5} parent=5 // pred_check_branch
        %194 = sbr.rel (%p191) target = $region36
      $region35: #{multi_period_discriminator.5} parent=5 // pred_region
        %s195 = ssub.s32 %s11, 1
        // Predicated region
        $region37: #{multi_period_discriminator.5} parent=35 // pred_check
          %p196 = pneg %p32
        $region38: #{multi_period_discriminator.5} parent=35 // pred_check_branch
          %198 = sbr.rel (%p196) target = $region40
        $region39: #{multi_period_discriminator.5} parent=35 // pred_region
          %199 = dma.done [#allocation3], 16
        $region40: #{multi_period_discriminator.5} parent=35 // pred_fallthru
          _
        %200 = sfence
        %p201 = pneg %p32
        %p202 = pneg %p29
        %p203 = scmp.lt.s32.totalorder %s16, 2
        %s204 = scalar_select %p203, %s16, 2
        %s205 = smul.addr %s204, 5
        %s206 = smul.addr %s205, 4
        %s207 = scalar_lea.vmem %s1, %s206
        %p208 = pneg %p58
        %p209 = pneg %p55
        %p210 = scmp.lt.s32.totalorder %s16, 2
        %s211 = scalar_select %p210, %s16, 2
        %s212 = smul.addr %s211, 8
        %s213 = scalar_lea.vmem %s2, %s212
        %p214 = pneg %p84
        %p215 = pneg %p81
        %p216 = scmp.lt.s32.totalorder %s16, 2
        %s217 = scalar_select %p216, %s16, 2
        %s218 = smul.addr %s217, 8
        %s219 = smul.addr %s218, 8
        %s220 = scalar_lea.vmem %s3, %s219
        %p221 = pneg %p110
        %p222 = pneg %p107
        %p223 = pneg %p136
        %p224 = pneg %p133
        %p225 = scmp.lt.s32.totalorder %s16, 2
        %s226 = scalar_select %p225, %s16, 2
        %s227 = smul.addr %s226, 8
        %s228 = smul.addr %s227, 8
        %s229 = scalar_lea.vmem %s4, %s228
        %p230 = scmp.lt.s32.totalorder %s16, 2
        %s231 = scalar_select %p230, %s16, 2
        %s232 = smul.addr %s231, 5
        %s233 = smul.addr %s232, 4
        %s234 = scalar_lea.vmem %s1, %s233
        %p235 = scmp.lt.s32.totalorder %s16, 2
        %s236 = scalar_select %p235, %s16, 2
        %s237 = smul.addr %s236, 8
        %s238 = scalar_lea.vmem %s2, %s237
        %p239 = scmp.lt.s32.totalorder %s16, 2
        %s240 = scalar_select %p239, %s16, 2
        %s241 = smul.addr %s240, 8
        %s242 = smul.addr %s241, 8
        %s243 = scalar_lea.vmem %s3, %s242
        %p244 = scmp.lt.s32.totalorder %s16, 2
        %s245 = scalar_select %p244, %s16, 2
        %s246 = smul.addr %s245, 8
        %s247 = smul.addr %s246, 8
        %s248 = scalar_lea.vmem %s4, %s247
        %v250 = vld [vmem:[%s243] ss:$3 sm:$0xf]
        %s251 = scalar_lea.vmem %s243, 16
        %v252 = vld [vmem:[%s251] ss:$3 sm:$0xf]
        %s253 = scalar_lea.vmem %s243, 32
        %v254 = vld [vmem:[%s253] ss:$3 sm:$0xf]
        %s255 = scalar_lea.vmem %s243, 48
        %v256 = vld [vmem:[%s255] ss:$3 sm:$0xf]
        %v257 = vmul.f32 %v250, 0.2
        %v258 = vmul.f32 %v252, 0.2
        %v259 = vmul.f32 %v254, 0.2
        %v260 = vmul.f32 %v256, 0.2
        %v261 = vmax.f32 %v250, %v257
        %v262 = vmax.f32 %v252, %v258
        %v263 = vmax.f32 %v254, %v259
        %v264 = vmax.f32 %v256, %v260
        %v265 = vcombine.low %v261, %v263
        %v267 = vunpack.c.l.s4 1983009808
        %v268 = vunpack.c.0.s8 %v267
        %v269 = vlaneseq
        %v270 = vshrl.u32 %v269, 7
        %v271 = vsub.s32 %v268, %v270
        %v272 = vrot.slane %v265, %v271
        %v273 = vcombine.low %v262, %v264
        %v275 = vunpack.c.l.s4 1983009808
        %v276 = vunpack.c.0.s8 %v275
        %v277 = vlaneseq
        %v278 = vshrl.u32 %v277, 7
        %v279 = vsub.s32 %v276, %v278
        %v280 = vrot.slane %v273, %v279
        %v281 = vcombine.low %v272, %v280
        %v282 = vcombine.high %v272, %v280
        %v284 = vunpack.c.l.s4 1934713408
        %v285 = vunpack.c.0.s8 %v284
        %v286 = vlaneseq
        %v287 = vshrl.u32 %v286, 7
        %v288 = vsub.s32 %v285, %v287
        %v289 = vrot.slane %v281, %v288
        %v291 = vunpack.c.l.s4 1934713408
        %v292 = vunpack.c.0.s8 %v291
        %v293 = vlaneseq
        %v294 = vshrl.u32 %v293, 7
        %v295 = vsub.s32 %v292, %v294
        %v296 = vrot.slane %v282, %v295
        %v297 = vcombine.high %v289, 0.0
        %v298 = vcombine.high %v296, 0.0
        %300 = vrot.lane.b32.xlu0 %v297, 10
        %v301 = vpop.permute.xlu0 %300
        %304 = vrot.lane.b32.xlu0 %v296, 20
        %v305 = vpop.permute.xlu0 %304
        %308 = vrot.lane.b32.xlu0 %v298, 30
        %v309 = vpop.permute.xlu0 %308
        %vm311 = vcmask 80896
        %v312 = vsel %vm311, %v289, %v301
        %vm313 = vcmask 162816
        %v314 = vsel %vm313, %v312, %v305
        %vm315 = vcmask 244736
        %v316 = vsel %vm315, %v314, %v309
        %v317 = vpack.c.bf16 %v316, %v316
        %v318 = vld [vmem:[%s234] sm:$0xf]
        %s319 = scalar_lea.vmem %s243, 1
        %v320 = vld [vmem:[%s319] ss:$3 sm:$0xf]
        %s321 = scalar_lea.vmem %s243, 17
        %v322 = vld [vmem:[%s321] ss:$3 sm:$0xf]
        %s323 = scalar_lea.vmem %s243, 33
        %v324 = vld [vmem:[%s323] ss:$3 sm:$0xf]
        %s325 = scalar_lea.vmem %s243, 49
        %v326 = vld [vmem:[%s325] ss:$3 sm:$0xf]
        %v327 = vmul.f32 %v320, 0.2
        %v328 = vmul.f32 %v322, 0.2
        %v329 = vmul.f32 %v324, 0.2
        %v330 = vmul.f32 %v326, 0.2
        %v331 = vmax.f32 %v320, %v327
        %v332 = vmax.f32 %v322, %v328
        %v333 = vmax.f32 %v324, %v329
        %v334 = vmax.f32 %v326, %v330
        %v335 = vcombine.low %v331, %v333
        %v337 = vunpack.c.l.s4 1983009808
        %v338 = vunpack.c.0.s8 %v337
        %v339 = vlaneseq
        %v340 = vshrl.u32 %v339, 7
        %v341 = vsub.s32 %v338, %v340
        %v342 = vrot.slane %v335, %v341
        %v343 = vcombine.low %v332, %v334
        %v345 = vunpack.c.l.s4 1983009808
        %v346 = vunpack.c.0.s8 %v345
        %v347 = vlaneseq
        %v348 = vshrl.u32 %v347, 7
        %v349 = vsub.s32 %v346, %v348
        %v350 = vrot.slane %v343, %v349
        %v351 = vcombine.low %v342, %v350
        %v352 = vcombine.high %v342, %v350
        %v354 = vunpack.c.l.s4 1934713408
        %v355 = vunpack.c.0.s8 %v354
        %v356 = vlaneseq
        %v357 = vshrl.u32 %v356, 7
        %v358 = vsub.s32 %v355, %v357
        %v359 = vrot.slane %v351, %v358
        %v361 = vunpack.c.l.s4 1934713408
        %v362 = vunpack.c.0.s8 %v361
        %v363 = vlaneseq
        %v364 = vshrl.u32 %v363, 7
        %v365 = vsub.s32 %v362, %v364
        %v366 = vrot.slane %v352, %v365
        %v367 = vcombine.high %v359, 0.0
        %v368 = vcombine.high %v366, 0.0
        %370 = vrot.lane.b32.xlu0 %v367, 10
        %v371 = vpop.permute.xlu0 %370
        %374 = vrot.lane.b32.xlu0 %v366, 20
        %v375 = vpop.permute.xlu0 %374
        %378 = vrot.lane.b32.xlu0 %v368, 30
        %v379 = vpop.permute.xlu0 %378
        %v381 = vsel %vm311, %v359, %v371
        %v382 = vsel %vm313, %v381, %v375
        %v383 = vsel %vm315, %v382, %v379
        %v384 = vpack.c.bf16 %v383, %v383
        %s385 = scalar_lea.vmem %s234, 4
        %v386 = vld [vmem:[%s385] sm:$0xf]
        %vm387 = vcmask 31744
        %v389 = vsel %vm387, %v386, 0
        %vm391 = vcmask 1041408
        %v393 = vsel %vm391, %v384, 0
        %395 = vmatprep.subr.bf16.mxu0 0
        %396 = vmatpush1.bf16.msra.mxu0 0
        %397 = vmatprep.subr.bf16.mxu0 0
        %398 = vmatpush1.bf16.msra.mxu0 0
        %399 = vmatprep.subr.bf16.mxu0 0
        %400 = vmatpush1.bf16.msra.mxu0 0
        %401 = vmatprep.subr.bf16.mxu0 0
        %402 = vmatpush1.bf16.msra.mxu0 0
        %403 = vmatprep.subr.bf16.mxu0 0
        %404 = vmatpush1.bf16.msra.mxu0 0
        %405 = vmatprep.subr.bf16.mxu0 0
        %406 = vmatpush1.bf16.msra.mxu0 0
        %407 = vmatprep.subr.bf16.mxu0 0
        %408 = vmatpush1.bf16.msra.mxu0 0
        %409 = vmatprep.subr.bf16.mxu0 0
        %410 = vmatpush1.bf16.msra.mxu0 %v393
        %411 = vmatprep.subr.bf16.mxu0 0
        %412 = vmatpush2.bf16.msra.mxu0 0
        %413 = vmatprep.subr.bf16.mxu0 0
        %414 = vmatpush2.bf16.msra.mxu0 0
        %415 = vmatprep.subr.bf16.mxu0 0
        %416 = vmatpush2.bf16.msra.mxu0 0
        %417 = vmatprep.subr.bf16.mxu0 0
        %418 = vmatpush2.bf16.msra.mxu0 0
        %419 = vmatprep.subr.bf16.mxu0 0
        %420 = vmatpush2.bf16.msra.mxu0 0
        %421 = vmatprep.subr.bf16.mxu0 0
        %422 = vmatpush2.bf16.msra.mxu0 0
        %423 = vmatprep.subr.bf16.mxu0 0
        %424 = vmatpush2.bf16.msra.mxu0 0
        %425 = vmatprep.subr.bf16.mxu0 0
        %426 = vmatpush2.bf16.msra.mxu0 0
        %427 = vmatprep.mubr.bf16.mxu0 0
        %428 = vmatmul.mubr.bf16.gmra.mxu0 %v389
        %v429 = vpop.f32.mrf.mxu0
        %v430 = vadd.f32 0.0, %v429
        %v431 = vpop.f32.mrf.mxu0
        %v432 = vpop.f32.mrf.mxu0
        %v433 = vpop.f32.mrf.mxu0
        %434 = vdwg.mxu0
        %v436 = vsel %vm387, %v318, 0
        %v439 = vsel %vm391, %v317, 0
        %441 = vmatprep.subr.bf16.mxu0 0
        %442 = vmatpush1.bf16.msra.mxu0 0
        %443 = vmatprep.subr.bf16.mxu0 0
        %444 = vmatpush1.bf16.msra.mxu0 0
        %445 = vmatprep.subr.bf16.mxu0 0
        %446 = vmatpush1.bf16.msra.mxu0 0
        %447 = vmatprep.subr.bf16.mxu0 0
        %448 = vmatpush1.bf16.msra.mxu0 0
        %449 = vmatprep.subr.bf16.mxu0 0
        %450 = vmatpush1.bf16.msra.mxu0 0
        %451 = vmatprep.subr.bf16.mxu0 0
        %452 = vmatpush1.bf16.msra.mxu0 0
        %453 = vmatprep.subr.bf16.mxu0 0
        %454 = vmatpush1.bf16.msra.mxu0 0
        %455 = vmatprep.subr.bf16.mxu0 0
        %456 = vmatpush1.bf16.msra.mxu0 %v439
        %457 = vmatprep.subr.bf16.mxu0 0
        %458 = vmatpush2.bf16.msra.mxu0 0
        %459 = vmatprep.subr.bf16.mxu0 0
        %460 = vmatpush2.bf16.msra.mxu0 0
        %461 = vmatprep.subr.bf16.mxu0 0
        %462 = vmatpush2.bf16.msra.mxu0 0
        %463 = vmatprep.subr.bf16.mxu0 0
        %464 = vmatpush2.bf16.msra.mxu0 0
        %465 = vmatprep.subr.bf16.mxu0 0
        %466 = vmatpush2.bf16.msra.mxu0 0
        %467 = vmatprep.subr.bf16.mxu0 0
        %468 = vmatpush2.bf16.msra.mxu0 0
        %469 = vmatprep.subr.bf16.mxu0 0
        %470 = vmatpush2.bf16.msra.mxu0 0
        %471 = vmatprep.subr.bf16.mxu0 0
        %472 = vmatpush2.bf16.msra.mxu0 0
        %473 = vmatprep.mubr.bf16.mxu0 0
        %474 = vmatmul.mubr.bf16.gmra.mxu0 %v436
        %v475 = vpop.f32.mrf.mxu0
        %v476 = vadd.f32 %v430, %v475
        %v477 = vpop.f32.mrf.mxu0
        %v478 = vpop.f32.mrf.mxu0
        %v479 = vpop.f32.mrf.mxu0
        %480 = vdwg.mxu0
        %s481 = scalar_lea.vmem %s243, 2
        %v482 = vld [vmem:[%s481] ss:$3 sm:$0xf]
        %s483 = scalar_lea.vmem %s243, 18
        %v484 = vld [vmem:[%s483] ss:$3 sm:$0xf]
        %s485 = scalar_lea.vmem %s243, 34
        %v486 = vld [vmem:[%s485] ss:$3 sm:$0xf]
        %s487 = scalar_lea.vmem %s243, 50
        %v488 = vld [vmem:[%s487] ss:$3 sm:$0xf]
        %v489 = vmul.f32 %v482, 0.2
        %v490 = vmul.f32 %v484, 0.2
        %v491 = vmul.f32 %v486, 0.2
        %v492 = vmul.f32 %v488, 0.2
        %v493 = vmax.f32 %v482, %v489
        %v494 = vmax.f32 %v484, %v490
        %v495 = vmax.f32 %v486, %v491
        %v496 = vmax.f32 %v488, %v492
        %v497 = vcombine.low %v493, %v495
        %v499 = vunpack.c.l.s4 1983009808
        %v500 = vunpack.c.0.s8 %v499
        %v501 = vlaneseq
        %v502 = vshrl.u32 %v501, 7
        %v503 = vsub.s32 %v500, %v502
        %v504 = vrot.slane %v497, %v503
        %v505 = vcombine.low %v494, %v496
        %v507 = vunpack.c.l.s4 1983009808
        %v508 = vunpack.c.0.s8 %v507
        %v509 = vlaneseq
        %v510 = vshrl.u32 %v509, 7
        %v511 = vsub.s32 %v508, %v510
        %v512 = vrot.slane %v505, %v511
        %v513 = vcombine.low %v504, %v512
        %v514 = vcombine.high %v504, %v512
        %v516 = vunpack.c.l.s4 1934713408
        %v517 = vunpack.c.0.s8 %v516
        %v518 = vlaneseq
        %v519 = vshrl.u32 %v518, 7
        %v520 = vsub.s32 %v517, %v519
        %v521 = vrot.slane %v513, %v520
        %v523 = vunpack.c.l.s4 1934713408
        %v524 = vunpack.c.0.s8 %v523
        %v525 = vlaneseq
        %v526 = vshrl.u32 %v525, 7
        %v527 = vsub.s32 %v524, %v526
        %v528 = vrot.slane %v514, %v527
        %v529 = vcombine.high %v521, 0.0
        %v530 = vcombine.high %v528, 0.0
        %532 = vrot.lane.b32.xlu0 %v529, 10
        %v533 = vpop.permute.xlu0 %532
        %536 = vrot.lane.b32.xlu0 %v528, 20
        %v537 = vpop.permute.xlu0 %536
        %540 = vrot.lane.b32.xlu0 %v530, 30
        %v541 = vpop.permute.xlu0 %540
        %v543 = vsel %vm311, %v521, %v533
        %v544 = vsel %vm313, %v543, %v537
        %v545 = vsel %vm315, %v544, %v541
        %v546 = vpack.c.bf16 %v545, %v545
        %s547 = scalar_lea.vmem %s234, 8
        %v548 = vld [vmem:[%s547] sm:$0xf]
        %v550 = vsel %vm387, %v548, 0
        %v553 = vsel %vm391, %v546, 0
        %555 = vmatprep.subr.bf16.mxu0 0
        %556 = vmatpush1.bf16.msra.mxu0 0
        %557 = vmatprep.subr.bf16.mxu0 0
        %558 = vmatpush1.bf16.msra.mxu0 0
        %559 = vmatprep.subr.bf16.mxu0 0
        %560 = vmatpush1.bf16.msra.mxu0 0
        %561 = vmatprep.subr.bf16.mxu0 0
        %562 = vmatpush1.bf16.msra.mxu0 0
        %563 = vmatprep.subr.bf16.mxu0 0
        %564 = vmatpush1.bf16.msra.mxu0 0
        %565 = vmatprep.subr.bf16.mxu0 0
        %566 = vmatpush1.bf16.msra.mxu0 0
        %567 = vmatprep.subr.bf16.mxu0 0
        %568 = vmatpush1.bf16.msra.mxu0 0
        %569 = vmatprep.subr.bf16.mxu0 0
        %570 = vmatpush1.bf16.msra.mxu0 %v553
        %571 = vmatprep.subr.bf16.mxu0 0
        %572 = vmatpush2.bf16.msra.mxu0 0
        %573 = vmatprep.subr.bf16.mxu0 0
        %574 = vmatpush2.bf16.msra.mxu0 0
        %575 = vmatprep.subr.bf16.mxu0 0
        %576 = vmatpush2.bf16.msra.mxu0 0
        %577 = vmatprep.subr.bf16.mxu0 0
        %578 = vmatpush2.bf16.msra.mxu0 0
        %579 = vmatprep.subr.bf16.mxu0 0
        %580 = vmatpush2.bf16.msra.mxu0 0
        %581 = vmatprep.subr.bf16.mxu0 0
        %582 = vmatpush2.bf16.msra.mxu0 0
        %583 = vmatprep.subr.bf16.mxu0 0
        %584 = vmatpush2.bf16.msra.mxu0 0
        %585 = vmatprep.subr.bf16.mxu0 0
        %586 = vmatpush2.bf16.msra.mxu0 0
        %587 = vmatprep.mubr.bf16.mxu0 0
        %588 = vmatmul.mubr.bf16.gmra.mxu0 %v550
        %v589 = vpop.f32.mrf.mxu0
        %v590 = vadd.f32 0.0, %v589
        %v591 = vpop.f32.mrf.mxu0
        %v592 = vpop.f32.mrf.mxu0
        %v593 = vpop.f32.mrf.mxu0
        %594 = vdwg.mxu0
        %v595 = vadd.f32 %v476, %v590
        %s596 = scalar_lea.vmem %s243, 3
        %v597 = vld [vmem:[%s596] ss:$3 sm:$0xf]
        %s598 = scalar_lea.vmem %s243, 19
        %v599 = vld [vmem:[%s598] ss:$3 sm:$0xf]
        %s600 = scalar_lea.vmem %s243, 35
        %v601 = vld [vmem:[%s600] ss:$3 sm:$0xf]
        %s602 = scalar_lea.vmem %s243, 51
        %v603 = vld [vmem:[%s602] ss:$3 sm:$0xf]
        %v604 = vmul.f32 %v597, 0.2
        %v605 = vmul.f32 %v599, 0.2
        %v606 = vmul.f32 %v601, 0.2
        %v607 = vmul.f32 %v603, 0.2
        %v608 = vmax.f32 %v597, %v604
        %v609 = vmax.f32 %v599, %v605
        %v610 = vmax.f32 %v601, %v606
        %v611 = vmax.f32 %v603, %v607
        %v612 = vcombine.low %v608, %v610
        %v614 = vunpack.c.l.s4 1983009808
        %v615 = vunpack.c.0.s8 %v614
        %v616 = vlaneseq
        %v617 = vshrl.u32 %v616, 7
        %v618 = vsub.s32 %v615, %v617
        %v619 = vrot.slane %v612, %v618
        %v620 = vcombine.low %v609, %v611
        %v622 = vunpack.c.l.s4 1983009808
        %v623 = vunpack.c.0.s8 %v622
        %v624 = vlaneseq
        %v625 = vshrl.u32 %v624, 7
        %v626 = vsub.s32 %v623, %v625
        %v627 = vrot.slane %v620, %v626
        %v628 = vcombine.low %v619, %v627
        %v629 = vcombine.high %v619, %v627
        %v631 = vunpack.c.l.s4 1934713408
        %v632 = vunpack.c.0.s8 %v631
        %v633 = vlaneseq
        %v634 = vshrl.u32 %v633, 7
        %v635 = vsub.s32 %v632, %v634
        %v636 = vrot.slane %v628, %v635
        %v638 = vunpack.c.l.s4 1934713408
        %v639 = vunpack.c.0.s8 %v638
        %v640 = vlaneseq
        %v641 = vshrl.u32 %v640, 7
        %v642 = vsub.s32 %v639, %v641
        %v643 = vrot.slane %v629, %v642
        %v644 = vcombine.high %v636, 0.0
        %v645 = vcombine.high %v643, 0.0
        %647 = vrot.lane.b32.xlu0 %v644, 10
        %v648 = vpop.permute.xlu0 %647
        %651 = vrot.lane.b32.xlu0 %v643, 20
        %v652 = vpop.permute.xlu0 %651
        %655 = vrot.lane.b32.xlu0 %v645, 30
        %v656 = vpop.permute.xlu0 %655
        %v658 = vsel %vm311, %v636, %v648
        %v659 = vsel %vm313, %v658, %v652
        %v660 = vsel %vm315, %v659, %v656
        %v661 = vpack.c.bf16 %v660, %v660
        %s662 = scalar_lea.vmem %s234, 12
        %v663 = vld [vmem:[%s662] sm:$0xf]
        %v665 = vsel %vm387, %v663, 0
        %v668 = vsel %vm391, %v661, 0
        %670 = vmatprep.subr.bf16.mxu0 0
        %671 = vmatpush1.bf16.msra.mxu0 0
        %672 = vmatprep.subr.bf16.mxu0 0
        %673 = vmatpush1.bf16.msra.mxu0 0
        %674 = vmatprep.subr.bf16.mxu0 0
        %675 = vmatpush1.bf16.msra.mxu0 0
        %676 = vmatprep.subr.bf16.mxu0 0
        %677 = vmatpush1.bf16.msra.mxu0 0
        %678 = vmatprep.subr.bf16.mxu0 0
        %679 = vmatpush1.bf16.msra.mxu0 0
        %680 = vmatprep.subr.bf16.mxu0 0
        %681 = vmatpush1.bf16.msra.mxu0 0
        %682 = vmatprep.subr.bf16.mxu0 0
        %683 = vmatpush1.bf16.msra.mxu0 0
        %684 = vmatprep.subr.bf16.mxu0 0
        %685 = vmatpush1.bf16.msra.mxu0 %v668
        %686 = vmatprep.subr.bf16.mxu0 0
        %687 = vmatpush2.bf16.msra.mxu0 0
        %688 = vmatprep.subr.bf16.mxu0 0
        %689 = vmatpush2.bf16.msra.mxu0 0
        %690 = vmatprep.subr.bf16.mxu0 0
        %691 = vmatpush2.bf16.msra.mxu0 0
        %692 = vmatprep.subr.bf16.mxu0 0
        %693 = vmatpush2.bf16.msra.mxu0 0
        %694 = vmatprep.subr.bf16.mxu0 0
        %695 = vmatpush2.bf16.msra.mxu0 0
        %696 = vmatprep.subr.bf16.mxu0 0
        %697 = vmatpush2.bf16.msra.mxu0 0
        %698 = vmatprep.subr.bf16.mxu0 0
        %699 = vmatpush2.bf16.msra.mxu0 0
        %700 = vmatprep.subr.bf16.mxu0 0
        %701 = vmatpush2.bf16.msra.mxu0 0
        %702 = vmatprep.mubr.bf16.mxu0 0
        %703 = vmatmul.mubr.bf16.gmra.mxu0 %v665
        %v704 = vpop.f32.mrf.mxu0
        %v705 = vadd.f32 0.0, %v704
        %v706 = vpop.f32.mrf.mxu0
        %v707 = vpop.f32.mrf.mxu0
        %v708 = vpop.f32.mrf.mxu0
        %709 = vdwg.mxu0
        %v710 = vadd.f32 %v595, %v705
        %s711 = scalar_lea.vmem %s243, 4
        %v712 = vld [vmem:[%s711] ss:$3 sm:$0xf]
        %s713 = scalar_lea.vmem %s243, 20
        %v714 = vld [vmem:[%s713] ss:$3 sm:$0xf]
        %s715 = scalar_lea.vmem %s243, 36
        %v716 = vld [vmem:[%s715] ss:$3 sm:$0xf]
        %s717 = scalar_lea.vmem %s243, 52
        %v718 = vld [vmem:[%s717] ss:$3 sm:$0xf]
        %v719 = vmul.f32 %v712, 0.2
        %v720 = vmul.f32 %v714, 0.2
        %v721 = vmul.f32 %v716, 0.2
        %v722 = vmul.f32 %v718, 0.2
        %v723 = vmax.f32 %v712, %v719
        %v724 = vmax.f32 %v714, %v720
        %v725 = vmax.f32 %v716, %v721
        %v726 = vmax.f32 %v718, %v722
        %v727 = vcombine.low %v723, %v725
        %v729 = vunpack.c.l.s4 1983009808
        %v730 = vunpack.c.0.s8 %v729
        %v731 = vlaneseq
        %v732 = vshrl.u32 %v731, 7
        %v733 = vsub.s32 %v730, %v732
        %v734 = vrot.slane %v727, %v733
        %v735 = vcombine.low %v724, %v726
        %v737 = vunpack.c.l.s4 1983009808
        %v738 = vunpack.c.0.s8 %v737
        %v739 = vlaneseq
        %v740 = vshrl.u32 %v739, 7
        %v741 = vsub.s32 %v738, %v740
        %v742 = vrot.slane %v735, %v741
        %v743 = vcombine.low %v734, %v742
        %v744 = vcombine.high %v734, %v742
        %v746 = vunpack.c.l.s4 1934713408
        %v747 = vunpack.c.0.s8 %v746
        %v748 = vlaneseq
        %v749 = vshrl.u32 %v748, 7
        %v750 = vsub.s32 %v747, %v749
        %v751 = vrot.slane %v743, %v750
        %v753 = vunpack.c.l.s4 1934713408
        %v754 = vunpack.c.0.s8 %v753
        %v755 = vlaneseq
        %v756 = vshrl.u32 %v755, 7
        %v757 = vsub.s32 %v754, %v756
        %v758 = vrot.slane %v744, %v757
        %v759 = vcombine.high %v751, 0.0
        %v760 = vcombine.high %v758, 0.0
        %762 = vrot.lane.b32.xlu0 %v759, 10
        %v763 = vpop.permute.xlu0 %762
        %766 = vrot.lane.b32.xlu0 %v758, 20
        %v767 = vpop.permute.xlu0 %766
        %770 = vrot.lane.b32.xlu0 %v760, 30
        %v771 = vpop.permute.xlu0 %770
        %v773 = vsel %vm311, %v751, %v763
        %v774 = vsel %vm313, %v773, %v767
        %v775 = vsel %vm315, %v774, %v771
        %v776 = vpack.c.bf16 %v775, %v775
        %s777 = scalar_lea.vmem %s234, 16
        %v778 = vld [vmem:[%s777] sm:$0xf]
        %v780 = vsel %vm387, %v778, 0
        %v783 = vsel %vm391, %v776, 0
        %785 = vmatprep.subr.bf16.mxu0 0
        %786 = vmatpush1.bf16.msra.mxu0 0
        %787 = vmatprep.subr.bf16.mxu0 0
        %788 = vmatpush1.bf16.msra.mxu0 0
        %789 = vmatprep.subr.bf16.mxu0 0
        %790 = vmatpush1.bf16.msra.mxu0 0
        %791 = vmatprep.subr.bf16.mxu0 0
        %792 = vmatpush1.bf16.msra.mxu0 0
        %793 = vmatprep.subr.bf16.mxu0 0
        %794 = vmatpush1.bf16.msra.mxu0 0
        %795 = vmatprep.subr.bf16.mxu0 0
        %796 = vmatpush1.bf16.msra.mxu0 0
        %797 = vmatprep.subr.bf16.mxu0 0
        %798 = vmatpush1.bf16.msra.mxu0 0
        %799 = vmatprep.subr.bf16.mxu0 0
        %800 = vmatpush1.bf16.msra.mxu0 %v783
        %801 = vmatprep.subr.bf16.mxu0 0
        %802 = vmatpush2.bf16.msra.mxu0 0
        %803 = vmatprep.subr.bf16.mxu0 0
        %804 = vmatpush2.bf16.msra.mxu0 0
        %805 = vmatprep.subr.bf16.mxu0 0
        %806 = vmatpush2.bf16.msra.mxu0 0
        %807 = vmatprep.subr.bf16.mxu0 0
        %808 = vmatpush2.bf16.msra.mxu0 0
        %809 = vmatprep.subr.bf16.mxu0 0
        %810 = vmatpush2.bf16.msra.mxu0 0
        %811 = vmatprep.subr.bf16.mxu0 0
        %812 = vmatpush2.bf16.msra.mxu0 0
        %813 = vmatprep.subr.bf16.mxu0 0
        %814 = vmatpush2.bf16.msra.mxu0 0
        %815 = vmatprep.subr.bf16.mxu0 0
        %816 = vmatpush2.bf16.msra.mxu0 0
        %817 = vmatprep.mubr.bf16.mxu0 0
        %818 = vmatmul.mubr.bf16.gmra.mxu0 %v780
        %v819 = vpop.f32.mrf.mxu0
        %v820 = vadd.f32 0.0, %v819
        %v821 = vpop.f32.mrf.mxu0
        %v822 = vpop.f32.mrf.mxu0
        %v823 = vpop.f32.mrf.mxu0
        %824 = vdwg.mxu0
        %v825 = vadd.f32 %v710, %v820
        %v826 = vld [vmem:[%s238] sm:$0xff]
        %828 = vset.pattern.permute.xlu0 0
        %829 = vperm.xlu0 %828, %v826
        %v830 = vpop.permute.xlu0 %829
        %v832 = vadd.f32 %v825, %v830
        %s833 = sld [smem:[#allocation2 + %s16]]
        %v834 = vlaneseq
        %v835 = vand.u32 %v834, 127
        %s836 = smul.u32 %s833, 10
        %v837 = vstv %s836
        %vm838 = vcmp.lt.s32.totalorder %v835, %v837
        %v839 = vsel %vm838, 1, 0
        %vm840 = vcmp.eq.s32.totalorder %v839, 1
        %v841 = vsel %vm840, %v832, 0.0
        %vm842 = vcmask 74752
        %843 = vst.msk [vmem:[%s248] sm:$0x3] %vm842, 0.0
        %844 = vst.msk [vmem:[%s248 + $0x8] sm:$0x3] %vm842, 0.0
        %845 = vst.msk [vmem:[%s248 + $0x10] sm:$0x3] %vm842, 0.0
        %846 = vst.msk [vmem:[%s248 + $0x18] sm:$0x3] %vm842, 0.0
        %847 = vst.msk [vmem:[%s248 + $0x20] sm:$0x3] %vm842, 0.0
        %848 = vst.msk [vmem:[%s248 + $0x28] sm:$0x3] %vm842, 0.0
        %849 = vst.msk [vmem:[%s248 + $0x30] sm:$0x3] %vm842, 0.0
        %850 = vst.msk [vmem:[%s248 + $0x38] sm:$0x3] %vm842, 0.0
        %852 = vrot.lane.b32.xlu0 %v841, 118
        %v853 = vpop.permute.xlu0 %852
        %855 = vrot.lane.b32.xlu0 %v841, 108
        %v856 = vpop.permute.xlu0 %855
        %858 = vrot.lane.b32.xlu0 %v841, 98
        %v859 = vpop.permute.xlu0 %858
        %v861 = vcombine.low %v841, %v856
        %v862 = vcombine.high %v841, %v856
        %v864 = vunpack.c.l.s4 1983009808
        %v865 = vunpack.c.0.s8 %v864
        %v866 = vlaneseq
        %v867 = vshrl.u32 %v866, 7
        %v868 = vsub.s32 %v865, %v867
        %v869 = vrot.slane %v861, %v868
        %v871 = vunpack.c.l.s4 1983009808
        %v872 = vunpack.c.0.s8 %v871
        %v873 = vlaneseq
        %v874 = vshrl.u32 %v873, 7
        %v875 = vsub.s32 %v872, %v874
        %v876 = vrot.slane %v862, %v875
        %v877 = vcombine.low %v853, %v859
        %v878 = vcombine.high %v853, %v859
        %v880 = vunpack.c.l.s4 1983009808
        %v881 = vunpack.c.0.s8 %v880
        %v882 = vlaneseq
        %v883 = vshrl.u32 %v882, 7
        %v884 = vsub.s32 %v881, %v883
        %v885 = vrot.slane %v877, %v884
        %v887 = vunpack.c.l.s4 1983009808
        %v888 = vunpack.c.0.s8 %v887
        %v889 = vlaneseq
        %v890 = vshrl.u32 %v889, 7
        %v891 = vsub.s32 %v888, %v890
        %v892 = vrot.slane %v878, %v891
        %v893 = vcombine.low %v869, %v885
        %v894 = vcombine.high %v869, %v885
        %v896 = vunpack.c.l.s4 1934713408
        %v897 = vunpack.c.0.s8 %v896
        %v898 = vlaneseq
        %v899 = vshrl.u32 %v898, 7
        %v900 = vsub.s32 %v897, %v899
        %v901 = vrot.slane %v893, %v900
        %v903 = vunpack.c.l.s4 1934713408
        %v904 = vunpack.c.0.s8 %v903
        %v905 = vlaneseq
        %v906 = vshrl.u32 %v905, 7
        %v907 = vsub.s32 %v904, %v906
        %v908 = vrot.slane %v894, %v907
        %v909 = vcombine.low %v876, %v892
        %v910 = vcombine.high %v876, %v892
        %v912 = vunpack.c.l.s4 1934713408
        %v913 = vunpack.c.0.s8 %v912
        %v914 = vlaneseq
        %v915 = vshrl.u32 %v914, 7
        %v916 = vsub.s32 %v913, %v915
        %v917 = vrot.slane %v909, %v916
        %v919 = vunpack.c.l.s4 1934713408
        %v920 = vunpack.c.0.s8 %v919
        %v921 = vlaneseq
        %v922 = vshrl.u32 %v921, 7
        %v923 = vsub.s32 %v920, %v922
        %v924 = vrot.slane %v910, %v923
        %v925 = vcombine.high %v901, 0.0
        %v926 = vcombine.high %v908, 0.0
        %v927 = vcombine.high %v917, 0.0
        %v928 = vcombine.high %v924, 0.0
        %vm929 = vcmask 76800
        %930 = vst.msk [vmem:[%s248 + $0x2] sm:$0xf] %vm929, %v901
        %931 = vst.msk [vmem:[%s248 + $0xa] sm:$0xf] %vm929, %v925
        %932 = vst.msk [vmem:[%s248 + $0x12] sm:$0xf] %vm929, %v908
        %933 = vst.msk [vmem:[%s248 + $0x1a] sm:$0xf] %vm929, %v926
        %934 = vst.msk [vmem:[%s248 + $0x22] sm:$0xf] %vm929, %v917
        %935 = vst.msk [vmem:[%s248 + $0x2a] sm:$0xf] %vm929, %v927
        %936 = vst.msk [vmem:[%s248 + $0x32] sm:$0xf] %vm929, %v924
        %937 = vst.msk [vmem:[%s248 + $0x3a] sm:$0xf] %vm929, %v928
        %938 = vst.msk [vmem:[%s248 + $0x6] sm:$0x3] %vm842, 0.0
        %939 = vst.msk [vmem:[%s248 + $0xe] sm:$0x3] %vm842, 0.0
        %940 = vst.msk [vmem:[%s248 + $0x16] sm:$0x3] %vm842, 0.0
        %941 = vst.msk [vmem:[%s248 + $0x1e] sm:$0x3] %vm842, 0.0
        %942 = vst.msk [vmem:[%s248 + $0x26] sm:$0x3] %vm842, 0.0
        %943 = vst.msk [vmem:[%s248 + $0x2e] sm:$0x3] %vm842, 0.0
        %944 = vst.msk [vmem:[%s248 + $0x36] sm:$0x3] %vm842, 0.0
        %945 = vst.msk [vmem:[%s248 + $0x3e] sm:$0x3] %vm842, 0.0
        %p946 = scmp.lt.s32.totalorder %s16, 2
        %s947 = scalar_select %p946, %s16, 2
        %s948 = smul.addr %s947, 8
        %s949 = smul.addr %s948, 8
        %s950 = scalar_lea.vmem %s4, %s949
        // Predicated region
        $region41: #{multi_period_discriminator.5} parent=35 // pred_check
          %p951 = pneg %p133
        $region42: #{multi_period_discriminator.5} parent=35 // pred_check_branch
          %953 = sbr.rel (%p951) target = $region44
        $region43: #{multi_period_discriminator.5} parent=35 // pred_region
          _
        $region44: #{multi_period_discriminator.5} parent=35 // pred_fallthru
          _
      $region36: #{multi_period_discriminator.5} parent=5 // pred_fallthru
        _
      %p954 = scmp.le.s32.totalorder 2, %s11
      // Predicated region
      $region45: #{multi_period_discriminator.5} parent=5 // pred_check
        %p955 = pneg %p954
      $region46: #{multi_period_discriminator.5} parent=5 // pred_check_branch
        %957 = sbr.rel (%p955) target = $region48
      $region47: #{multi_period_discriminator.5} parent=5 // pred_region
        %s958 = ssub.s32 %s11, 2
        // Predicated region
        $region49: #{multi_period_discriminator.5} parent=47 // pred_check
          %p959 = pneg %p139
        $region50: #{multi_period_discriminator.5} parent=47 // pred_check_branch
          %961 = sbr.rel (%p959) target = $region52
        $region51: #{multi_period_discriminator.5} parent=47 // pred_region
          %p962 = scmp.lt.s32.totalorder %s17, 2
          %s963 = scalar_select %p962, %s17, 2
          %s964 = smul.addr %s963, 8
          %s965 = smul.addr %s964, 8
          %s966 = scalar_lea.vmem %s4, %s965
        $region52: #{multi_period_discriminator.5} parent=47 // pred_fallthru
          _
      $region48: #{multi_period_discriminator.5} parent=5 // pred_fallthru
        _
    $region6: #{multi_period_discriminator.5} parent=1 // loop_footer
      %s15 = sadd.s32 1, %s11
    $region7: #{multi_period_discriminator.5} parent=1 // loop_footer_branch
      %10 = sbr.rel target = $region3
    $region8: #{multi_period_discriminator.5} parent=1 // loop_exit
      _
    %967 = vsyncpa [#allocation3], 1
    %s968 = scalar_lea.sflag [#allocation3], 1
    %969 = vsyncpa %s968, 1

// kernel: multi_period_discriminator.7
$region0: #{multi_period_discriminator.7}
  #allocation0 [shape = 'u32[]', space=smem, size = 0x4, offset = 0x4, fixed_abs, tag = 'smem constant byte address 0x4 - core index']
  #allocation1 [shape = 'u32[144,128]{1,0:T(1,128)}', space=vmem, size = 0x12000, scoped, tag = 'internal scratch']
  %s0 = inlined_call_operand.vmem [shape: s32[3], index: 0, kind: input, shape index: {}]
  %s1 = inlined_call_operand.vmem [shape: bf16[3,1,1,16], index: 1, kind: input, shape index: {}]
  %s2 = inlined_call_operand.vmem [shape: f32[3,1,1], index: 2, kind: input, shape index: {}]
  %s3 = inlined_call_operand.vmem [shape: f32[3,16,2,10], index: 3, kind: input, shape index: {}]
  %s4 = inlined_call_operand.vmem [shape: f32[3,1,2,10], index: 4, kind: output, shape index: {}]
  %s5 = sld [smem:[#allocation0]]
  $region53: #{multi_period_discriminator.7} parent=0
    _
  %s7 = ssub.s32 1, %s5
  %s8 = scalar_select 0, %s7, %s5
  $region1: #{multi_period_discriminator.7} parent=0
    #allocation2 [shape = 'u8[512]{0}', space=smem, size = 0x200, scoped, tag = 'input window, operand 0, single buffered']
    #allocation3 [shape = 's32[2]{0}', space=sflag, size = 0x8, scoped, tag = 'scoped memory for multi_period_discriminator.7']
    %9 = vsyncpa [#allocation3], 0
    loop: start=0, step=1, limit=5
    $region2: #{multi_period_discriminator.7} parent=1 // loop_pre_header
      _
    $region3: #{multi_period_discriminator.7} parent=1 // loop_header
      %s11 = sphi 0, %s15
      %p12 = scmp.ge.s32.totalorder %s11, 5
      %s19 = sphi 0, %s19
      %s21 = sphi 0, %s19
      %s22 = sphi 0, %s21
      %s36 = sphi 0, %s22
      %s42 = sphi 0, %s44
      %s45 = sphi 0, %s42
      %s46 = sphi 0, %s45
      %s62 = sphi 0, %s46
      %s68 = sphi 0, %s70
      %s71 = sphi 0, %s68
      %s72 = sphi 0, %s71
      %s88 = sphi 0, %s72
      %s94 = sphi 0, %s96
      %s97 = sphi 0, %s94
      %s98 = sphi 0, %s97
      %s114 = sphi 0, %s98
      %s120 = sphi 0, %s122
      %s123 = sphi 0, %s120
      %s124 = sphi 0, %s123
      %s140 = sphi 0, %s124
    $region4: #{multi_period_discriminator.7} parent=1 // loop_header_branch
      %14 = sbr.rel (%p12) target = $region8
    $region5: #{multi_period_discriminator.7} parent=1 // loop_body
      %s16 = ssub.s32 %s11, 1
      %s17 = ssub.s32 %s11, 2
      %s18 = sadd.s32 %s11, 1
      %s20 = sadd.s32 %s19, 1
      %p23 = scmp.eq.s32.totalorder %s11, 2
      %p24 = scmp.ne.s32.totalorder %s19, %s21
      %p25 = scmp.eq.s32.totalorder %s11, 0
      %p26 = por %p24, %p25
      %p27 = scmp.ne.s32.totalorder %s19, %s21
      %p28 = scmp.eq.s32.totalorder %s16, 2
      %p29 = por %p27, %p28
      %p30 = scmp.ne.s32.totalorder %s21, %s22
      %p31 = scmp.eq.s32.totalorder %s16, 0
      %p32 = por %p30, %p31
      %p33 = scmp.ne.s32.totalorder %s21, %s22
      %p34 = scmp.eq.s32.totalorder %s17, 2
      %p35 = por %p33, %p34
      %p37 = scmp.ne.s32.totalorder %s22, %s36
      %p38 = scmp.eq.s32.totalorder %s17, 0
      %p39 = por %p37, %p38
      %s40 = ssub.s32 %s11, %s18
      %p41 = scmp.eq.s32.totalorder %s40, 0
      %s43 = sadd.s32 %s42, 1
      %s44 = scalar_select %p41, %s42, %s43
      %p47 = pneg %p41
      %p48 = scmp.eq.s32.totalorder %s11, 2
      %p49 = por %p47, %p48
      %p50 = scmp.ne.s32.totalorder %s42, %s45
      %p51 = scmp.eq.s32.totalorder %s11, 0
      %p52 = por %p50, %p51
      %p53 = scmp.ne.s32.totalorder %s42, %s45
      %p54 = scmp.eq.s32.totalorder %s16, 2
      %p55 = por %p53, %p54
      %p56 = scmp.ne.s32.totalorder %s45, %s46
      %p57 = scmp.eq.s32.totalorder %s16, 0
      %p58 = por %p56, %p57
      %p59 = scmp.ne.s32.totalorder %s45, %s46
      %p60 = scmp.eq.s32.totalorder %s17, 2
      %p61 = por %p59, %p60
      %p63 = scmp.ne.s32.totalorder %s46, %s62
      %p64 = scmp.eq.s32.totalorder %s17, 0
      %p65 = por %p63, %p64
      %s66 = ssub.s32 %s11, %s18
      %p67 = scmp.eq.s32.totalorder %s66, 0
      %s69 = sadd.s32 %s68, 1
      %s70 = scalar_select %p67, %s68, %s69
      %p73 = pneg %p67
      %p74 = scmp.eq.s32.totalorder %s11, 2
      %p75 = por %p73, %p74
      %p76 = scmp.ne.s32.totalorder %s68, %s71
      %p77 = scmp.eq.s32.totalorder %s11, 0
      %p78 = por %p76, %p77
      %p79 = scmp.ne.s32.totalorder %s68, %s71
      %p80 = scmp.eq.s32.totalorder %s16, 2
      %p81 = por %p79, %p80
      %p82 = scmp.ne.s32.totalorder %s71, %s72
      %p83 = scmp.eq.s32.totalorder %s16, 0
      %p84 = por %p82, %p83
      %p85 = scmp.ne.s32.totalorder %s71, %s72
      %p86 = scmp.eq.s32.totalorder %s17, 2
      %p87 = por %p85, %p86
      %p89 = scmp.ne.s32.totalorder %s72, %s88
      %p90 = scmp.eq.s32.totalorder %s17, 0
      %p91 = por %p89, %p90
      %s92 = ssub.s32 %s11, %s18
      %p93 = scmp.eq.s32.totalorder %s92, 0
      %s95 = sadd.s32 %s94, 1
      %s96 = scalar_select %p93, %s94, %s95
      %p99 = pneg %p93
      %p100 = scmp.eq.s32.totalorder %s11, 2
      %p101 = por %p99, %p100
      %p102 = scmp.ne.s32.totalorder %s94, %s97
      %p103 = scmp.eq.s32.totalorder %s11, 0
      %p104 = por %p102, %p103
      %p105 = scmp.ne.s32.totalorder %s94, %s97
      %p106 = scmp.eq.s32.totalorder %s16, 2
      %p107 = por %p105, %p106
      %p108 = scmp.ne.s32.totalorder %s97, %s98
      %p109 = scmp.eq.s32.totalorder %s16, 0
      %p110 = por %p108, %p109
      %p111 = scmp.ne.s32.totalorder %s97, %s98
      %p112 = scmp.eq.s32.totalorder %s17, 2
      %p113 = por %p111, %p112
      %p115 = scmp.ne.s32.totalorder %s98, %s114
      %p116 = scmp.eq.s32.totalorder %s17, 0
      %p117 = por %p115, %p116
      %s118 = ssub.s32 %s11, %s18
      %p119 = scmp.eq.s32.totalorder %s118, 0
      %s121 = sadd.s32 %s120, 1
      %s122 = scalar_select %p119, %s120, %s121
      %p125 = pneg %p119
      %p126 = scmp.eq.s32.totalorder %s11, 2
      %p127 = por %p125, %p126
      %p128 = scmp.ne.s32.totalorder %s120, %s123
      %p129 = scmp.eq.s32.totalorder %s11, 0
      %p130 = por %p128, %p129
      %p131 = scmp.ne.s32.totalorder %s120, %s123
      %p132 = scmp.eq.s32.totalorder %s16, 2
      %p133 = por %p131, %p132
      %p134 = scmp.ne.s32.totalorder %s123, %s124
      %p135 = scmp.eq.s32.totalorder %s16, 0
      %p136 = por %p134, %p135
      %p137 = scmp.ne.s32.totalorder %s123, %s124
      %p138 = scmp.eq.s32.totalorder %s17, 2
      %p139 = por %p137, %p138
      %p141 = scmp.ne.s32.totalorder %s124, %s140
      %p142 = scmp.eq.s32.totalorder %s17, 0
      %p143 = por %p141, %p142
      %p144 = scmp.le.s32.totalorder 1, %s11
      %p145 = scmp.lt.s32.totalorder %s11, 4
      %p146 = pnand %p144, %p145
      %p147 = pneg %p146
      // Predicated region
      $region9: #{multi_period_discriminator.7} parent=5 // pred_check
        _
      $region10: #{multi_period_discriminator.7} parent=5 // pred_check_branch
        %149 = sbr.rel (%p146) target = $region12
      $region11: #{multi_period_discriminator.7} parent=5 // pred_region
        %s150 = ssub.s32 %s11, 1
        // Predicated region
        $region13: #{multi_period_discriminator.7} parent=11 // pred_check
          %p151 = pneg %p32
        $region14: #{multi_period_discriminator.7} parent=11 // pred_check_branch
          %153 = sbr.rel (%p151) target = $region16
        $region15: #{multi_period_discriminator.7} parent=11 // pred_region
          %s155 = ssub.s32 16, 16
          %156 = vsyncadd [#allocation3], %s155
          %s158 = sshll.u32 %s0, 4
          %s159 = int_to_ptr.vmem [resolvable:$true] %s158
          %161 = dma.vmem_to_smem %s159, 16, [#allocation2], [#allocation3]
        $region16: #{multi_period_discriminator.7} parent=11 // pred_fallthru
          _
      $region12: #{multi_period_discriminator.7} parent=5 // pred_fallthru
        _
      %p162 = scmp.lt.s32.totalorder %s11, 3
      // Predicated region
      $region17: #{multi_period_discriminator.7} parent=5 // pred_check
        %p163 = pneg %p162
      $region18: #{multi_period_discriminator.7} parent=5 // pred_check_branch
        %165 = sbr.rel (%p163) target = $region20
      $region19: #{multi_period_discriminator.7} parent=5 // pred_region
        // Predicated region
        $region21: #{multi_period_discriminator.7} parent=19 // pred_check
          %p166 = pneg %p52
        $region22: #{multi_period_discriminator.7} parent=19 // pred_check_branch
          %168 = sbr.rel (%p166) target = $region24
        $region23: #{multi_period_discriminator.7} parent=19 // pred_region
          %p169 = scmp.lt.s32.totalorder %s11, 2
          %s170 = scalar_select %p169, %s11, 2
          %s171 = scalar_lea.vmem %s1, %s170
        $region24: #{multi_period_discriminator.7} parent=19 // pred_fallthru
          _
        // Predicated region
        $region25: #{multi_period_discriminator.7} parent=19 // pred_check
          %p172 = pneg %p78
        $region26: #{multi_period_discriminator.7} parent=19 // pred_check_branch
          %174 = sbr.rel (%p172) target = $region28
        $region27: #{multi_period_discriminator.7} parent=19 // pred_region
          %p175 = scmp.lt.s32.totalorder %s11, 2
          %s176 = scalar_select %p175, %s11, 2
          %s177 = scalar_lea.vmem %s2, %s176
        $region28: #{multi_period_discriminator.7} parent=19 // pred_fallthru
          _
        // Predicated region
        $region29: #{multi_period_discriminator.7} parent=19 // pred_check
          %p178 = pneg %p104
        $region30: #{multi_period_discriminator.7} parent=19 // pred_check_branch
          %180 = sbr.rel (%p178) target = $region32
        $region31: #{multi_period_discriminator.7} parent=19 // pred_region
          %p181 = scmp.lt.s32.totalorder %s11, 2
          %s182 = scalar_select %p181, %s11, 2
          %s183 = smul.addr %s182, 16
          %s184 = smul.addr %s183, 2
          %s185 = scalar_lea.vmem %s3, %s184
        $region32: #{multi_period_discriminator.7} parent=19 // pred_fallthru
          _
      $region20: #{multi_period_discriminator.7} parent=5 // pred_fallthru
        _
      %p186 = scmp.le.s32.totalorder 1, %s11
      %p187 = scmp.lt.s32.totalorder %s11, 4
      %p188 = pnand %p186, %p187
      %p189 = pneg %p188
      // Predicated region
      $region33: #{multi_period_discriminator.7} parent=5 // pred_check
        _
      $region34: #{multi_period_discriminator.7} parent=5 // pred_check_branch
        %191 = sbr.rel (%p188) target = $region36
      $region35: #{multi_period_discriminator.7} parent=5 // pred_region
        %s192 = ssub.s32 %s11, 1
        // Predicated region
        $region37: #{multi_period_discriminator.7} parent=35 // pred_check
          %p193 = pneg %p32
        $region38: #{multi_period_discriminator.7} parent=35 // pred_check_branch
          %195 = sbr.rel (%p193) target = $region40
        $region39: #{multi_period_discriminator.7} parent=35 // pred_region
          %196 = dma.done [#allocation3], 16
        $region40: #{multi_period_discriminator.7} parent=35 // pred_fallthru
          _
        %197 = sfence
        %p198 = pneg %p32
        %p199 = pneg %p29
        %p200 = scmp.lt.s32.totalorder %s16, 2
        %s201 = scalar_select %p200, %s16, 2
        %s202 = scalar_lea.vmem %s1, %s201
        %p203 = pneg %p58
        %p204 = pneg %p55
        %p205 = scmp.lt.s32.totalorder %s16, 2
        %s206 = scalar_select %p205, %s16, 2
        %s207 = scalar_lea.vmem %s2, %s206
        %p208 = pneg %p84
        %p209 = pneg %p81
        %p210 = scmp.lt.s32.totalorder %s16, 2
        %s211 = scalar_select %p210, %s16, 2
        %s212 = smul.addr %s211, 16
        %s213 = smul.addr %s212, 2
        %s214 = scalar_lea.vmem %s3, %s213
        %p215 = pneg %p110
        %p216 = pneg %p107
        %p217 = pneg %p136
        %p218 = pneg %p133
        %p219 = scmp.lt.s32.totalorder %s16, 2
        %s220 = scalar_select %p219, %s16, 2
        %s221 = smul.addr %s220, 2
        %s222 = scalar_lea.vmem %s4, %s221
        %p223 = scmp.lt.s32.totalorder %s16, 2
        %s224 = scalar_select %p223, %s16, 2
        %s225 = scalar_lea.vmem %s1, %s224
        %p226 = scmp.lt.s32.totalorder %s16, 2
        %s227 = scalar_select %p226, %s16, 2
        %s228 = scalar_lea.vmem %s2, %s227
        %p229 = scmp.lt.s32.totalorder %s16, 2
        %s230 = scalar_select %p229, %s16, 2
        %s231 = smul.addr %s230, 16
        %s232 = smul.addr %s231, 2
        %s233 = scalar_lea.vmem %s3, %s232
        %p234 = scmp.lt.s32.totalorder %s16, 2
        %s235 = scalar_select %p234, %s16, 2
        %s236 = smul.addr %s235, 2
        %s237 = scalar_lea.vmem %s4, %s236
        %v239 = vld [vmem:[%s233] sm:$0x3]
        %v240 = vld [vmem:[%s233 + $0x2] sm:$0x3]
        %v241 = vld [vmem:[%s233 + $0x4] sm:$0x3]
        %v242 = vld [vmem:[%s233 + $0x6] sm:$0x3]
        %v243 = vld [vmem:[%s233 + $0x8] sm:$0x3]
        %v244 = vld [vmem:[%s233 + $0xa] sm:$0x3]
        %v245 = vld [vmem:[%s233 + $0xc] sm:$0x3]
        %v246 = vld [vmem:[%s233 + $0xe] sm:$0x3]
        %v247 = vld [vmem:[%s233 + $0x10] sm:$0x3]
        %v248 = vld [vmem:[%s233 + $0x12] sm:$0x3]
        %v249 = vld [vmem:[%s233 + $0x14] sm:$0x3]
        %v250 = vld [vmem:[%s233 + $0x16] sm:$0x3]
        %v251 = vld [vmem:[%s233 + $0x18] sm:$0x3]
        %v252 = vld [vmem:[%s233 + $0x1a] sm:$0x3]
        %v253 = vld [vmem:[%s233 + $0x1c] sm:$0x3]
        %v254 = vld [vmem:[%s233 + $0x1e] sm:$0x3]
        %v255 = vmul.f32 %v239, 0.2
        %v256 = vmul.f32 %v240, 0.2
        %v257 = vmul.f32 %v241, 0.2
        %v258 = vmul.f32 %v242, 0.2
        %v259 = vmul.f32 %v243, 0.2
        %v260 = vmul.f32 %v244, 0.2
        %v261 = vmul.f32 %v245, 0.2
        %v262 = vmul.f32 %v246, 0.2
        %v263 = vmul.f32 %v247, 0.2
        %v264 = vmul.f32 %v248, 0.2
        %v265 = vmul.f32 %v249, 0.2
        %v266 = vmul.f32 %v250, 0.2
        %v267 = vmul.f32 %v251, 0.2
        %v268 = vmul.f32 %v252, 0.2
        %v269 = vmul.f32 %v253, 0.2
        %v270 = vmul.f32 %v254, 0.2
        %v271 = vmax.f32 %v239, %v255
        %v272 = vmax.f32 %v240, %v256
        %v273 = vmax.f32 %v241, %v257
        %v274 = vmax.f32 %v242, %v258
        %v275 = vmax.f32 %v243, %v259
        %v276 = vmax.f32 %v244, %v260
        %v277 = vmax.f32 %v245, %v261
        %v278 = vmax.f32 %v246, %v262
        %v279 = vmax.f32 %v247, %v263
        %v280 = vmax.f32 %v248, %v264
        %v281 = vmax.f32 %v249, %v265
        %v282 = vmax.f32 %v250, %v266
        %v283 = vmax.f32 %v251, %v267
        %v284 = vmax.f32 %v252, %v268
        %v285 = vmax.f32 %v253, %v269
        %v286 = vmax.f32 %v254, %v270
        %v287 = vcombine.low %v271, %v273
        %v289 = vunpack.c.l.s4 1983009808
        %v290 = vunpack.c.0.s8 %v289
        %v291 = vlaneseq
        %v292 = vshrl.u32 %v291, 7
        %v293 = vsub.s32 %v290, %v292
        %v294 = vrot.slane %v287, %v293
        %v295 = vcombine.low %v272, %v274
        %v297 = vunpack.c.l.s4 1983009808
        %v298 = vunpack.c.0.s8 %v297
        %v299 = vlaneseq
        %v300 = vshrl.u32 %v299, 7
        %v301 = vsub.s32 %v298, %v300
        %v302 = vrot.slane %v295, %v301
        %v303 = vcombine.low %v275, %v277
        %v305 = vunpack.c.l.s4 1983009808
        %v306 = vunpack.c.0.s8 %v305
        %v307 = vlaneseq
        %v308 = vshrl.u32 %v307, 7
        %v309 = vsub.s32 %v306, %v308
        %v310 = vrot.slane %v303, %v309
        %v311 = vcombine.low %v276, %v278
        %v313 = vunpack.c.l.s4 1983009808
        %v314 = vunpack.c.0.s8 %v313
        %v315 = vlaneseq
        %v316 = vshrl.u32 %v315, 7
        %v317 = vsub.s32 %v314, %v316
        %v318 = vrot.slane %v311, %v317
        %v319 = vcombine.low %v294, %v302
        %v321 = vunpack.c.l.s4 1934713408
        %v322 = vunpack.c.0.s8 %v321
        %v323 = vlaneseq
        %v324 = vshrl.u32 %v323, 7
        %v325 = vsub.s32 %v322, %v324
        %v326 = vrot.slane %v319, %v325
        %v327 = vcombine.low %v310, %v318
        %v329 = vunpack.c.l.s4 1934713408
        %v330 = vunpack.c.0.s8 %v329
        %v331 = vlaneseq
        %v332 = vshrl.u32 %v331, 7
        %v333 = vsub.s32 %v330, %v332
        %v334 = vrot.slane %v327, %v333
        %v335 = vcombine.low %v326, %v334
        %v336 = vcombine.high %v326, %v334
        %v337 = vcombine.low %v279, %v281
        %v339 = vunpack.c.l.s4 1983009808
        %v340 = vunpack.c.0.s8 %v339
        %v341 = vlaneseq
        %v342 = vshrl.u32 %v341, 7
        %v343 = vsub.s32 %v340, %v342
        %v344 = vrot.slane %v337, %v343
        %v345 = vcombine.low %v280, %v282
        %v347 = vunpack.c.l.s4 1983009808
        %v348 = vunpack.c.0.s8 %v347
        %v349 = vlaneseq
        %v350 = vshrl.u32 %v349, 7
        %v351 = vsub.s32 %v348, %v350
        %v352 = vrot.slane %v345, %v351
        %v353 = vcombine.low %v283, %v285
        %v355 = vunpack.c.l.s4 1983009808
        %v356 = vunpack.c.0.s8 %v355
        %v357 = vlaneseq
        %v358 = vshrl.u32 %v357, 7
        %v359 = vsub.s32 %v356, %v358
        %v360 = vrot.slane %v353, %v359
        %v361 = vcombine.low %v284, %v286
        %v363 = vunpack.c.l.s4 1983009808
        %v364 = vunpack.c.0.s8 %v363
        %v365 = vlaneseq
        %v366 = vshrl.u32 %v365, 7
        %v367 = vsub.s32 %v364, %v366
        %v368 = vrot.slane %v361, %v367
        %v369 = vcombine.low %v344, %v352
        %v371 = vunpack.c.l.s4 1934713408
        %v372 = vunpack.c.0.s8 %v371
        %v373 = vlaneseq
        %v374 = vshrl.u32 %v373, 7
        %v375 = vsub.s32 %v372, %v374
        %v376 = vrot.slane %v369, %v375
        %v377 = vcombine.low %v360, %v368
        %v379 = vunpack.c.l.s4 1934713408
        %v380 = vunpack.c.0.s8 %v379
        %v381 = vlaneseq
        %v382 = vshrl.u32 %v381, 7
        %v383 = vsub.s32 %v380, %v382
        %v384 = vrot.slane %v377, %v383
        %v385 = vcombine.low %v376, %v384
        %v386 = vcombine.high %v376, %v384
        %389 = vrot.lane.b32.xlu0 %v336, 10
        %v390 = vpop.permute.xlu0 %389
        %391 = vrot.lane.b32.xlu0 %v386, 10
        %v392 = vpop.permute.xlu0 %391
        %vm395 = vcmask 80896
        %v396 = vsel %vm395, %v335, %v390
        %v397 = vsel %vm395, %v385, %v392
        %v398 = vpack.c.bf16 %v397, %v396
        %v399 = vld [vmem:[%s225] sm:$0x1]
        %v400 = vld [vmem:[%s228] sm:$0x1]
        %402 = vset.pattern.permute.xlu0 0
        %403 = vperm.xlu0 %402, %v400
        %v404 = vpop.permute.xlu0 %403
        %v406 = vlaneseq
        %v407 = vshrl.u32 %v406, 7
        %v408 = vsub.s32 0, %v407
        %v409 = vrot.slane %v404, %v408
        %vm410 = vcmask 130048
        %v412 = vsel %vm410, %v399, 0
        %414 = vmatprep.subr.bf16.mxu0 0
        %415 = vmatpush1.bf16.msra.mxu0 0
        %416 = vmatprep.subr.bf16.mxu0 0
        %417 = vmatpush1.bf16.msra.mxu0 0
        %418 = vmatprep.subr.bf16.mxu0 0
        %419 = vmatpush1.bf16.msra.mxu0 0
        %420 = vmatprep.subr.bf16.mxu0 0
        %421 = vmatpush1.bf16.msra.mxu0 0
        %422 = vmatprep.subr.bf16.mxu0 0
        %423 = vmatpush1.bf16.msra.mxu0 0
        %424 = vmatprep.subr.bf16.mxu0 0
        %425 = vmatpush1.bf16.msra.mxu0 0
        %426 = vmatprep.subr.bf16.mxu0 0
        %427 = vmatpush1.bf16.msra.mxu0 0
        %428 = vmatprep.subr.bf16.mxu0 0
        %429 = vmatpush1.bf16.msra.mxu0 %v398
        %430 = vmatprep.subr.bf16.mxu0 0
        %431 = vmatpush2.bf16.msra.mxu0 0
        %432 = vmatprep.subr.bf16.mxu0 0
        %433 = vmatpush2.bf16.msra.mxu0 0
        %434 = vmatprep.subr.bf16.mxu0 0
        %435 = vmatpush2.bf16.msra.mxu0 0
        %436 = vmatprep.subr.bf16.mxu0 0
        %437 = vmatpush2.bf16.msra.mxu0 0
        %438 = vmatprep.subr.bf16.mxu0 0
        %439 = vmatpush2.bf16.msra.mxu0 0
        %440 = vmatprep.subr.bf16.mxu0 0
        %441 = vmatpush2.bf16.msra.mxu0 0
        %442 = vmatprep.subr.bf16.mxu0 0
        %443 = vmatpush2.bf16.msra.mxu0 0
        %444 = vmatprep.subr.bf16.mxu0 0
        %445 = vmatpush2.bf16.msra.mxu0 0
        %446 = vmatprep.mubr.bf16.mxu0 0
        %447 = vmatmul.mubr.bf16.gmra.mxu0 %v412
        %v448 = vpop.f32.mrf.mxu0
        %v449 = vadd.f32 %v409, %v448
        %v450 = vpop.f32.mrf.mxu0
        %v451 = vpop.f32.mrf.mxu0
        %v452 = vpop.f32.mrf.mxu0
        %453 = vdwg.mxu0
        %s454 = sld [smem:[#allocation2 + %s16]]
        %v455 = vlaneseq
        %v456 = vand.u32 %v455, 127
        %s457 = smul.u32 %s454, 10
        %v458 = vstv %s457
        %vm459 = vcmp.lt.s32.totalorder %v456, %v458
        %v460 = vsel %vm459, %v449, 0.0
        %462 = vrot.lane.b32.xlu0 %v460, 118
        %v463 = vpop.permute.xlu0 %462
        %v465 = vcombine.low %v460, %v463
        %v467 = vunpack.c.l.s4 1934713408
        %v468 = vunpack.c.0.s8 %v467
        %v469 = vlaneseq
        %v470 = vshrl.u32 %v469, 7
        %v471 = vsub.s32 %v468, %v470
        %v472 = vrot.slane %v465, %v471
        %vm473 = vcmask 74752
        %474 = vst.msk [vmem:[%s237] sm:$0x3] %vm473, %v472
        %p475 = scmp.lt.s32.totalorder %s16, 2
        %s476 = scalar_select %p475, %s16, 2
        %s477 = smul.addr %s476, 2
        %s478 = scalar_lea.vmem %s4, %s477
        // Predicated region
        $region41: #{multi_period_discriminator.7} parent=35 // pred_check
          %p479 = pneg %p133
        $region42: #{multi_period_discriminator.7} parent=35 // pred_check_branch
          %481 = sbr.rel (%p479) target = $region44
        $region43: #{multi_period_discriminator.7} parent=35 // pred_region
          _
        $region44: #{multi_period_discriminator.7} parent=35 // pred_fallthru
          _
      $region36: #{multi_period_discriminator.7} parent=5 // pred_fallthru
        _
      %p482 = scmp.le.s32.totalorder 2, %s11
      // Predicated region
      $region45: #{multi_period_discriminator.7} parent=5 // pred_check
        %p483 = pneg %p482
      $region46: #{multi_period_discriminator.7} parent=5 // pred_check_branch
        %485 = sbr.rel (%p483) target = $region48
      $region47: #{multi_period_discriminator.7} parent=5 // pred_region
        %s486 = ssub.s32 %s11, 2
        // Predicated region
        $region49: #{multi_period_discriminator.7} parent=47 // pred_check
          %p487 = pneg %p139
        $region50: #{multi_period_discriminator.7} parent=47 // pred_check_branch
          %489 = sbr.rel (%p487) target = $region52
        $region51: #{multi_period_discriminator.7} parent=47 // pred_region
          %p490 = scmp.lt.s32.totalorder %s17, 2
          %s491 = scalar_select %p490, %s17, 2
          %s492 = smul.addr %s491, 2
          %s493 = scalar_lea.vmem %s4, %s492
        $region52: #{multi_period_discriminator.7} parent=47 // pred_fallthru
          _
      $region48: #{multi_period_discriminator.7} parent=5 // pred_fallthru
        _
    $region6: #{multi_period_discriminator.7} parent=1 // loop_footer
      %s15 = sadd.s32 1, %s11
    $region7: #{multi_period_discriminator.7} parent=1 // loop_footer_branch
      %10 = sbr.rel target = $region3
    $region8: #{multi_period_discriminator.7} parent=1 // loop_exit
      _
    %494 = vsyncpa [#allocation3], 1
    %s495 = scalar_lea.sflag [#allocation3], 1
    %496 = vsyncpa %s495, 1

// kernel: multi_period_discriminator.4
$region0: #{multi_period_discriminator.4}
  #allocation0 [shape = 'u32[]', space=smem, size = 0x4, offset = 0x4, fixed_abs, tag = 'smem constant byte address 0x4 - core index']
  #allocation1 [shape = 'u32[144,128]{1,0:T(1,128)}', space=vmem, size = 0x12000, scoped, tag = 'internal scratch']
  %s0 = inlined_call_operand.vmem [shape: s32[3], index: 0, kind: input, shape index: {}]
  %s1 = inlined_call_operand.vmem [shape: bf16[3,5,4,1], index: 1, kind: input, shape index: {}]
  %s2 = inlined_call_operand.vmem [shape: f32[3,4,1], index: 2, kind: input, shape index: {}]
  %s3 = inlined_call_operand.vmem [shape: f32[3,1,36,10], index: 3, kind: input, shape index: {}]
  %s4 = inlined_call_operand.vmem [shape: f32[3,4,15,10], index: 4, kind: output, shape index: {}]
  %s5 = sld [smem:[#allocation0]]
  $region53: #{multi_period_discriminator.4} parent=0
    _
  %s7 = ssub.s32 1, %s5
  %s8 = scalar_select 0, %s7, %s5
  $region1: #{multi_period_discriminator.4} parent=0
    #allocation2 [shape = 'u8[512]{0}', space=smem, size = 0x200, scoped, tag = 'input window, operand 0, single buffered']
    #allocation3 [shape = 's32[2]{0}', space=sflag, size = 0x8, scoped, tag = 'scoped memory for multi_period_discriminator.4']
    %9 = vsyncpa [#allocation3], 0
    loop: start=0, step=1, limit=5
    $region2: #{multi_period_discriminator.4} parent=1 // loop_pre_header
      _
    $region3: #{multi_period_discriminator.4} parent=1 // loop_header
      %s11 = sphi 0, %s15
      %p12 = scmp.ge.s32.totalorder %s11, 5
      %s19 = sphi 0, %s19
      %s21 = sphi 0, %s19
      %s22 = sphi 0, %s21
      %s36 = sphi 0, %s22
      %s42 = sphi 0, %s44
      %s45 = sphi 0, %s42
      %s46 = sphi 0, %s45
      %s62 = sphi 0, %s46
      %s68 = sphi 0, %s70
      %s71 = sphi 0, %s68
      %s72 = sphi 0, %s71
      %s88 = sphi 0, %s72
      %s94 = sphi 0, %s96
      %s97 = sphi 0, %s94
      %s98 = sphi 0, %s97
      %s114 = sphi 0, %s98
      %s120 = sphi 0, %s122
      %s123 = sphi 0, %s120
      %s124 = sphi 0, %s123
      %s140 = sphi 0, %s124
    $region4: #{multi_period_discriminator.4} parent=1 // loop_header_branch
      %14 = sbr.rel (%p12) target = $region8
    $region5: #{multi_period_discriminator.4} parent=1 // loop_body
      %s16 = ssub.s32 %s11, 1
      %s17 = ssub.s32 %s11, 2
      %s18 = sadd.s32 %s11, 1
      %s20 = sadd.s32 %s19, 1
      %p23 = scmp.eq.s32.totalorder %s11, 2
      %p24 = scmp.ne.s32.totalorder %s19, %s21
      %p25 = scmp.eq.s32.totalorder %s11, 0
      %p26 = por %p24, %p25
      %p27 = scmp.ne.s32.totalorder %s19, %s21
      %p28 = scmp.eq.s32.totalorder %s16, 2
      %p29 = por %p27, %p28
      %p30 = scmp.ne.s32.totalorder %s21, %s22
      %p31 = scmp.eq.s32.totalorder %s16, 0
      %p32 = por %p30, %p31
      %p33 = scmp.ne.s32.totalorder %s21, %s22
      %p34 = scmp.eq.s32.totalorder %s17, 2
      %p35 = por %p33, %p34
      %p37 = scmp.ne.s32.totalorder %s22, %s36
      %p38 = scmp.eq.s32.totalorder %s17, 0
      %p39 = por %p37, %p38
      %s40 = ssub.s32 %s11, %s18
      %p41 = scmp.eq.s32.totalorder %s40, 0
      %s43 = sadd.s32 %s42, 1
      %s44 = scalar_select %p41, %s42, %s43
      %p47 = pneg %p41
      %p48 = scmp.eq.s32.totalorder %s11, 2
      %p49 = por %p47, %p48
      %p50 = scmp.ne.s32.totalorder %s42, %s45
      %p51 = scmp.eq.s32.totalorder %s11, 0
      %p52 = por %p50, %p51
      %p53 = scmp.ne.s32.totalorder %s42, %s45
      %p54 = scmp.eq.s32.totalorder %s16, 2
      %p55 = por %p53, %p54
      %p56 = scmp.ne.s32.totalorder %s45, %s46
      %p57 = scmp.eq.s32.totalorder %s16, 0
      %p58 = por %p56, %p57
      %p59 = scmp.ne.s32.totalorder %s45, %s46
      %p60 = scmp.eq.s32.totalorder %s17, 2
      %p61 = por %p59, %p60
      %p63 = scmp.ne.s32.totalorder %s46, %s62
      %p64 = scmp.eq.s32.totalorder %s17, 0
      %p65 = por %p63, %p64
      %s66 = ssub.s32 %s11, %s18
      %p67 = scmp.eq.s32.totalorder %s66, 0
      %s69 = sadd.s32 %s68, 1
      %s70 = scalar_select %p67, %s68, %s69
      %p73 = pneg %p67
      %p74 = scmp.eq.s32.totalorder %s11, 2
      %p75 = por %p73, %p74
      %p76 = scmp.ne.s32.totalorder %s68, %s71
      %p77 = scmp.eq.s32.totalorder %s11, 0
      %p78 = por %p76, %p77
      %p79 = scmp.ne.s32.totalorder %s68, %s71
      %p80 = scmp.eq.s32.totalorder %s16, 2
      %p81 = por %p79, %p80
      %p82 = scmp.ne.s32.totalorder %s71, %s72
      %p83 = scmp.eq.s32.totalorder %s16, 0
      %p84 = por %p82, %p83
      %p85 = scmp.ne.s32.totalorder %s71, %s72
      %p86 = scmp.eq.s32.totalorder %s17, 2
      %p87 = por %p85, %p86
      %p89 = scmp.ne.s32.totalorder %s72, %s88
      %p90 = scmp.eq.s32.totalorder %s17, 0
      %p91 = por %p89, %p90
      %s92 = ssub.s32 %s11, %s18
      %p93 = scmp.eq.s32.totalorder %s92, 0
      %s95 = sadd.s32 %s94, 1
      %s96 = scalar_select %p93, %s94, %s95
      %p99 = pneg %p93
      %p100 = scmp.eq.s32.totalorder %s11, 2
      %p101 = por %p99, %p100
      %p102 = scmp.ne.s32.totalorder %s94, %s97
      %p103 = scmp.eq.s32.totalorder %s11, 0
      %p104 = por %p102, %p103
      %p105 = scmp.ne.s32.totalorder %s94, %s97
      %p106 = scmp.eq.s32.totalorder %s16, 2
      %p107 = por %p105, %p106
      %p108 = scmp.ne.s32.totalorder %s97, %s98
      %p109 = scmp.eq.s32.totalorder %s16, 0
      %p110 = por %p108, %p109
      %p111 = scmp.ne.s32.totalorder %s97, %s98
      %p112 = scmp.eq.s32.totalorder %s17, 2
      %p113 = por %p111, %p112
      %p115 = scmp.ne.s32.totalorder %s98, %s114
      %p116 = scmp.eq.s32.totalorder %s17, 0
      %p117 = por %p115, %p116
      %s118 = ssub.s32 %s11, %s18
      %p119 = scmp.eq.s32.totalorder %s118, 0
      %s121 = sadd.s32 %s120, 1
      %s122 = scalar_select %p119, %s120, %s121
      %p125 = pneg %p119
      %p126 = scmp.eq.s32.totalorder %s11, 2
      %p127 = por %p125, %p126
      %p128 = scmp.ne.s32.totalorder %s120, %s123
      %p129 = scmp.eq.s32.totalorder %s11, 0
      %p130 = por %p128, %p129
      %p131 = scmp.ne.s32.totalorder %s120, %s123
      %p132 = scmp.eq.s32.totalorder %s16, 2
      %p133 = por %p131, %p132
      %p134 = scmp.ne.s32.totalorder %s123, %s124
      %p135 = scmp.eq.s32.totalorder %s16, 0
      %p136 = por %p134, %p135
      %p137 = scmp.ne.s32.totalorder %s123, %s124
      %p138 = scmp.eq.s32.totalorder %s17, 2
      %p139 = por %p137, %p138
      %p141 = scmp.ne.s32.totalorder %s124, %s140
      %p142 = scmp.eq.s32.totalorder %s17, 0
      %p143 = por %p141, %p142
      %p144 = scmp.le.s32.totalorder 1, %s11
      %p145 = scmp.lt.s32.totalorder %s11, 4
      %p146 = pnand %p144, %p145
      %p147 = pneg %p146
      // Predicated region
      $region9: #{multi_period_discriminator.4} parent=5 // pred_check
        _
      $region10: #{multi_period_discriminator.4} parent=5 // pred_check_branch
        %149 = sbr.rel (%p146) target = $region12
      $region11: #{multi_period_discriminator.4} parent=5 // pred_region
        %s150 = ssub.s32 %s11, 1
        // Predicated region
        $region13: #{multi_period_discriminator.4} parent=11 // pred_check
          %p151 = pneg %p32
        $region14: #{multi_period_discriminator.4} parent=11 // pred_check_branch
          %153 = sbr.rel (%p151) target = $region16
        $region15: #{multi_period_discriminator.4} parent=11 // pred_region
          %s155 = ssub.s32 16, 16
          %156 = vsyncadd [#allocation3], %s155
          %s158 = sshll.u32 %s0, 4
          %s159 = int_to_ptr.vmem [resolvable:$true] %s158
          %161 = dma.vmem_to_smem %s159, 16, [#allocation2], [#allocation3]
        $region16: #{multi_period_discriminator.4} parent=11 // pred_fallthru
          _
      $region12: #{multi_period_discriminator.4} parent=5 // pred_fallthru
        _
      %p162 = scmp.lt.s32.totalorder %s11, 3
      // Predicated region
      $region17: #{multi_period_discriminator.4} parent=5 // pred_check
        %p163 = pneg %p162
      $region18: #{multi_period_discriminator.4} parent=5 // pred_check_branch
        %165 = sbr.rel (%p163) target = $region20
      $region19: #{multi_period_discriminator.4} parent=5 // pred_region
        // Predicated region
        $region21: #{multi_period_discriminator.4} parent=19 // pred_check
          %p166 = pneg %p52
        $region22: #{multi_period_discriminator.4} parent=19 // pred_check_branch
          %168 = sbr.rel (%p166) target = $region24
        $region23: #{multi_period_discriminator.4} parent=19 // pred_region
          %p169 = scmp.lt.s32.totalorder %s11, 2
          %s170 = scalar_select %p169, %s11, 2
          %s171 = smul.addr %s170, 5
          %s172 = smul.addr %s171, 2
          %s173 = scalar_lea.vmem %s1, %s172
        $region24: #{multi_period_discriminator.4} parent=19 // pred_fallthru
          _
        // Predicated region
        $region25: #{multi_period_discriminator.4} parent=19 // pred_check
          %p174 = pneg %p78
        $region26: #{multi_period_discriminator.4} parent=19 // pred_check_branch
          %176 = sbr.rel (%p174) target = $region28
        $region27: #{multi_period_discriminator.4} parent=19 // pred_region
          %p177 = scmp.lt.s32.totalorder %s11, 2
          %s178 = scalar_select %p177, %s11, 2
          %s179 = smul.addr %s178, 4
          %s180 = scalar_lea.vmem %s2, %s179
        $region28: #{multi_period_discriminator.4} parent=19 // pred_fallthru
          _
        // Predicated region
        $region29: #{multi_period_discriminator.4} parent=19 // pred_check
          %p181 = pneg %p104
        $region30: #{multi_period_discriminator.4} parent=19 // pred_check_branch
          %183 = sbr.rel (%p181) target = $region32
        $region31: #{multi_period_discriminator.4} parent=19 // pred_region
          %p184 = scmp.lt.s32.totalorder %s11, 2
          %s185 = scalar_select %p184, %s11, 2
          %s186 = smul.addr %s185, 5
          %s187 = smul.addr %s186, 8
          %s188 = scalar_lea.vmem %s3, %s187
        $region32: #{multi_period_discriminator.4} parent=19 // pred_fallthru
          _
      $region20: #{multi_period_discriminator.4} parent=5 // pred_fallthru
        _
      %p189 = scmp.le.s32.totalorder 1, %s11
      %p190 = scmp.lt.s32.totalorder %s11, 4
      %p191 = pnand %p189, %p190
      %p192 = pneg %p191
      // Predicated region
      $region33: #{multi_period_discriminator.4} parent=5 // pred_check
        _
      $region34: #{multi_period_discriminator.4} parent=5 // pred_check_branch
        %194 = sbr.rel (%p191) target = $region36
      $region35: #{multi_period_discriminator.4} parent=5 // pred_region
        %s195 = ssub.s32 %s11, 1
        // Predicated region
        $region37: #{multi_period_discriminator.4} parent=35 // pred_check
          %p196 = pneg %p32
        $region38: #{multi_period_discriminator.4} parent=35 // pred_check_branch
          %198 = sbr.rel (%p196) target = $region40
        $region39: #{multi_period_discriminator.4} parent=35 // pred_region
          %199 = dma.done [#allocation3], 16
        $region40: #{multi_period_discriminator.4} parent=35 // pred_fallthru
          _
        %200 = sfence
        %p201 = pneg %p32
        %p202 = pneg %p29
        %p203 = scmp.lt.s32.totalorder %s16, 2
        %s204 = scalar_select %p203, %s16, 2
        %s205 = smul.addr %s204, 5
        %s206 = smul.addr %s205, 2
        %s207 = scalar_lea.vmem %s1, %s206
        %p208 = pneg %p58
        %p209 = pneg %p55
        %p210 = scmp.lt.s32.totalorder %s16, 2
        %s211 = scalar_select %p210, %s16, 2
        %s212 = smul.addr %s211, 4
        %s213 = scalar_lea.vmem %s2, %s212
        %p214 = pneg %p84
        %p215 = pneg %p81
        %p216 = scmp.lt.s32.totalorder %s16, 2
        %s217 = scalar_select %p216, %s16, 2
        %s218 = smul.addr %s217, 5
        %s219 = smul.addr %s218, 8
        %s220 = scalar_lea.vmem %s3, %s219
        %p221 = pneg %p110
        %p222 = pneg %p107
        %p223 = pneg %p136
        %p224 = pneg %p133
        %p225 = scmp.lt.s32.totalorder %s16, 2
        %s226 = scalar_select %p225, %s16, 2
        %s227 = smul.addr %s226, 8
        %s228 = smul.addr %s227, 8
        %s229 = scalar_lea.vmem %s4, %s228
        %p230 = scmp.lt.s32.totalorder %s16, 2
        %s231 = scalar_select %p230, %s16, 2
        %s232 = smul.addr %s231, 5
        %s233 = smul.addr %s232, 2
        %s234 = scalar_lea.vmem %s1, %s233
        %p235 = scmp.lt.s32.totalorder %s16, 2
        %s236 = scalar_select %p235, %s16, 2
        %s237 = smul.addr %s236, 4
        %s238 = scalar_lea.vmem %s2, %s237
        %p239 = scmp.lt.s32.totalorder %s16, 2
        %s240 = scalar_select %p239, %s16, 2
        %s241 = smul.addr %s240, 5
        %s242 = smul.addr %s241, 8
        %s243 = scalar_lea.vmem %s3, %s242
        %p244 = scmp.lt.s32.totalorder %s16, 2
        %s245 = scalar_select %p244, %s16, 2
        %s246 = smul.addr %s245, 8
        %s247 = smul.addr %s246, 8
        %s248 = scalar_lea.vmem %s4, %s247
        %v250 = vld [vmem:[%s243] ss:$3 sm:$0xff]
        %v251 = vcombine.high %v250, 0.0
        %v253 = vunpack.c.l.s4 1983009808
        %v254 = vunpack.c.0.s8 %v253
        %v255 = vlaneseq
        %v256 = vshrl.u32 %v255, 7
        %v257 = vsub.s32 %v254, %v256
        %v258 = vrot.slane %v250, %v257
        %v260 = vunpack.c.l.s4 1983009808
        %v261 = vunpack.c.0.s8 %v260
        %v262 = vlaneseq
        %v263 = vshrl.u32 %v262, 7
        %v264 = vsub.s32 %v261, %v263
        %v265 = vrot.slane %v251, %v264
        %v266 = vcombine.high %v258, 0.0
        %v268 = vunpack.c.l.s4 1934713408
        %v269 = vunpack.c.0.s8 %v268
        %v270 = vlaneseq
        %v271 = vshrl.u32 %v270, 7
        %v272 = vsub.s32 %v269, %v271
        %v273 = vrot.slane %v258, %v272
        %v275 = vunpack.c.l.s4 1934713408
        %v276 = vunpack.c.0.s8 %v275
        %v277 = vlaneseq
        %v278 = vshrl.u32 %v277, 7
        %v279 = vsub.s32 %v276, %v278
        %v280 = vrot.slane %v266, %v279
        %v281 = vcombine.high %v265, 0.0
        %v283 = vunpack.c.l.s4 1934713408
        %v284 = vunpack.c.0.s8 %v283
        %v285 = vlaneseq
        %v286 = vshrl.u32 %v285, 7
        %v287 = vsub.s32 %v284, %v286
        %v288 = vrot.slane %v265, %v287
        %v290 = vunpack.c.l.s4 1934713408
        %v291 = vunpack.c.0.s8 %v290
        %v292 = vlaneseq
        %v293 = vshrl.u32 %v292, 7
        %v294 = vsub.s32 %v291, %v293
        %v295 = vrot.slane %v281, %v294
        %v296 = vcombine.high %v273, 0.0
        %v297 = vcombine.high %v280, 0.0
        %v298 = vcombine.high %v288, 0.0
        %v299 = vcombine.high %v295, 0.0
        %s300 = scalar_lea.vmem %s243, 24
        %v301 = vld [vmem:[%s300] ss:$3 sm:$0x7]
        %v303 = vunpack.c.l.s4 1983009808
        %v304 = vunpack.c.0.s8 %v303
        %v305 = vlaneseq
        %v306 = vshrl.u32 %v305, 7
        %v307 = vsub.s32 %v304, %v306
        %v308 = vrot.slane %v301, %v307
        %v310 = vunpack.c.l.s4 1934713408
        %v311 = vunpack.c.0.s8 %v310
        %v312 = vlaneseq
        %v313 = vshrl.u32 %v312, 7
        %v314 = vsub.s32 %v311, %v313
        %v315 = vrot.slane %v308, %v314
        %v316 = vcombine.high %v315, 0.0
        %v317 = vcombine.high %v308, 0.0
        %319 = vrot.lane.b32.xlu0 %v296, 10
        %v320 = vpop.permute.xlu0 %319
        %323 = vrot.lane.b32.xlu0 %v280, 20
        %v324 = vpop.permute.xlu0 %323
        %327 = vrot.lane.b32.xlu0 %v297, 30
        %v328 = vpop.permute.xlu0 %327
        %331 = vrot.lane.b32.xlu0 %v288, 40
        %v332 = vpop.permute.xlu0 %331
        %335 = vrot.lane.b32.xlu0 %v298, 50
        %v336 = vpop.permute.xlu0 %335
        %339 = vrot.lane.b32.xlu0 %v295, 60
        %v340 = vpop.permute.xlu0 %339
        %343 = vrot.lane.b32.xlu0 %v299, 70
        %v344 = vpop.permute.xlu0 %343
        %347 = vrot.lane.b32.xlu0 %v315, 80
        %v348 = vpop.permute.xlu0 %347
        %351 = vrot.lane.b32.xlu0 %v316, 90
        %v352 = vpop.permute.xlu0 %351
        %355 = vrot.lane.b32.xlu0 %v317, 100
        %v356 = vpop.permute.xlu0 %355
        %vm358 = vcmask 80896
        %v359 = vsel %vm358, %v273, %v320
        %vm360 = vcmask 162816
        %v361 = vsel %vm360, %v359, %v324
        %vm362 = vcmask 244736
        %v363 = vsel %vm362, %v361, %v328
        %vm364 = vcmask 326656
        %v365 = vsel %vm364, %v363, %v332
        %vm366 = vcmask 408576
        %v367 = vsel %vm366, %v365, %v336
        %vm368 = vcmask 490496
        %v369 = vsel %vm368, %v367, %v340
        %vm370 = vcmask 572416
        %v371 = vsel %vm370, %v369, %v344
        %vm372 = vcmask 654336
        %v373 = vsel %vm372, %v371, %v348
        %vm374 = vcmask 736256
        %v375 = vsel %vm374, %v373, %v352
        %vm376 = vcmask 818176
        %v377 = vsel %vm376, %v375, %v356
        %v378 = vpack.c.bf16 %v377, %v377
        %v379 = vld [vmem:[%s234] sm:$0x3]
        %s380 = scalar_lea.vmem %s243, 1
        %v381 = vld [vmem:[%s380] ss:$3 sm:$0xff]
        %v382 = vcombine.high %v381, 0.0
        %v384 = vunpack.c.l.s4 1983009808
        %v385 = vunpack.c.0.s8 %v384
        %v386 = vlaneseq
        %v387 = vshrl.u32 %v386, 7
        %v388 = vsub.s32 %v385, %v387
        %v389 = vrot.slane %v381, %v388
        %v391 = vunpack.c.l.s4 1983009808
        %v392 = vunpack.c.0.s8 %v391
        %v393 = vlaneseq
        %v394 = vshrl.u32 %v393, 7
        %v395 = vsub.s32 %v392, %v394
        %v396 = vrot.slane %v382, %v395
        %v397 = vcombine.high %v389, 0.0
        %v399 = vunpack.c.l.s4 1934713408
        %v400 = vunpack.c.0.s8 %v399
        %v401 = vlaneseq
        %v402 = vshrl.u32 %v401, 7
        %v403 = vsub.s32 %v400, %v402
        %v404 = vrot.slane %v389, %v403
        %v406 = vunpack.c.l.s4 1934713408
        %v407 = vunpack.c.0.s8 %v406
        %v408 = vlaneseq
        %v409 = vshrl.u32 %v408, 7
        %v410 = vsub.s32 %v407, %v409
        %v411 = vrot.slane %v397, %v410
        %v412 = vcombine.high %v396, 0.0
        %v414 = vunpack.c.l.s4 1934713408
        %v415 = vunpack.c.0.s8 %v414
        %v416 = vlaneseq
        %v417 = vshrl.u32 %v416, 7
        %v418 = vsub.s32 %v415, %v417
        %v419 = vrot.slane %v396, %v418
        %v421 = vunpack.c.l.s4 1934713408
        %v422 = vunpack.c.0.s8 %v421
        %v423 = vlaneseq
        %v424 = vshrl.u32 %v423, 7
        %v425 = vsub.s32 %v422, %v424
        %v426 = vrot.slane %v412, %v425
        %v427 = vcombine.high %v404, 0.0
        %v428 = vcombine.high %v411, 0.0
        %v429 = vcombine.high %v419, 0.0
        %v430 = vcombine.high %v426, 0.0
        %s431 = scalar_lea.vmem %s243, 25
        %v432 = vld [vmem:[%s431] ss:$3 sm:$0x7]
        %v434 = vunpack.c.l.s4 1983009808
        %v435 = vunpack.c.0.s8 %v434
        %v436 = vlaneseq
        %v437 = vshrl.u32 %v436, 7
        %v438 = vsub.s32 %v435, %v437
        %v439 = vrot.slane %v432, %v438
        %v441 = vunpack.c.l.s4 1934713408
        %v442 = vunpack.c.0.s8 %v441
        %v443 = vlaneseq
        %v444 = vshrl.u32 %v443, 7
        %v445 = vsub.s32 %v442, %v444
        %v446 = vrot.slane %v439, %v445
        %v447 = vcombine.high %v446, 0.0
        %v448 = vcombine.high %v439, 0.0
        %450 = vrot.lane.b32.xlu0 %v427, 10
        %v451 = vpop.permute.xlu0 %450
        %454 = vrot.lane.b32.xlu0 %v411, 20
        %v455 = vpop.permute.xlu0 %454
        %458 = vrot.lane.b32.xlu0 %v428, 30
        %v459 = vpop.permute.xlu0 %458
        %462 = vrot.lane.b32.xlu0 %v419, 40
        %v463 = vpop.permute.xlu0 %462
        %466 = vrot.lane.b32.xlu0 %v429, 50
        %v467 = vpop.permute.xlu0 %466
        %470 = vrot.lane.b32.xlu0 %v426, 60
        %v471 = vpop.permute.xlu0 %470
        %474 = vrot.lane.b32.xlu0 %v430, 70
        %v475 = vpop.permute.xlu0 %474
        %478 = vrot.lane.b32.xlu0 %v446, 80
        %v479 = vpop.permute.xlu0 %478
        %482 = vrot.lane.b32.xlu0 %v447, 90
        %v483 = vpop.permute.xlu0 %482
        %486 = vrot.lane.b32.xlu0 %v448, 100
        %v487 = vpop.permute.xlu0 %486
        %v489 = vsel %vm358, %v404, %v451
        %v490 = vsel %vm360, %v489, %v455
        %v491 = vsel %vm362, %v490, %v459
        %v492 = vsel %vm364, %v491, %v463
        %v493 = vsel %vm366, %v492, %v467
        %v494 = vsel %vm368, %v493, %v471
        %v495 = vsel %vm370, %v494, %v475
        %v496 = vsel %vm372, %v495, %v479
        %v497 = vsel %vm374, %v496, %v483
        %v498 = vsel %vm376, %v497, %v487
        %v499 = vpack.c.bf16 %v498, %v498
        %s500 = scalar_lea.vmem %s234, 2
        %v501 = vld [vmem:[%s500] sm:$0x3]
        %vm502 = vcmask 7168
        %v504 = vsel %vm502, %v501, 0
        %vm506 = vcmask 1040384
        %v507 = vsel 0, 4294967295, 65535
        %v508 = vsel %vm506, %v507, 0
        %v510 = vand.u32 %v499, %v508
        %512 = vmatprep.subr.bf16.mxu0 0
        %513 = vmatpush1.bf16.msra.mxu0 0
        %514 = vmatprep.subr.bf16.mxu0 0
        %515 = vmatpush1.bf16.msra.mxu0 0
        %516 = vmatprep.subr.bf16.mxu0 0
        %517 = vmatpush1.bf16.msra.mxu0 0
        %518 = vmatprep.subr.bf16.mxu0 0
        %519 = vmatpush1.bf16.msra.mxu0 0
        %520 = vmatprep.subr.bf16.mxu0 0
        %521 = vmatpush1.bf16.msra.mxu0 0
        %522 = vmatprep.subr.bf16.mxu0 0
        %523 = vmatpush1.bf16.msra.mxu0 0
        %524 = vmatprep.subr.bf16.mxu0 0
        %525 = vmatpush1.bf16.msra.mxu0 0
        %526 = vmatprep.subr.bf16.mxu0 0
        %527 = vmatpush1.bf16.msra.mxu0 %v510
        %528 = vmatprep.subr.bf16.mxu0 0
        %529 = vmatpush2.bf16.msra.mxu0 0
        %530 = vmatprep.subr.bf16.mxu0 0
        %531 = vmatpush2.bf16.msra.mxu0 0
        %532 = vmatprep.subr.bf16.mxu0 0
        %533 = vmatpush2.bf16.msra.mxu0 0
        %534 = vmatprep.subr.bf16.mxu0 0
        %535 = vmatpush2.bf16.msra.mxu0 0
        %536 = vmatprep.subr.bf16.mxu0 0
        %537 = vmatpush2.bf16.msra.mxu0 0
        %538 = vmatprep.subr.bf16.mxu0 0
        %539 = vmatpush2.bf16.msra.mxu0 0
        %540 = vmatprep.subr.bf16.mxu0 0
        %541 = vmatpush2.bf16.msra.mxu0 0
        %542 = vmatprep.subr.bf16.mxu0 0
        %543 = vmatpush2.bf16.msra.mxu0 0
        %544 = vmatprep.mubr.bf16.mxu0 0
        %545 = vmatmul.mubr.bf16.gmra.mxu0 %v504
        %v546 = vpop.f32.mrf.mxu0
        %v547 = vadd.f32 0.0, %v546
        %v548 = vpop.f32.mrf.mxu0
        %v549 = vpop.f32.mrf.mxu0
        %v550 = vpop.f32.mrf.mxu0
        %551 = vdwg.mxu0
        %v553 = vsel %vm502, %v379, 0
        %v556 = vand.u32 %v378, %v508
        %558 = vmatprep.subr.bf16.mxu0 0
        %559 = vmatpush1.bf16.msra.mxu0 0
        %560 = vmatprep.subr.bf16.mxu0 0
        %561 = vmatpush1.bf16.msra.mxu0 0
        %562 = vmatprep.subr.bf16.mxu0 0
        %563 = vmatpush1.bf16.msra.mxu0 0
        %564 = vmatprep.subr.bf16.mxu0 0
        %565 = vmatpush1.bf16.msra.mxu0 0
        %566 = vmatprep.subr.bf16.mxu0 0
        %567 = vmatpush1.bf16.msra.mxu0 0
        %568 = vmatprep.subr.bf16.mxu0 0
        %569 = vmatpush1.bf16.msra.mxu0 0
        %570 = vmatprep.subr.bf16.mxu0 0
        %571 = vmatpush1.bf16.msra.mxu0 0
        %572 = vmatprep.subr.bf16.mxu0 0
        %573 = vmatpush1.bf16.msra.mxu0 %v556
        %574 = vmatprep.subr.bf16.mxu0 0
        %575 = vmatpush2.bf16.msra.mxu0 0
        %576 = vmatprep.subr.bf16.mxu0 0
        %577 = vmatpush2.bf16.msra.mxu0 0
        %578 = vmatprep.subr.bf16.mxu0 0
        %579 = vmatpush2.bf16.msra.mxu0 0
        %580 = vmatprep.subr.bf16.mxu0 0
        %581 = vmatpush2.bf16.msra.mxu0 0
        %582 = vmatprep.subr.bf16.mxu0 0
        %583 = vmatpush2.bf16.msra.mxu0 0
        %584 = vmatprep.subr.bf16.mxu0 0
        %585 = vmatpush2.bf16.msra.mxu0 0
        %586 = vmatprep.subr.bf16.mxu0 0
        %587 = vmatpush2.bf16.msra.mxu0 0
        %588 = vmatprep.subr.bf16.mxu0 0
        %589 = vmatpush2.bf16.msra.mxu0 0
        %590 = vmatprep.mubr.bf16.mxu0 0
        %591 = vmatmul.mubr.bf16.gmra.mxu0 %v553
        %v592 = vpop.f32.mrf.mxu0
        %v593 = vadd.f32 %v547, %v592
        %v594 = vpop.f32.mrf.mxu0
        %v595 = vpop.f32.mrf.mxu0
        %v596 = vpop.f32.mrf.mxu0
        %597 = vdwg.mxu0
        %s598 = scalar_lea.vmem %s243, 2
        %v599 = vld [vmem:[%s598] ss:$3 sm:$0xff]
        %v600 = vcombine.high %v599, 0.0
        %v602 = vunpack.c.l.s4 1983009808
        %v603 = vunpack.c.0.s8 %v602
        %v604 = vlaneseq
        %v605 = vshrl.u32 %v604, 7
        %v606 = vsub.s32 %v603, %v605
        %v607 = vrot.slane %v599, %v606
        %v609 = vunpack.c.l.s4 1983009808
        %v610 = vunpack.c.0.s8 %v609
        %v611 = vlaneseq
        %v612 = vshrl.u32 %v611, 7
        %v613 = vsub.s32 %v610, %v612
        %v614 = vrot.slane %v600, %v613
        %v615 = vcombine.high %v607, 0.0
        %v617 = vunpack.c.l.s4 1934713408
        %v618 = vunpack.c.0.s8 %v617
        %v619 = vlaneseq
        %v620 = vshrl.u32 %v619, 7
        %v621 = vsub.s32 %v618, %v620
        %v622 = vrot.slane %v607, %v621
        %v624 = vunpack.c.l.s4 1934713408
        %v625 = vunpack.c.0.s8 %v624
        %v626 = vlaneseq
        %v627 = vshrl.u32 %v626, 7
        %v628 = vsub.s32 %v625, %v627
        %v629 = vrot.slane %v615, %v628
        %v630 = vcombine.high %v614, 0.0
        %v632 = vunpack.c.l.s4 1934713408
        %v633 = vunpack.c.0.s8 %v632
        %v634 = vlaneseq
        %v635 = vshrl.u32 %v634, 7
        %v636 = vsub.s32 %v633, %v635
        %v637 = vrot.slane %v614, %v636
        %v639 = vunpack.c.l.s4 1934713408
        %v640 = vunpack.c.0.s8 %v639
        %v641 = vlaneseq
        %v642 = vshrl.u32 %v641, 7
        %v643 = vsub.s32 %v640, %v642
        %v644 = vrot.slane %v630, %v643
        %v645 = vcombine.high %v622, 0.0
        %v646 = vcombine.high %v629, 0.0
        %v647 = vcombine.high %v637, 0.0
        %v648 = vcombine.high %v644, 0.0
        %s649 = scalar_lea.vmem %s243, 26
        %v650 = vld [vmem:[%s649] ss:$3 sm:$0x7]
        %v652 = vunpack.c.l.s4 1983009808
        %v653 = vunpack.c.0.s8 %v652
        %v654 = vlaneseq
        %v655 = vshrl.u32 %v654, 7
        %v656 = vsub.s32 %v653, %v655
        %v657 = vrot.slane %v650, %v656
        %v659 = vunpack.c.l.s4 1934713408
        %v660 = vunpack.c.0.s8 %v659
        %v661 = vlaneseq
        %v662 = vshrl.u32 %v661, 7
        %v663 = vsub.s32 %v660, %v662
        %v664 = vrot.slane %v657, %v663
        %v665 = vcombine.high %v664, 0.0
        %v666 = vcombine.high %v657, 0.0
        %668 = vrot.lane.b32.xlu0 %v645, 10
        %v669 = vpop.permute.xlu0 %668
        %672 = vrot.lane.b32.xlu0 %v629, 20
        %v673 = vpop.permute.xlu0 %672
        %676 = vrot.lane.b32.xlu0 %v646, 30
        %v677 = vpop.permute.xlu0 %676
        %680 = vrot.lane.b32.xlu0 %v637, 40
        %v681 = vpop.permute.xlu0 %680
        %684 = vrot.lane.b32.xlu0 %v647, 50
        %v685 = vpop.permute.xlu0 %684
        %688 = vrot.lane.b32.xlu0 %v644, 60
        %v689 = vpop.permute.xlu0 %688
        %692 = vrot.lane.b32.xlu0 %v648, 70
        %v693 = vpop.permute.xlu0 %692
        %696 = vrot.lane.b32.xlu0 %v664, 80
        %v697 = vpop.permute.xlu0 %696
        %700 = vrot.lane.b32.xlu0 %v665, 90
        %v701 = vpop.permute.xlu0 %700
        %704 = vrot.lane.b32.xlu0 %v666, 100
        %v705 = vpop.permute.xlu0 %704
        %v707 = vsel %vm358, %v622, %v669
        %v708 = vsel %vm360, %v707, %v673
        %v709 = vsel %vm362, %v708, %v677
        %v710 = vsel %vm364, %v709, %v681
        %v711 = vsel %vm366, %v710, %v685
        %v712 = vsel %vm368, %v711, %v689
        %v713 = vsel %vm370, %v712, %v693
        %v714 = vsel %vm372, %v713, %v697
        %v715 = vsel %vm374, %v714, %v701
        %v716 = vsel %vm376, %v715, %v705
        %v717 = vpack.c.bf16 %v716, %v716
        %s718 = scalar_lea.vmem %s234, 4
        %v719 = vld [vmem:[%s718] sm:$0x3]
        %v721 = vsel %vm502, %v719, 0
        %v724 = vand.u32 %v717, %v508
        %726 = vmatprep.subr.bf16.mxu0 0
        %727 = vmatpush1.bf16.msra.mxu0 0
        %728 = vmatprep.subr.bf16.mxu0 0
        %729 = vmatpush1.bf16.msra.mxu0 0
        %730 = vmatprep.subr.bf16.mxu0 0
        %731 = vmatpush1.bf16.msra.mxu0 0
        %732 = vmatprep.subr.bf16.mxu0 0
        %733 = vmatpush1.bf16.msra.mxu0 0
        %734 = vmatprep.subr.bf16.mxu0 0
        %735 = vmatpush1.bf16.msra.mxu0 0
        %736 = vmatprep.subr.bf16.mxu0 0
        %737 = vmatpush1.bf16.msra.mxu0 0
        %738 = vmatprep.subr.bf16.mxu0 0
        %739 = vmatpush1.bf16.msra.mxu0 0
        %740 = vmatprep.subr.bf16.mxu0 0
        %741 = vmatpush1.bf16.msra.mxu0 %v724
        %742 = vmatprep.subr.bf16.mxu0 0
        %743 = vmatpush2.bf16.msra.mxu0 0
        %744 = vmatprep.subr.bf16.mxu0 0
        %745 = vmatpush2.bf16.msra.mxu0 0
        %746 = vmatprep.subr.bf16.mxu0 0
        %747 = vmatpush2.bf16.msra.mxu0 0
        %748 = vmatprep.subr.bf16.mxu0 0
        %749 = vmatpush2.bf16.msra.mxu0 0
        %750 = vmatprep.subr.bf16.mxu0 0
        %751 = vmatpush2.bf16.msra.mxu0 0
        %752 = vmatprep.subr.bf16.mxu0 0
        %753 = vmatpush2.bf16.msra.mxu0 0
        %754 = vmatprep.subr.bf16.mxu0 0
        %755 = vmatpush2.bf16.msra.mxu0 0
        %756 = vmatprep.subr.bf16.mxu0 0
        %757 = vmatpush2.bf16.msra.mxu0 0
        %758 = vmatprep.mubr.bf16.mxu0 0
        %759 = vmatmul.mubr.bf16.gmra.mxu0 %v721
        %v760 = vpop.f32.mrf.mxu0
        %v761 = vadd.f32 0.0, %v760
        %v762 = vpop.f32.mrf.mxu0
        %v763 = vpop.f32.mrf.mxu0
        %v764 = vpop.f32.mrf.mxu0
        %765 = vdwg.mxu0
        %v766 = vadd.f32 %v593, %v761
        %s767 = scalar_lea.vmem %s243, 3
        %v768 = vld [vmem:[%s767] ss:$3 sm:$0xff]
        %v769 = vcombine.high %v768, 0.0
        %v771 = vunpack.c.l.s4 1983009808
        %v772 = vunpack.c.0.s8 %v771
        %v773 = vlaneseq
        %v774 = vshrl.u32 %v773, 7
        %v775 = vsub.s32 %v772, %v774
        %v776 = vrot.slane %v768, %v775
        %v778 = vunpack.c.l.s4 1983009808
        %v779 = vunpack.c.0.s8 %v778
        %v780 = vlaneseq
        %v781 = vshrl.u32 %v780, 7
        %v782 = vsub.s32 %v779, %v781
        %v783 = vrot.slane %v769, %v782
        %v784 = vcombine.high %v776, 0.0
        %v786 = vunpack.c.l.s4 1934713408
        %v787 = vunpack.c.0.s8 %v786
        %v788 = vlaneseq
        %v789 = vshrl.u32 %v788, 7
        %v790 = vsub.s32 %v787, %v789
        %v791 = vrot.slane %v776, %v790
        %v793 = vunpack.c.l.s4 1934713408
        %v794 = vunpack.c.0.s8 %v793
        %v795 = vlaneseq
        %v796 = vshrl.u32 %v795, 7
        %v797 = vsub.s32 %v794, %v796
        %v798 = vrot.slane %v784, %v797
        %v799 = vcombine.high %v783, 0.0
        %v801 = vunpack.c.l.s4 1934713408
        %v802 = vunpack.c.0.s8 %v801
        %v803 = vlaneseq
        %v804 = vshrl.u32 %v803, 7
        %v805 = vsub.s32 %v802, %v804
        %v806 = vrot.slane %v783, %v805
        %v808 = vunpack.c.l.s4 1934713408
        %v809 = vunpack.c.0.s8 %v808
        %v810 = vlaneseq
        %v811 = vshrl.u32 %v810, 7
        %v812 = vsub.s32 %v809, %v811
        %v813 = vrot.slane %v799, %v812
        %v814 = vcombine.high %v791, 0.0
        %v815 = vcombine.high %v798, 0.0
        %v816 = vcombine.high %v806, 0.0
        %v817 = vcombine.high %v813, 0.0
        %s818 = scalar_lea.vmem %s243, 27
        %v819 = vld [vmem:[%s818] ss:$3 sm:$0x7]
        %v821 = vunpack.c.l.s4 1983009808
        %v822 = vunpack.c.0.s8 %v821
        %v823 = vlaneseq
        %v824 = vshrl.u32 %v823, 7
        %v825 = vsub.s32 %v822, %v824
        %v826 = vrot.slane %v819, %v825
        %v828 = vunpack.c.l.s4 1934713408
        %v829 = vunpack.c.0.s8 %v828
        %v830 = vlaneseq
        %v831 = vshrl.u32 %v830, 7
        %v832 = vsub.s32 %v829, %v831
        %v833 = vrot.slane %v826, %v832
        %v834 = vcombine.high %v833, 0.0
        %v835 = vcombine.high %v826, 0.0
        %837 = vrot.lane.b32.xlu0 %v814, 10
        %v838 = vpop.permute.xlu0 %837
        %841 = vrot.lane.b32.xlu0 %v798, 20
        %v842 = vpop.permute.xlu0 %841
        %845 = vrot.lane.b32.xlu0 %v815, 30
        %v846 = vpop.permute.xlu0 %845
        %849 = vrot.lane.b32.xlu0 %v806, 40
        %v850 = vpop.permute.xlu0 %849
        %853 = vrot.lane.b32.xlu0 %v816, 50
        %v854 = vpop.permute.xlu0 %853
        %857 = vrot.lane.b32.xlu0 %v813, 60
        %v858 = vpop.permute.xlu0 %857
        %861 = vrot.lane.b32.xlu0 %v817, 70
        %v862 = vpop.permute.xlu0 %861
        %865 = vrot.lane.b32.xlu0 %v833, 80
        %v866 = vpop.permute.xlu0 %865
        %869 = vrot.lane.b32.xlu0 %v834, 90
        %v870 = vpop.permute.xlu0 %869
        %873 = vrot.lane.b32.xlu0 %v835, 100
        %v874 = vpop.permute.xlu0 %873
        %v876 = vsel %vm358, %v791, %v838
        %v877 = vsel %vm360, %v876, %v842
        %v878 = vsel %vm362, %v877, %v846
        %v879 = vsel %vm364, %v878, %v850
        %v880 = vsel %vm366, %v879, %v854
        %v881 = vsel %vm368, %v880, %v858
        %v882 = vsel %vm370, %v881, %v862
        %v883 = vsel %vm372, %v882, %v866
        %v884 = vsel %vm374, %v883, %v870
        %v885 = vsel %vm376, %v884, %v874
        %v886 = vpack.c.bf16 %v885, %v885
        %s887 = scalar_lea.vmem %s234, 6
        %v888 = vld [vmem:[%s887] sm:$0x3]
        %v890 = vsel %vm502, %v888, 0
        %v893 = vand.u32 %v886, %v508
        %895 = vmatprep.subr.bf16.mxu0 0
        %896 = vmatpush1.bf16.msra.mxu0 0
        %897 = vmatprep.subr.bf16.mxu0 0
        %898 = vmatpush1.bf16.msra.mxu0 0
        %899 = vmatprep.subr.bf16.mxu0 0
        %900 = vmatpush1.bf16.msra.mxu0 0
        %901 = vmatprep.subr.bf16.mxu0 0
        %902 = vmatpush1.bf16.msra.mxu0 0
        %903 = vmatprep.subr.bf16.mxu0 0
        %904 = vmatpush1.bf16.msra.mxu0 0
        %905 = vmatprep.subr.bf16.mxu0 0
        %906 = vmatpush1.bf16.msra.mxu0 0
        %907 = vmatprep.subr.bf16.mxu0 0
        %908 = vmatpush1.bf16.msra.mxu0 0
        %909 = vmatprep.subr.bf16.mxu0 0
        %910 = vmatpush1.bf16.msra.mxu0 %v893
        %911 = vmatprep.subr.bf16.mxu0 0
        %912 = vmatpush2.bf16.msra.mxu0 0
        %913 = vmatprep.subr.bf16.mxu0 0
        %914 = vmatpush2.bf16.msra.mxu0 0
        %915 = vmatprep.subr.bf16.mxu0 0
        %916 = vmatpush2.bf16.msra.mxu0 0
        %917 = vmatprep.subr.bf16.mxu0 0
        %918 = vmatpush2.bf16.msra.mxu0 0
        %919 = vmatprep.subr.bf16.mxu0 0
        %920 = vmatpush2.bf16.msra.mxu0 0
        %921 = vmatprep.subr.bf16.mxu0 0
        %922 = vmatpush2.bf16.msra.mxu0 0
        %923 = vmatprep.subr.bf16.mxu0 0
        %924 = vmatpush2.bf16.msra.mxu0 0
        %925 = vmatprep.subr.bf16.mxu0 0
        %926 = vmatpush2.bf16.msra.mxu0 0
        %927 = vmatprep.mubr.bf16.mxu0 0
        %928 = vmatmul.mubr.bf16.gmra.mxu0 %v890
        %v929 = vpop.f32.mrf.mxu0
        %v930 = vadd.f32 0.0, %v929
        %v931 = vpop.f32.mrf.mxu0
        %v932 = vpop.f32.mrf.mxu0
        %v933 = vpop.f32.mrf.mxu0
        %934 = vdwg.mxu0
        %v935 = vadd.f32 %v766, %v930
        %s936 = scalar_lea.vmem %s243, 4
        %v937 = vld [vmem:[%s936] ss:$3 sm:$0xff]
        %v938 = vcombine.high %v937, 0.0
        %v940 = vunpack.c.l.s4 1983009808
        %v941 = vunpack.c.0.s8 %v940
        %v942 = vlaneseq
        %v943 = vshrl.u32 %v942, 7
        %v944 = vsub.s32 %v941, %v943
        %v945 = vrot.slane %v937, %v944
        %v947 = vunpack.c.l.s4 1983009808
        %v948 = vunpack.c.0.s8 %v947
        %v949 = vlaneseq
        %v950 = vshrl.u32 %v949, 7
        %v951 = vsub.s32 %v948, %v950
        %v952 = vrot.slane %v938, %v951
        %v953 = vcombine.high %v945, 0.0
        %v955 = vunpack.c.l.s4 1934713408
        %v956 = vunpack.c.0.s8 %v955
        %v957 = vlaneseq
        %v958 = vshrl.u32 %v957, 7
        %v959 = vsub.s32 %v956, %v958
        %v960 = vrot.slane %v945, %v959
        %v962 = vunpack.c.l.s4 1934713408
        %v963 = vunpack.c.0.s8 %v962
        %v964 = vlaneseq
        %v965 = vshrl.u32 %v964, 7
        %v966 = vsub.s32 %v963, %v965
        %v967 = vrot.slane %v953, %v966
        %v968 = vcombine.high %v952, 0.0
        %v970 = vunpack.c.l.s4 1934713408
        %v971 = vunpack.c.0.s8 %v970
        %v972 = vlaneseq
        %v973 = vshrl.u32 %v972, 7
        %v974 = vsub.s32 %v971, %v973
        %v975 = vrot.slane %v952, %v974
        %v977 = vunpack.c.l.s4 1934713408
        %v978 = vunpack.c.0.s8 %v977
        %v979 = vlaneseq
        %v980 = vshrl.u32 %v979, 7
        %v981 = vsub.s32 %v978, %v980
        %v982 = vrot.slane %v968, %v981
        %v983 = vcombine.high %v960, 0.0
        %v984 = vcombine.high %v967, 0.0
        %v985 = vcombine.high %v975, 0.0
        %v986 = vcombine.high %v982, 0.0
        %s987 = scalar_lea.vmem %s243, 28
        %v988 = vld [vmem:[%s987] ss:$3 sm:$0x7]
        %v990 = vunpack.c.l.s4 1983009808
        %v991 = vunpack.c.0.s8 %v990
        %v992 = vlaneseq
        %v993 = vshrl.u32 %v992, 7
        %v994 = vsub.s32 %v991, %v993
        %v995 = vrot.slane %v988, %v994
        %v997 = vunpack.c.l.s4 1934713408
        %v998 = vunpack.c.0.s8 %v997
        %v999 = vlaneseq
        %v1000 = vshrl.u32 %v999, 7
        %v1001 = vsub.s32 %v998, %v1000
        %v1002 = vrot.slane %v995, %v1001
        %v1003 = vcombine.high %v1002, 0.0
        %v1004 = vcombine.high %v995, 0.0
        %1006 = vrot.lane.b32.xlu0 %v983, 10
        %v1007 = vpop.permute.xlu0 %1006
        %1010 = vrot.lane.b32.xlu0 %v967, 20
        %v1011 = vpop.permute.xlu0 %1010
        %1014 = vrot.lane.b32.xlu0 %v984, 30
        %v1015 = vpop.permute.xlu0 %1014
        %1018 = vrot.lane.b32.xlu0 %v975, 40
        %v1019 = vpop.permute.xlu0 %1018
        %1022 = vrot.lane.b32.xlu0 %v985, 50
        %v1023 = vpop.permute.xlu0 %1022
        %1026 = vrot.lane.b32.xlu0 %v982, 60
        %v1027 = vpop.permute.xlu0 %1026
        %1030 = vrot.lane.b32.xlu0 %v986, 70
        %v1031 = vpop.permute.xlu0 %1030
        %1034 = vrot.lane.b32.xlu0 %v1002, 80
        %v1035 = vpop.permute.xlu0 %1034
        %1038 = vrot.lane.b32.xlu0 %v1003, 90
        %v1039 = vpop.permute.xlu0 %1038
        %1042 = vrot.lane.b32.xlu0 %v1004, 100
        %v1043 = vpop.permute.xlu0 %1042
        %v1045 = vsel %vm358, %v960, %v1007
        %v1046 = vsel %vm360, %v1045, %v1011
        %v1047 = vsel %vm362, %v1046, %v1015
        %v1048 = vsel %vm364, %v1047, %v1019
        %v1049 = vsel %vm366, %v1048, %v1023
        %v1050 = vsel %vm368, %v1049, %v1027
        %v1051 = vsel %vm370, %v1050, %v1031
        %v1052 = vsel %vm372, %v1051, %v1035
        %v1053 = vsel %vm374, %v1052, %v1039
        %v1054 = vsel %vm376, %v1053, %v1043
        %v1055 = vpack.c.bf16 %v1054, %v1054
        %s1056 = scalar_lea.vmem %s234, 8
        %v1057 = vld [vmem:[%s1056] sm:$0x3]
        %v1059 = vsel %vm502, %v1057, 0
        %v1062 = vand.u32 %v1055, %v508
        %1064 = vmatprep.subr.bf16.mxu0 0
        %1065 = vmatpush1.bf16.msra.mxu0 0
        %1066 = vmatprep.subr.bf16.mxu0 0
        %1067 = vmatpush1.bf16.msra.mxu0 0
        %1068 = vmatprep.subr.bf16.mxu0 0
        %1069 = vmatpush1.bf16.msra.mxu0 0
        %1070 = vmatprep.subr.bf16.mxu0 0
        %1071 = vmatpush1.bf16.msra.mxu0 0
        %1072 = vmatprep.subr.bf16.mxu0 0
        %1073 = vmatpush1.bf16.msra.mxu0 0
        %1074 = vmatprep.subr.bf16.mxu0 0
        %1075 = vmatpush1.bf16.msra.mxu0 0
        %1076 = vmatprep.subr.bf16.mxu0 0
        %1077 = vmatpush1.bf16.msra.mxu0 0
        %1078 = vmatprep.subr.bf16.mxu0 0
        %1079 = vmatpush1.bf16.msra.mxu0 %v1062
        %1080 = vmatprep.subr.bf16.mxu0 0
        %1081 = vmatpush2.bf16.msra.mxu0 0
        %1082 = vmatprep.subr.bf16.mxu0 0
        %1083 = vmatpush2.bf16.msra.mxu0 0
        %1084 = vmatprep.subr.bf16.mxu0 0
        %1085 = vmatpush2.bf16.msra.mxu0 0
        %1086 = vmatprep.subr.bf16.mxu0 0
        %1087 = vmatpush2.bf16.msra.mxu0 0
        %1088 = vmatprep.subr.bf16.mxu0 0
        %1089 = vmatpush2.bf16.msra.mxu0 0
        %1090 = vmatprep.subr.bf16.mxu0 0
        %1091 = vmatpush2.bf16.msra.mxu0 0
        %1092 = vmatprep.subr.bf16.mxu0 0
        %1093 = vmatpush2.bf16.msra.mxu0 0
        %1094 = vmatprep.subr.bf16.mxu0 0
        %1095 = vmatpush2.bf16.msra.mxu0 0
        %1096 = vmatprep.mubr.bf16.mxu0 0
        %1097 = vmatmul.mubr.bf16.gmra.mxu0 %v1059
        %v1098 = vpop.f32.mrf.mxu0
        %v1099 = vadd.f32 0.0, %v1098
        %v1100 = vpop.f32.mrf.mxu0
        %v1101 = vpop.f32.mrf.mxu0
        %v1102 = vpop.f32.mrf.mxu0
        %1103 = vdwg.mxu0
        %v1104 = vadd.f32 %v935, %v1099
        %v1105 = vld [vmem:[%s238] sm:$0xf]
        %1107 = vset.pattern.permute.xlu0 0
        %1108 = vperm.xlu0 %1107, %v1105
        %v1109 = vpop.permute.xlu0 %1108
        %v1111 = vadd.f32 %v1104, %v1109
        %s1112 = sld [smem:[#allocation2 + %s16]]
        %v1113 = vlaneseq
        %v1114 = vand.u32 %v1113, 127
        %s1115 = smul.u32 %s1112, 10
        %v1116 = vstv %s1115
        %vm1117 = vcmp.lt.s32.totalorder %v1114, %v1116
        %v1118 = vsel %vm1117, 1, 0
        %vm1119 = vcmp.eq.s32.totalorder %v1118, 1
        %v1120 = vsel %vm1119, %v1111, 0.0
        %vm1121 = vcmask 74752
        %1122 = vst.msk [vmem:[%s248] sm:$0x3] %vm1121, 0.0
        %1123 = vst.msk [vmem:[%s248 + $0x10] sm:$0x3] %vm1121, 0.0
        %1124 = vst.msk [vmem:[%s248 + $0x20] sm:$0x3] %vm1121, 0.0
        %1125 = vst.msk [vmem:[%s248 + $0x30] sm:$0x3] %vm1121, 0.0
        %1127 = vrot.lane.b32.xlu0 %v1120, 118
        %v1128 = vpop.permute.xlu0 %1127
        %1130 = vrot.lane.b32.xlu0 %v1120, 108
        %v1131 = vpop.permute.xlu0 %1130
        %1133 = vrot.lane.b32.xlu0 %v1120, 98
        %v1134 = vpop.permute.xlu0 %1133
        %1136 = vrot.lane.b32.xlu0 %v1120, 88
        %v1137 = vpop.permute.xlu0 %1136
        %1139 = vrot.lane.b32.xlu0 %v1120, 78
        %v1140 = vpop.permute.xlu0 %1139
        %1142 = vrot.lane.b32.xlu0 %v1120, 68
        %v1143 = vpop.permute.xlu0 %1142
        %1145 = vrot.lane.b32.xlu0 %v1120, 58
        %v1146 = vpop.permute.xlu0 %1145
        %1148 = vrot.lane.b32.xlu0 %v1120, 48
        %v1149 = vpop.permute.xlu0 %1148
        %1151 = vrot.lane.b32.xlu0 %v1120, 38
        %v1152 = vpop.permute.xlu0 %1151
        %1153 = vrot.lane.b32.xlu0 %v1120, 28
        %v1154 = vpop.permute.xlu0 %1153
        %v1156 = vcombine.low %v1120, %v1131
        %v1158 = vunpack.c.l.s4 1983009808
        %v1159 = vunpack.c.0.s8 %v1158
        %v1160 = vlaneseq
        %v1161 = vshrl.u32 %v1160, 7
        %v1162 = vsub.s32 %v1159, %v1161
        %v1163 = vrot.slane %v1156, %v1162
        %v1164 = vcombine.low %v1128, %v1134
        %v1166 = vunpack.c.l.s4 1983009808
        %v1167 = vunpack.c.0.s8 %v1166
        %v1168 = vlaneseq
        %v1169 = vshrl.u32 %v1168, 7
        %v1170 = vsub.s32 %v1167, %v1169
        %v1171 = vrot.slane %v1164, %v1170
        %v1172 = vcombine.low %v1137, %v1143
        %v1174 = vunpack.c.l.s4 1983009808
        %v1175 = vunpack.c.0.s8 %v1174
        %v1176 = vlaneseq
        %v1177 = vshrl.u32 %v1176, 7
        %v1178 = vsub.s32 %v1175, %v1177
        %v1179 = vrot.slane %v1172, %v1178
        %v1180 = vcombine.low %v1140, %v1146
        %v1182 = vunpack.c.l.s4 1983009808
        %v1183 = vunpack.c.0.s8 %v1182
        %v1184 = vlaneseq
        %v1185 = vshrl.u32 %v1184, 7
        %v1186 = vsub.s32 %v1183, %v1185
        %v1187 = vrot.slane %v1180, %v1186
        %v1188 = vcombine.low %v1163, %v1171
        %v1189 = vcombine.high %v1163, %v1171
        %v1191 = vunpack.c.l.s4 1934713408
        %v1192 = vunpack.c.0.s8 %v1191
        %v1193 = vlaneseq
        %v1194 = vshrl.u32 %v1193, 7
        %v1195 = vsub.s32 %v1192, %v1194
        %v1196 = vrot.slane %v1188, %v1195
        %v1198 = vunpack.c.l.s4 1934713408
        %v1199 = vunpack.c.0.s8 %v1198
        %v1200 = vlaneseq
        %v1201 = vshrl.u32 %v1200, 7
        %v1202 = vsub.s32 %v1199, %v1201
        %v1203 = vrot.slane %v1189, %v1202
        %v1204 = vcombine.low %v1179, %v1187
        %v1205 = vcombine.high %v1179, %v1187
        %v1207 = vunpack.c.l.s4 1934713408
        %v1208 = vunpack.c.0.s8 %v1207
        %v1209 = vlaneseq
        %v1210 = vshrl.u32 %v1209, 7
        %v1211 = vsub.s32 %v1208, %v1210
        %v1212 = vrot.slane %v1204, %v1211
        %v1214 = vunpack.c.l.s4 1934713408
        %v1215 = vunpack.c.0.s8 %v1214
        %v1216 = vlaneseq
        %v1217 = vshrl.u32 %v1216, 7
        %v1218 = vsub.s32 %v1215, %v1217
        %v1219 = vrot.slane %v1205, %v1218
        %v1220 = vcombine.low %v1196, %v1212
        %v1221 = vcombine.high %v1196, %v1212
        %v1222 = vcombine.low %v1203, %v1219
        %v1223 = vcombine.high %v1203, %v1219
        %v1224 = vcombine.low %v1149, %v1154
        %v1226 = vunpack.c.l.s4 1983009808
        %v1227 = vunpack.c.0.s8 %v1226
        %v1228 = vlaneseq
        %v1229 = vshrl.u32 %v1228, 7
        %v1230 = vsub.s32 %v1227, %v1229
        %v1231 = vrot.slane %v1224, %v1230
        %v1234 = vunpack.c.l.s4 1983009808
        %v1235 = vunpack.c.0.s8 %v1234
        %v1236 = vlaneseq
        %v1237 = vshrl.u32 %v1236, 7
        %v1238 = vsub.s32 %v1235, %v1237
        %v1239 = vrot.slane %v1152, %v1238
        %v1240 = vcombine.low %v1231, %v1239
        %v1241 = vcombine.high %v1231, %v1239
        %v1243 = vunpack.c.l.s4 1934713408
        %v1244 = vunpack.c.0.s8 %v1243
        %v1245 = vlaneseq
        %v1246 = vshrl.u32 %v1245, 7
        %v1247 = vsub.s32 %v1244, %v1246
        %v1248 = vrot.slane %v1240, %v1247
        %v1250 = vunpack.c.l.s4 1934713408
        %v1251 = vunpack.c.0.s8 %v1250
        %v1252 = vlaneseq
        %v1253 = vshrl.u32 %v1252, 7
        %v1254 = vsub.s32 %v1251, %v1253
        %v1255 = vrot.slane %v1241, %v1254
        %v1256 = vcombine.high %v1248, 0.0
        %v1257 = vcombine.high %v1255, 0.0
        %1258 = vst.msk [vmem:[%s248 + $0x2] sm:$0xff] %vm358, %v1220
        %vm1259 = vcmask 75776
        %1260 = vst.msk [vmem:[%s248 + $0xa] sm:$0x7] %vm1259, %v1248
        %1261 = vst.msk [vmem:[%s248 + $0x12] sm:$0xff] %vm358, %v1221
        %1262 = vst.msk [vmem:[%s248 + $0x1a] sm:$0x7] %vm1259, %v1256
        %1263 = vst.msk [vmem:[%s248 + $0x22] sm:$0xff] %vm358, %v1222
        %1264 = vst.msk [vmem:[%s248 + $0x2a] sm:$0x7] %vm1259, %v1255
        %1265 = vst.msk [vmem:[%s248 + $0x32] sm:$0xff] %vm358, %v1223
        %1266 = vst.msk [vmem:[%s248 + $0x3a] sm:$0x7] %vm1259, %v1257
        %1267 = vst.msk [vmem:[%s248 + $0xd] sm:$0x3] %vm1121, 0.0
        %1268 = vst.msk [vmem:[%s248 + $0x1d] sm:$0x3] %vm1121, 0.0
        %1269 = vst.msk [vmem:[%s248 + $0x2d] sm:$0x3] %vm1121, 0.0
        %1270 = vst.msk [vmem:[%s248 + $0x3d] sm:$0x3] %vm1121, 0.0
        %p1271 = scmp.lt.s32.totalorder %s16, 2
        %s1272 = scalar_select %p1271, %s16, 2
        %s1273 = smul.addr %s1272, 8
        %s1274 = smul.addr %s1273, 8
        %s1275 = scalar_lea.vmem %s4, %s1274
        // Predicated region
        $region41: #{multi_period_discriminator.4} parent=35 // pred_check
          %p1276 = pneg %p133
        $region42: #{multi_period_discriminator.4} parent=35 // pred_check_branch
          %1278 = sbr.rel (%p1276) target = $region44
        $region43: #{multi_period_discriminator.4} parent=35 // pred_region
          _
        $region44: #{multi_period_discriminator.4} parent=35 // pred_fallthru
          _
      $region36: #{multi_period_discriminator.4} parent=5 // pred_fallthru
        _
      %p1279 = scmp.le.s32.totalorder 2, %s11
      // Predicated region
      $region45: #{multi_period_discriminator.4} parent=5 // pred_check
        %p1280 = pneg %p1279
      $region46: #{multi_period_discriminator.4} parent=5 // pred_check_branch
        %1282 = sbr.rel (%p1280) target = $region48
      $region47: #{multi_period_discriminator.4} parent=5 // pred_region
        %s1283 = ssub.s32 %s11, 2
        // Predicated region
        $region49: #{multi_period_discriminator.4} parent=47 // pred_check
          %p1284 = pneg %p139
        $region50: #{multi_period_discriminator.4} parent=47 // pred_check_branch
          %1286 = sbr.rel (%p1284) target = $region52
        $region51: #{multi_period_discriminator.4} parent=47 // pred_region
          %p1287 = scmp.lt.s32.totalorder %s17, 2
          %s1288 = scalar_select %p1287, %s17, 2
          %s1289 = smul.addr %s1288, 8
          %s1290 = smul.addr %s1289, 8
          %s1291 = scalar_lea.vmem %s4, %s1290
        $region52: #{multi_period_discriminator.4} parent=47 // pred_fallthru
          _
      $region48: #{multi_period_discriminator.4} parent=5 // pred_fallthru
        _
    $region6: #{multi_period_discriminator.4} parent=1 // loop_footer
      %s15 = sadd.s32 1, %s11
    $region7: #{multi_period_discriminator.4} parent=1 // loop_footer_branch
      %10 = sbr.rel target = $region3
    $region8: #{multi_period_discriminator.4} parent=1 // loop_exit
      _
    %1292 = vsyncpa [#allocation3], 1
    %s1293 = scalar_lea.sflag [#allocation3], 1
    %1294 = vsyncpa %s1293, 1

// kernel: squeeze.23
$region0: #{squeeze.23}
  %s0 = inlined_call_operand.vmem [shape: f32[10], index: 0, kind: input, shape index: {}]
  %s1 = inlined_call_operand.hbm [shape: f32[1,2,1,5], index: 1, kind: output, shape index: {}]
  $region1: #{squeeze.23} parent=0
    #allocation0 [shape = 'u8[1024]{0}', space=vmem, size = 0x400, scoped, tag = 'operand span for operand 1']
    #allocation1 [shape = 's32[1]{0}', space=sflag, size = 0x4, scoped, tag = 'scoped memory for squeeze.23']
    #allocation2 [shape = 'u8[4096]{0}', space=vmem, size = 0x1000, scoped, tag = 'scoped mem for output reshape']
    #allocation3 [shape = 'u8[4096]{0}', space=vmem, size = 0x1000, scoped, tag = 'scoped mem for input reshape']
    %2 = vsyncpa [#allocation1], 0
    %s4 = sshll.u32 1, 1
    %s5 = ssub.s32 %s4, 1
    %v6 = vld [vmem:[%s0] sm:%s5]
    %7 = vst [vmem:[#allocation3] sm:%s5] %v6
    %v8 = vld [vmem:[#allocation3] sm:$0x1]
    %vm9 = vcmask 39936
    %10 = vst.msk [vmem:[#allocation2] sm:$0x1] %vm9, %v8
    %v11 = vld [vmem:[#allocation3] sm:$0x1]
    %12 = vrot.lane.b32.xlu0 %v11, 123
    %v13 = vpop.permute.xlu0 %12
    %vm14 = vcmask 39936
    %s15 = scalar_lea.vmem [#allocation2], 1
    %16 = vst.msk [vmem:[%s15] sm:$0x1] %vm14, %v13
    %s18 = sshll.u32 1, 2
    %s19 = ssub.s32 %s18, 1
    %v21 = vld [vmem:[#allocation2] sm:%s19]
    %s22 = sshll.u32 1, 2
    %s23 = ssub.s32 %s22, 1
    %24 = vst [vmem:[#allocation0] sm:%s23] %v21
    %s26 = ssub.s32 32, 32
    %27 = vsyncadd [#allocation1], %s26
    %s29 = sshll.u32 [#allocation0], 4
    %s30 = int_to_ptr.vmem [resolvable:$true] %s29
    %32 = dma.vmem_to_hbm [thread:$0]  %s30, 32, %s1, [#allocation1]
    %33 = dma.done [#allocation1], 32
    %34 = vsyncpa [#allocation1], 1

// kernel: multi_period_discriminator.6
$region0: #{multi_period_discriminator.6}
  #allocation0 [shape = 'u32[]', space=smem, size = 0x4, offset = 0x4, fixed_abs, tag = 'smem constant byte address 0x4 - core index']
  #allocation1 [shape = 'u32[144,128]{1,0:T(1,128)}', space=vmem, size = 0x12000, scoped, tag = 'internal scratch']
  %s0 = inlined_call_operand.vmem [shape: s32[3], index: 0, kind: input, shape index: {}]
  %s1 = inlined_call_operand.vmem [shape: bf16[3,5,16,8], index: 1, kind: input, shape index: {}]
  %s2 = inlined_call_operand.vmem [shape: f32[3,16,1], index: 2, kind: input, shape index: {}]
  %s3 = inlined_call_operand.vmem [shape: f32[3,8,8,10], index: 3, kind: input, shape index: {}]
  %s4 = inlined_call_operand.vmem [shape: f32[3,16,2,10], index: 4, kind: output, shape index: {}]
  %s5 = sld [smem:[#allocation0]]
  $region53: #{multi_period_discriminator.6} parent=0
    _
  %s7 = ssub.s32 1, %s5
  %s8 = scalar_select 0, %s7, %s5
  $region1: #{multi_period_discriminator.6} parent=0
    #allocation2 [shape = 'u8[512]{0}', space=smem, size = 0x200, scoped, tag = 'input window, operand 0, single buffered']
    #allocation3 [shape = 's32[2]{0}', space=sflag, size = 0x8, scoped, tag = 'scoped memory for multi_period_discriminator.6']
    %9 = vsyncpa [#allocation3], 0
    loop: start=0, step=1, limit=5
    $region2: #{multi_period_discriminator.6} parent=1 // loop_pre_header
      _
    $region3: #{multi_period_discriminator.6} parent=1 // loop_header
      %s11 = sphi 0, %s15
      %p12 = scmp.ge.s32.totalorder %s11, 5
      %s19 = sphi 0, %s19
      %s21 = sphi 0, %s19
      %s22 = sphi 0, %s21
      %s36 = sphi 0, %s22
      %s42 = sphi 0, %s44
      %s45 = sphi 0, %s42
      %s46 = sphi 0, %s45
      %s62 = sphi 0, %s46
      %s68 = sphi 0, %s70
      %s71 = sphi 0, %s68
      %s72 = sphi 0, %s71
      %s88 = sphi 0, %s72
      %s94 = sphi 0, %s96
      %s97 = sphi 0, %s94
      %s98 = sphi 0, %s97
      %s114 = sphi 0, %s98
      %s120 = sphi 0, %s122
      %s123 = sphi 0, %s120
      %s124 = sphi 0, %s123
      %s140 = sphi 0, %s124
    $region4: #{multi_period_discriminator.6} parent=1 // loop_header_branch
      %14 = sbr.rel (%p12) target = $region8
    $region5: #{multi_period_discriminator.6} parent=1 // loop_body
      %s16 = ssub.s32 %s11, 1
      %s17 = ssub.s32 %s11, 2
      %s18 = sadd.s32 %s11, 1
      %s20 = sadd.s32 %s19, 1
      %p23 = scmp.eq.s32.totalorder %s11, 2
      %p24 = scmp.ne.s32.totalorder %s19, %s21
      %p25 = scmp.eq.s32.totalorder %s11, 0
      %p26 = por %p24, %p25
      %p27 = scmp.ne.s32.totalorder %s19, %s21
      %p28 = scmp.eq.s32.totalorder %s16, 2
      %p29 = por %p27, %p28
      %p30 = scmp.ne.s32.totalorder %s21, %s22
      %p31 = scmp.eq.s32.totalorder %s16, 0
      %p32 = por %p30, %p31
      %p33 = scmp.ne.s32.totalorder %s21, %s22
      %p34 = scmp.eq.s32.totalorder %s17, 2
      %p35 = por %p33, %p34
      %p37 = scmp.ne.s32.totalorder %s22, %s36
      %p38 = scmp.eq.s32.totalorder %s17, 0
      %p39 = por %p37, %p38
      %s40 = ssub.s32 %s11, %s18
      %p41 = scmp.eq.s32.totalorder %s40, 0
      %s43 = sadd.s32 %s42, 1
      %s44 = scalar_select %p41, %s42, %s43
      %p47 = pneg %p41
      %p48 = scmp.eq.s32.totalorder %s11, 2
      %p49 = por %p47, %p48
      %p50 = scmp.ne.s32.totalorder %s42, %s45
      %p51 = scmp.eq.s32.totalorder %s11, 0
      %p52 = por %p50, %p51
      %p53 = scmp.ne.s32.totalorder %s42, %s45
      %p54 = scmp.eq.s32.totalorder %s16, 2
      %p55 = por %p53, %p54
      %p56 = scmp.ne.s32.totalorder %s45, %s46
      %p57 = scmp.eq.s32.totalorder %s16, 0
      %p58 = por %p56, %p57
      %p59 = scmp.ne.s32.totalorder %s45, %s46
      %p60 = scmp.eq.s32.totalorder %s17, 2
      %p61 = por %p59, %p60
      %p63 = scmp.ne.s32.totalorder %s46, %s62
      %p64 = scmp.eq.s32.totalorder %s17, 0
      %p65 = por %p63, %p64
      %s66 = ssub.s32 %s11, %s18
      %p67 = scmp.eq.s32.totalorder %s66, 0
      %s69 = sadd.s32 %s68, 1
      %s70 = scalar_select %p67, %s68, %s69
      %p73 = pneg %p67
      %p74 = scmp.eq.s32.totalorder %s11, 2
      %p75 = por %p73, %p74
      %p76 = scmp.ne.s32.totalorder %s68, %s71
      %p77 = scmp.eq.s32.totalorder %s11, 0
      %p78 = por %p76, %p77
      %p79 = scmp.ne.s32.totalorder %s68, %s71
      %p80 = scmp.eq.s32.totalorder %s16, 2
      %p81 = por %p79, %p80
      %p82 = scmp.ne.s32.totalorder %s71, %s72
      %p83 = scmp.eq.s32.totalorder %s16, 0
      %p84 = por %p82, %p83
      %p85 = scmp.ne.s32.totalorder %s71, %s72
      %p86 = scmp.eq.s32.totalorder %s17, 2
      %p87 = por %p85, %p86
      %p89 = scmp.ne.s32.totalorder %s72, %s88
      %p90 = scmp.eq.s32.totalorder %s17, 0
      %p91 = por %p89, %p90
      %s92 = ssub.s32 %s11, %s18
      %p93 = scmp.eq.s32.totalorder %s92, 0
      %s95 = sadd.s32 %s94, 1
      %s96 = scalar_select %p93, %s94, %s95
      %p99 = pneg %p93
      %p100 = scmp.eq.s32.totalorder %s11, 2
      %p101 = por %p99, %p100
      %p102 = scmp.ne.s32.totalorder %s94, %s97
      %p103 = scmp.eq.s32.totalorder %s11, 0
      %p104 = por %p102, %p103
      %p105 = scmp.ne.s32.totalorder %s94, %s97
      %p106 = scmp.eq.s32.totalorder %s16, 2
      %p107 = por %p105, %p106
      %p108 = scmp.ne.s32.totalorder %s97, %s98
      %p109 = scmp.eq.s32.totalorder %s16, 0
      %p110 = por %p108, %p109
      %p111 = scmp.ne.s32.totalorder %s97, %s98
      %p112 = scmp.eq.s32.totalorder %s17, 2
      %p113 = por %p111, %p112
      %p115 = scmp.ne.s32.totalorder %s98, %s114
      %p116 = scmp.eq.s32.totalorder %s17, 0
      %p117 = por %p115, %p116
      %s118 = ssub.s32 %s11, %s18
      %p119 = scmp.eq.s32.totalorder %s118, 0
      %s121 = sadd.s32 %s120, 1
      %s122 = scalar_select %p119, %s120, %s121
      %p125 = pneg %p119
      %p126 = scmp.eq.s32.totalorder %s11, 2
      %p127 = por %p125, %p126
      %p128 = scmp.ne.s32.totalorder %s120, %s123
      %p129 = scmp.eq.s32.totalorder %s11, 0
      %p130 = por %p128, %p129
      %p131 = scmp.ne.s32.totalorder %s120, %s123
      %p132 = scmp.eq.s32.totalorder %s16, 2
      %p133 = por %p131, %p132
      %p134 = scmp.ne.s32.totalorder %s123, %s124
      %p135 = scmp.eq.s32.totalorder %s16, 0
      %p136 = por %p134, %p135
      %p137 = scmp.ne.s32.totalorder %s123, %s124
      %p138 = scmp.eq.s32.totalorder %s17, 2
      %p139 = por %p137, %p138
      %p141 = scmp.ne.s32.totalorder %s124, %s140
      %p142 = scmp.eq.s32.totalorder %s17, 0
      %p143 = por %p141, %p142
      %p144 = scmp.le.s32.totalorder 1, %s11
      %p145 = scmp.lt.s32.totalorder %s11, 4
      %p146 = pnand %p144, %p145
      %p147 = pneg %p146
      // Predicated region
      $region9: #{multi_period_discriminator.6} parent=5 // pred_check
        _
      $region10: #{multi_period_discriminator.6} parent=5 // pred_check_branch
        %149 = sbr.rel (%p146) target = $region12
      $region11: #{multi_period_discriminator.6} parent=5 // pred_region
        %s150 = ssub.s32 %s11, 1
        // Predicated region
        $region13: #{multi_period_discriminator.6} parent=11 // pred_check
          %p151 = pneg %p32
        $region14: #{multi_period_discriminator.6} parent=11 // pred_check_branch
          %153 = sbr.rel (%p151) target = $region16
        $region15: #{multi_period_discriminator.6} parent=11 // pred_region
          %s155 = ssub.s32 16, 16
          %156 = vsyncadd [#allocation3], %s155
          %s158 = sshll.u32 %s0, 4
          %s159 = int_to_ptr.vmem [resolvable:$true] %s158
          %161 = dma.vmem_to_smem %s159, 16, [#allocation2], [#allocation3]
        $region16: #{multi_period_discriminator.6} parent=11 // pred_fallthru
          _
      $region12: #{multi_period_discriminator.6} parent=5 // pred_fallthru
        _
      %p162 = scmp.lt.s32.totalorder %s11, 3
      // Predicated region
      $region17: #{multi_period_discriminator.6} parent=5 // pred_check
        %p163 = pneg %p162
      $region18: #{multi_period_discriminator.6} parent=5 // pred_check_branch
        %165 = sbr.rel (%p163) target = $region20
      $region19: #{multi_period_discriminator.6} parent=5 // pred_region
        // Predicated region
        $region21: #{multi_period_discriminator.6} parent=19 // pred_check
          %p166 = pneg %p52
        $region22: #{multi_period_discriminator.6} parent=19 // pred_check_branch
          %168 = sbr.rel (%p166) target = $region24
        $region23: #{multi_period_discriminator.6} parent=19 // pred_region
          %p169 = scmp.lt.s32.totalorder %s11, 2
          %s170 = scalar_select %p169, %s11, 2
          %s171 = smul.addr %s170, 10
          %s172 = smul.addr %s171, 4
          %s173 = scalar_lea.vmem %s1, %s172
        $region24: #{multi_period_discriminator.6} parent=19 // pred_fallthru
          _
        // Predicated region
        $region25: #{multi_period_discriminator.6} parent=19 // pred_check
          %p174 = pneg %p78
        $region26: #{multi_period_discriminator.6} parent=19 // pred_check_branch
          %176 = sbr.rel (%p174) target = $region28
        $region27: #{multi_period_discriminator.6} parent=19 // pred_region
          %p177 = scmp.lt.s32.totalorder %s11, 2
          %s178 = scalar_select %p177, %s11, 2
          %s179 = smul.addr %s178, 2
          %s180 = smul.addr %s179, 8
          %s181 = scalar_lea.vmem %s2, %s180
        $region28: #{multi_period_discriminator.6} parent=19 // pred_fallthru
          _
        // Predicated region
        $region29: #{multi_period_discriminator.6} parent=19 // pred_check
          %p182 = pneg %p104
        $region30: #{multi_period_discriminator.6} parent=19 // pred_check_branch
          %184 = sbr.rel (%p182) target = $region32
        $region31: #{multi_period_discriminator.6} parent=19 // pred_region
          %p185 = scmp.lt.s32.totalorder %s11, 2
          %s186 = scalar_select %p185, %s11, 2
          %s187 = smul.addr %s186, 8
          %s188 = smul.addr %s187, 8
          %s189 = scalar_lea.vmem %s3, %s188
        $region32: #{multi_period_discriminator.6} parent=19 // pred_fallthru
          _
      $region20: #{multi_period_discriminator.6} parent=5 // pred_fallthru
        _
      %p190 = scmp.le.s32.totalorder 1, %s11
      %p191 = scmp.lt.s32.totalorder %s11, 4
      %p192 = pnand %p190, %p191
      %p193 = pneg %p192
      // Predicated region
      $region33: #{multi_period_discriminator.6} parent=5 // pred_check
        _
      $region34: #{multi_period_discriminator.6} parent=5 // pred_check_branch
        %195 = sbr.rel (%p192) target = $region36
      $region35: #{multi_period_discriminator.6} parent=5 // pred_region
        %s196 = ssub.s32 %s11, 1
        // Predicated region
        $region37: #{multi_period_discriminator.6} parent=35 // pred_check
          %p197 = pneg %p32
        $region38: #{multi_period_discriminator.6} parent=35 // pred_check_branch
          %199 = sbr.rel (%p197) target = $region40
        $region39: #{multi_period_discriminator.6} parent=35 // pred_region
          %200 = dma.done [#allocation3], 16
        $region40: #{multi_period_discriminator.6} parent=35 // pred_fallthru
          _
        %201 = sfence
        %p202 = pneg %p32
        %p203 = pneg %p29
        %p204 = scmp.lt.s32.totalorder %s16, 2
        %s205 = scalar_select %p204, %s16, 2
        %s206 = smul.addr %s205, 10
        %s207 = smul.addr %s206, 4
        %s208 = scalar_lea.vmem %s1, %s207
        %p209 = pneg %p58
        %p210 = pneg %p55
        %p211 = scmp.lt.s32.totalorder %s16, 2
        %s212 = scalar_select %p211, %s16, 2
        %s213 = smul.addr %s212, 2
        %s214 = smul.addr %s213, 8
        %s215 = scalar_lea.vmem %s2, %s214
        %p216 = pneg %p84
        %p217 = pneg %p81
        %p218 = scmp.lt.s32.totalorder %s16, 2
        %s219 = scalar_select %p218, %s16, 2
        %s220 = smul.addr %s219, 8
        %s221 = smul.addr %s220, 8
        %s222 = scalar_lea.vmem %s3, %s221
        %p223 = pneg %p110
        %p224 = pneg %p107
        %p225 = pneg %p136
        %p226 = pneg %p133
        %p227 = scmp.lt.s32.totalorder %s16, 2
        %s228 = scalar_select %p227, %s16, 2
        %s229 = smul.addr %s228, 16
        %s230 = smul.addr %s229, 2
        %s231 = scalar_lea.vmem %s4, %s230
        %p232 = scmp.lt.s32.totalorder %s16, 2
        %s233 = scalar_select %p232, %s16, 2
        %s234 = smul.addr %s233, 10
        %s235 = smul.addr %s234, 4
        %s236 = scalar_lea.vmem %s1, %s235
        %p237 = scmp.lt.s32.totalorder %s16, 2
        %s238 = scalar_select %p237, %s16, 2
        %s239 = smul.addr %s238, 2
        %s240 = smul.addr %s239, 8
        %s241 = scalar_lea.vmem %s2, %s240
        %p242 = scmp.lt.s32.totalorder %s16, 2
        %s243 = scalar_select %p242, %s16, 2
        %s244 = smul.addr %s243, 8
        %s245 = smul.addr %s244, 8
        %s246 = scalar_lea.vmem %s3, %s245
        %p247 = scmp.lt.s32.totalorder %s16, 2
        %s248 = scalar_select %p247, %s16, 2
        %s249 = smul.addr %s248, 16
        %s250 = smul.addr %s249, 2
        %s251 = scalar_lea.vmem %s4, %s250
        %v253 = vld [vmem:[%s246] ss:$3 sm:$0x3]
        %s254 = scalar_lea.vmem %s246, 8
        %v255 = vld [vmem:[%s254] ss:$3 sm:$0x3]
        %s256 = scalar_lea.vmem %s246, 16
        %v257 = vld [vmem:[%s256] ss:$3 sm:$0x3]
        %s258 = scalar_lea.vmem %s246, 24
        %v259 = vld [vmem:[%s258] ss:$3 sm:$0x3]
        %s260 = scalar_lea.vmem %s246, 32
        %v261 = vld [vmem:[%s260] ss:$3 sm:$0x3]
        %s262 = scalar_lea.vmem %s246, 40
        %v263 = vld [vmem:[%s262] ss:$3 sm:$0x3]
        %s264 = scalar_lea.vmem %s246, 48
        %v265 = vld [vmem:[%s264] ss:$3 sm:$0x3]
        %s266 = scalar_lea.vmem %s246, 56
        %v267 = vld [vmem:[%s266] ss:$3 sm:$0x3]
        %v268 = vmul.f32 %v253, 0.2
        %v269 = vmul.f32 %v255, 0.2
        %v270 = vmul.f32 %v257, 0.2
        %v271 = vmul.f32 %v259, 0.2
        %v272 = vmul.f32 %v261, 0.2
        %v273 = vmul.f32 %v263, 0.2
        %v274 = vmul.f32 %v265, 0.2
        %v275 = vmul.f32 %v267, 0.2
        %v276 = vmax.f32 %v253, %v268
        %v277 = vmax.f32 %v255, %v269
        %v278 = vmax.f32 %v257, %v270
        %v279 = vmax.f32 %v259, %v271
        %v280 = vmax.f32 %v261, %v272
        %v281 = vmax.f32 %v263, %v273
        %v282 = vmax.f32 %v265, %v274
        %v283 = vmax.f32 %v267, %v275
        %v284 = vcombine.low %v276, %v278
        %v286 = vunpack.c.l.s4 1983009808
        %v287 = vunpack.c.0.s8 %v286
        %v288 = vlaneseq
        %v289 = vshrl.u32 %v288, 7
        %v290 = vsub.s32 %v287, %v289
        %v291 = vrot.slane %v284, %v290
        %v292 = vcombine.low %v277, %v279
        %v294 = vunpack.c.l.s4 1983009808
        %v295 = vunpack.c.0.s8 %v294
        %v296 = vlaneseq
        %v297 = vshrl.u32 %v296, 7
        %v298 = vsub.s32 %v295, %v297
        %v299 = vrot.slane %v292, %v298
        %v300 = vcombine.low %v280, %v282
        %v302 = vunpack.c.l.s4 1983009808
        %v303 = vunpack.c.0.s8 %v302
        %v304 = vlaneseq
        %v305 = vshrl.u32 %v304, 7
        %v306 = vsub.s32 %v303, %v305
        %v307 = vrot.slane %v300, %v306
        %v308 = vcombine.low %v281, %v283
        %v310 = vunpack.c.l.s4 1983009808
        %v311 = vunpack.c.0.s8 %v310
        %v312 = vlaneseq
        %v313 = vshrl.u32 %v312, 7
        %v314 = vsub.s32 %v311, %v313
        %v315 = vrot.slane %v308, %v314
        %v316 = vcombine.low %v291, %v299
        %v318 = vunpack.c.l.s4 1934713408
        %v319 = vunpack.c.0.s8 %v318
        %v320 = vlaneseq
        %v321 = vshrl.u32 %v320, 7
        %v322 = vsub.s32 %v319, %v321
        %v323 = vrot.slane %v316, %v322
        %v324 = vcombine.low %v307, %v315
        %v326 = vunpack.c.l.s4 1934713408
        %v327 = vunpack.c.0.s8 %v326
        %v328 = vlaneseq
        %v329 = vshrl.u32 %v328, 7
        %v330 = vsub.s32 %v327, %v329
        %v331 = vrot.slane %v324, %v330
        %v332 = vcombine.low %v323, %v331
        %v333 = vcombine.high %v323, %v331
        %335 = vrot.lane.b32.xlu0 %v333, 10
        %v336 = vpop.permute.xlu0 %335
        %vm338 = vcmask 80896
        %v339 = vsel %vm338, %v332, %v336
        %v340 = vpack.c.bf16 %v339, %v339
        %v341 = vld [vmem:[%s236] sm:$0xf]
        %v342 = vld [vmem:[%s236 + $0x4] sm:$0xf]
        %s343 = scalar_lea.vmem %s246, 1
        %v344 = vld [vmem:[%s343] ss:$3 sm:$0x3]
        %s345 = scalar_lea.vmem %s246, 9
        %v346 = vld [vmem:[%s345] ss:$3 sm:$0x3]
        %s347 = scalar_lea.vmem %s246, 17
        %v348 = vld [vmem:[%s347] ss:$3 sm:$0x3]
        %s349 = scalar_lea.vmem %s246, 25
        %v350 = vld [vmem:[%s349] ss:$3 sm:$0x3]
        %s351 = scalar_lea.vmem %s246, 33
        %v352 = vld [vmem:[%s351] ss:$3 sm:$0x3]
        %s353 = scalar_lea.vmem %s246, 41
        %v354 = vld [vmem:[%s353] ss:$3 sm:$0x3]
        %s355 = scalar_lea.vmem %s246, 49
        %v356 = vld [vmem:[%s355] ss:$3 sm:$0x3]
        %s357 = scalar_lea.vmem %s246, 57
        %v358 = vld [vmem:[%s357] ss:$3 sm:$0x3]
        %v359 = vmul.f32 %v344, 0.2
        %v360 = vmul.f32 %v346, 0.2
        %v361 = vmul.f32 %v348, 0.2
        %v362 = vmul.f32 %v350, 0.2
        %v363 = vmul.f32 %v352, 0.2
        %v364 = vmul.f32 %v354, 0.2
        %v365 = vmul.f32 %v356, 0.2
        %v366 = vmul.f32 %v358, 0.2
        %v367 = vmax.f32 %v344, %v359
        %v368 = vmax.f32 %v346, %v360
        %v369 = vmax.f32 %v348, %v361
        %v370 = vmax.f32 %v350, %v362
        %v371 = vmax.f32 %v352, %v363
        %v372 = vmax.f32 %v354, %v364
        %v373 = vmax.f32 %v356, %v365
        %v374 = vmax.f32 %v358, %v366
        %v375 = vcombine.low %v367, %v369
        %v377 = vunpack.c.l.s4 1983009808
        %v378 = vunpack.c.0.s8 %v377
        %v379 = vlaneseq
        %v380 = vshrl.u32 %v379, 7
        %v381 = vsub.s32 %v378, %v380
        %v382 = vrot.slane %v375, %v381
        %v383 = vcombine.low %v368, %v370
        %v385 = vunpack.c.l.s4 1983009808
        %v386 = vunpack.c.0.s8 %v385
        %v387 = vlaneseq
        %v388 = vshrl.u32 %v387, 7
        %v389 = vsub.s32 %v386, %v388
        %v390 = vrot.slane %v383, %v389
        %v391 = vcombine.low %v371, %v373
        %v393 = vunpack.c.l.s4 1983009808
        %v394 = vunpack.c.0.s8 %v393
        %v395 = vlaneseq
        %v396 = vshrl.u32 %v395, 7
        %v397 = vsub.s32 %v394, %v396
        %v398 = vrot.slane %v391, %v397
        %v399 = vcombine.low %v372, %v374
        %v401 = vunpack.c.l.s4 1983009808
        %v402 = vunpack.c.0.s8 %v401
        %v403 = vlaneseq
        %v404 = vshrl.u32 %v403, 7
        %v405 = vsub.s32 %v402, %v404
        %v406 = vrot.slane %v399, %v405
        %v407 = vcombine.low %v382, %v390
        %v409 = vunpack.c.l.s4 1934713408
        %v410 = vunpack.c.0.s8 %v409
        %v411 = vlaneseq
        %v412 = vshrl.u32 %v411, 7
        %v413 = vsub.s32 %v410, %v412
        %v414 = vrot.slane %v407, %v413
        %v415 = vcombine.low %v398, %v406
        %v417 = vunpack.c.l.s4 1934713408
        %v418 = vunpack.c.0.s8 %v417
        %v419 = vlaneseq
        %v420 = vshrl.u32 %v419, 7
        %v421 = vsub.s32 %v418, %v420
        %v422 = vrot.slane %v415, %v421
        %v423 = vcombine.low %v414, %v422
        %v424 = vcombine.high %v414, %v422
        %426 = vrot.lane.b32.xlu0 %v424, 10
        %v427 = vpop.permute.xlu0 %426
        %v429 = vsel %vm338, %v423, %v427
        %v430 = vpack.c.bf16 %v429, %v429
        %s431 = scalar_lea.vmem %s236, 8
        %v432 = vld [vmem:[%s431] sm:$0xf]
        %v433 = vld [vmem:[%s431 + $0x4] sm:$0xf]
        %v436 = vunpack.c.l.b16 %v432
        %v437 = vunpack.c.l.b16 %v433
        %v438 = vpack.c.b16 %v437, %v436
        %vm439 = vcmask 64512
        %v441 = vsel %vm439, %v438, 0
        %vm443 = vcmask 1043456
        %v445 = vsel %vm443, %v430, 0
        %447 = vmatprep.subr.bf16.mxu0 0
        %448 = vmatpush1.bf16.msra.mxu0 0
        %449 = vmatprep.subr.bf16.mxu0 0
        %450 = vmatpush1.bf16.msra.mxu0 0
        %451 = vmatprep.subr.bf16.mxu0 0
        %452 = vmatpush1.bf16.msra.mxu0 0
        %453 = vmatprep.subr.bf16.mxu0 0
        %454 = vmatpush1.bf16.msra.mxu0 0
        %455 = vmatprep.subr.bf16.mxu0 0
        %456 = vmatpush1.bf16.msra.mxu0 0
        %457 = vmatprep.subr.bf16.mxu0 0
        %458 = vmatpush1.bf16.msra.mxu0 0
        %459 = vmatprep.subr.bf16.mxu0 0
        %460 = vmatpush1.bf16.msra.mxu0 0
        %461 = vmatprep.subr.bf16.mxu0 0
        %462 = vmatpush1.bf16.msra.mxu0 %v445
        %463 = vmatprep.subr.bf16.mxu0 0
        %464 = vmatpush2.bf16.msra.mxu0 0
        %465 = vmatprep.subr.bf16.mxu0 0
        %466 = vmatpush2.bf16.msra.mxu0 0
        %467 = vmatprep.subr.bf16.mxu0 0
        %468 = vmatpush2.bf16.msra.mxu0 0
        %469 = vmatprep.subr.bf16.mxu0 0
        %470 = vmatpush2.bf16.msra.mxu0 0
        %471 = vmatprep.subr.bf16.mxu0 0
        %472 = vmatpush2.bf16.msra.mxu0 0
        %473 = vmatprep.subr.bf16.mxu0 0
        %474 = vmatpush2.bf16.msra.mxu0 0
        %475 = vmatprep.subr.bf16.mxu0 0
        %476 = vmatpush2.bf16.msra.mxu0 0
        %477 = vmatprep.subr.bf16.mxu0 0
        %478 = vmatpush2.bf16.msra.mxu0 0
        %479 = vmatprep.mubr.bf16.mxu0 0
        %480 = vmatmul.mubr.bf16.gmra.mxu0 %v441
        %v481 = vpop.f32.mrf.mxu0
        %v482 = vadd.f32 0.0, %v481
        %v483 = vpop.f32.mrf.mxu0
        %v484 = vpop.f32.mrf.mxu0
        %v485 = vadd.f32 0.0, %v484
        %v486 = vpop.f32.mrf.mxu0
        %487 = vdwg.mxu0
        %v490 = vunpack.c.l.b16 %v341
        %v491 = vunpack.c.l.b16 %v342
        %v492 = vpack.c.b16 %v491, %v490
        %v494 = vsel %vm439, %v492, 0
        %v497 = vsel %vm443, %v340, 0
        %499 = vmatprep.subr.bf16.mxu0 0
        %500 = vmatpush1.bf16.msra.mxu0 0
        %501 = vmatprep.subr.bf16.mxu0 0
        %502 = vmatpush1.bf16.msra.mxu0 0
        %503 = vmatprep.subr.bf16.mxu0 0
        %504 = vmatpush1.bf16.msra.mxu0 0
        %505 = vmatprep.subr.bf16.mxu0 0
        %506 = vmatpush1.bf16.msra.mxu0 0
        %507 = vmatprep.subr.bf16.mxu0 0
        %508 = vmatpush1.bf16.msra.mxu0 0
        %509 = vmatprep.subr.bf16.mxu0 0
        %510 = vmatpush1.bf16.msra.mxu0 0
        %511 = vmatprep.subr.bf16.mxu0 0
        %512 = vmatpush1.bf16.msra.mxu0 0
        %513 = vmatprep.subr.bf16.mxu0 0
        %514 = vmatpush1.bf16.msra.mxu0 %v497
        %515 = vmatprep.subr.bf16.mxu0 0
        %516 = vmatpush2.bf16.msra.mxu0 0
        %517 = vmatprep.subr.bf16.mxu0 0
        %518 = vmatpush2.bf16.msra.mxu0 0
        %519 = vmatprep.subr.bf16.mxu0 0
        %520 = vmatpush2.bf16.msra.mxu0 0
        %521 = vmatprep.subr.bf16.mxu0 0
        %522 = vmatpush2.bf16.msra.mxu0 0
        %523 = vmatprep.subr.bf16.mxu0 0
        %524 = vmatpush2.bf16.msra.mxu0 0
        %525 = vmatprep.subr.bf16.mxu0 0
        %526 = vmatpush2.bf16.msra.mxu0 0
        %527 = vmatprep.subr.bf16.mxu0 0
        %528 = vmatpush2.bf16.msra.mxu0 0
        %529 = vmatprep.subr.bf16.mxu0 0
        %530 = vmatpush2.bf16.msra.mxu0 0
        %531 = vmatprep.mubr.bf16.mxu0 0
        %532 = vmatmul.mubr.bf16.gmra.mxu0 %v494
        %v533 = vpop.f32.mrf.mxu0
        %v534 = vadd.f32 %v482, %v533
        %v535 = vpop.f32.mrf.mxu0
        %v536 = vpop.f32.mrf.mxu0
        %v537 = vadd.f32 %v485, %v536
        %v538 = vpop.f32.mrf.mxu0
        %539 = vdwg.mxu0
        %s540 = scalar_lea.vmem %s246, 2
        %v541 = vld [vmem:[%s540] ss:$3 sm:$0x3]
        %s542 = scalar_lea.vmem %s246, 10
        %v543 = vld [vmem:[%s542] ss:$3 sm:$0x3]
        %s544 = scalar_lea.vmem %s246, 18
        %v545 = vld [vmem:[%s544] ss:$3 sm:$0x3]
        %s546 = scalar_lea.vmem %s246, 26
        %v547 = vld [vmem:[%s546] ss:$3 sm:$0x3]
        %s548 = scalar_lea.vmem %s246, 34
        %v549 = vld [vmem:[%s548] ss:$3 sm:$0x3]
        %s550 = scalar_lea.vmem %s246, 42
        %v551 = vld [vmem:[%s550] ss:$3 sm:$0x3]
        %s552 = scalar_lea.vmem %s246, 50
        %v553 = vld [vmem:[%s552] ss:$3 sm:$0x3]
        %s554 = scalar_lea.vmem %s246, 58
        %v555 = vld [vmem:[%s554] ss:$3 sm:$0x3]
        %v556 = vmul.f32 %v541, 0.2
        %v557 = vmul.f32 %v543, 0.2
        %v558 = vmul.f32 %v545, 0.2
        %v559 = vmul.f32 %v547, 0.2
        %v560 = vmul.f32 %v549, 0.2
        %v561 = vmul.f32 %v551, 0.2
        %v562 = vmul.f32 %v553, 0.2
        %v563 = vmul.f32 %v555, 0.2
        %v564 = vmax.f32 %v541, %v556
        %v565 = vmax.f32 %v543, %v557
        %v566 = vmax.f32 %v545, %v558
        %v567 = vmax.f32 %v547, %v559
        %v568 = vmax.f32 %v549, %v560
        %v569 = vmax.f32 %v551, %v561
        %v570 = vmax.f32 %v553, %v562
        %v571 = vmax.f32 %v555, %v563
        %v572 = vcombine.low %v564, %v566
        %v574 = vunpack.c.l.s4 1983009808
        %v575 = vunpack.c.0.s8 %v574
        %v576 = vlaneseq
        %v577 = vshrl.u32 %v576, 7
        %v578 = vsub.s32 %v575, %v577
        %v579 = vrot.slane %v572, %v578
        %v580 = vcombine.low %v565, %v567
        %v582 = vunpack.c.l.s4 1983009808
        %v583 = vunpack.c.0.s8 %v582
        %v584 = vlaneseq
        %v585 = vshrl.u32 %v584, 7
        %v586 = vsub.s32 %v583, %v585
        %v587 = vrot.slane %v580, %v586
        %v588 = vcombine.low %v568, %v570
        %v590 = vunpack.c.l.s4 1983009808
        %v591 = vunpack.c.0.s8 %v590
        %v592 = vlaneseq
        %v593 = vshrl.u32 %v592, 7
        %v594 = vsub.s32 %v591, %v593
        %v595 = vrot.slane %v588, %v594
        %v596 = vcombine.low %v569, %v571
        %v598 = vunpack.c.l.s4 1983009808
        %v599 = vunpack.c.0.s8 %v598
        %v600 = vlaneseq
        %v601 = vshrl.u32 %v600, 7
        %v602 = vsub.s32 %v599, %v601
        %v603 = vrot.slane %v596, %v602
        %v604 = vcombine.low %v579, %v587
        %v606 = vunpack.c.l.s4 1934713408
        %v607 = vunpack.c.0.s8 %v606
        %v608 = vlaneseq
        %v609 = vshrl.u32 %v608, 7
        %v610 = vsub.s32 %v607, %v609
        %v611 = vrot.slane %v604, %v610
        %v612 = vcombine.low %v595, %v603
        %v614 = vunpack.c.l.s4 1934713408
        %v615 = vunpack.c.0.s8 %v614
        %v616 = vlaneseq
        %v617 = vshrl.u32 %v616, 7
        %v618 = vsub.s32 %v615, %v617
        %v619 = vrot.slane %v612, %v618
        %v620 = vcombine.low %v611, %v619
        %v621 = vcombine.high %v611, %v619
        %623 = vrot.lane.b32.xlu0 %v621, 10
        %v624 = vpop.permute.xlu0 %623
        %v626 = vsel %vm338, %v620, %v624
        %v627 = vpack.c.bf16 %v626, %v626
        %s628 = scalar_lea.vmem %s236, 16
        %v629 = vld [vmem:[%s628] sm:$0xf]
        %v630 = vld [vmem:[%s628 + $0x4] sm:$0xf]
        %v633 = vunpack.c.l.b16 %v629
        %v634 = vunpack.c.l.b16 %v630
        %v635 = vpack.c.b16 %v634, %v633
        %v637 = vsel %vm439, %v635, 0
        %v640 = vsel %vm443, %v627, 0
        %642 = vmatprep.subr.bf16.mxu0 0
        %643 = vmatpush1.bf16.msra.mxu0 0
        %644 = vmatprep.subr.bf16.mxu0 0
        %645 = vmatpush1.bf16.msra.mxu0 0
        %646 = vmatprep.subr.bf16.mxu0 0
        %647 = vmatpush1.bf16.msra.mxu0 0
        %648 = vmatprep.subr.bf16.mxu0 0
        %649 = vmatpush1.bf16.msra.mxu0 0
        %650 = vmatprep.subr.bf16.mxu0 0
        %651 = vmatpush1.bf16.msra.mxu0 0
        %652 = vmatprep.subr.bf16.mxu0 0
        %653 = vmatpush1.bf16.msra.mxu0 0
        %654 = vmatprep.subr.bf16.mxu0 0
        %655 = vmatpush1.bf16.msra.mxu0 0
        %656 = vmatprep.subr.bf16.mxu0 0
        %657 = vmatpush1.bf16.msra.mxu0 %v640
        %658 = vmatprep.subr.bf16.mxu0 0
        %659 = vmatpush2.bf16.msra.mxu0 0
        %660 = vmatprep.subr.bf16.mxu0 0
        %661 = vmatpush2.bf16.msra.mxu0 0
        %662 = vmatprep.subr.bf16.mxu0 0
        %663 = vmatpush2.bf16.msra.mxu0 0
        %664 = vmatprep.subr.bf16.mxu0 0
        %665 = vmatpush2.bf16.msra.mxu0 0
        %666 = vmatprep.subr.bf16.mxu0 0
        %667 = vmatpush2.bf16.msra.mxu0 0
        %668 = vmatprep.subr.bf16.mxu0 0
        %669 = vmatpush2.bf16.msra.mxu0 0
        %670 = vmatprep.subr.bf16.mxu0 0
        %671 = vmatpush2.bf16.msra.mxu0 0
        %672 = vmatprep.subr.bf16.mxu0 0
        %673 = vmatpush2.bf16.msra.mxu0 0
        %674 = vmatprep.mubr.bf16.mxu0 0
        %675 = vmatmul.mubr.bf16.gmra.mxu0 %v637
        %v676 = vpop.f32.mrf.mxu0
        %v677 = vadd.f32 0.0, %v676
        %v678 = vpop.f32.mrf.mxu0
        %v679 = vpop.f32.mrf.mxu0
        %v680 = vadd.f32 0.0, %v679
        %v681 = vpop.f32.mrf.mxu0
        %682 = vdwg.mxu0
        %v683 = vadd.f32 %v534, %v677
        %v684 = vadd.f32 %v537, %v680
        %s685 = scalar_lea.vmem %s246, 3
        %v686 = vld [vmem:[%s685] ss:$3 sm:$0x3]
        %s687 = scalar_lea.vmem %s246, 11
        %v688 = vld [vmem:[%s687] ss:$3 sm:$0x3]
        %s689 = scalar_lea.vmem %s246, 19
        %v690 = vld [vmem:[%s689] ss:$3 sm:$0x3]
        %s691 = scalar_lea.vmem %s246, 27
        %v692 = vld [vmem:[%s691] ss:$3 sm:$0x3]
        %s693 = scalar_lea.vmem %s246, 35
        %v694 = vld [vmem:[%s693] ss:$3 sm:$0x3]
        %s695 = scalar_lea.vmem %s246, 43
        %v696 = vld [vmem:[%s695] ss:$3 sm:$0x3]
        %s697 = scalar_lea.vmem %s246, 51
        %v698 = vld [vmem:[%s697] ss:$3 sm:$0x3]
        %s699 = scalar_lea.vmem %s246, 59
        %v700 = vld [vmem:[%s699] ss:$3 sm:$0x3]
        %v701 = vmul.f32 %v686, 0.2
        %v702 = vmul.f32 %v688, 0.2
        %v703 = vmul.f32 %v690, 0.2
        %v704 = vmul.f32 %v692, 0.2
        %v705 = vmul.f32 %v694, 0.2
        %v706 = vmul.f32 %v696, 0.2
        %v707 = vmul.f32 %v698, 0.2
        %v708 = vmul.f32 %v700, 0.2
        %v709 = vmax.f32 %v686, %v701
        %v710 = vmax.f32 %v688, %v702
        %v711 = vmax.f32 %v690, %v703
        %v712 = vmax.f32 %v692, %v704
        %v713 = vmax.f32 %v694, %v705
        %v714 = vmax.f32 %v696, %v706
        %v715 = vmax.f32 %v698, %v707
        %v716 = vmax.f32 %v700, %v708
        %v717 = vcombine.low %v709, %v711
        %v719 = vunpack.c.l.s4 1983009808
        %v720 = vunpack.c.0.s8 %v719
        %v721 = vlaneseq
        %v722 = vshrl.u32 %v721, 7
        %v723 = vsub.s32 %v720, %v722
        %v724 = vrot.slane %v717, %v723
        %v725 = vcombine.low %v710, %v712
        %v727 = vunpack.c.l.s4 1983009808
        %v728 = vunpack.c.0.s8 %v727
        %v729 = vlaneseq
        %v730 = vshrl.u32 %v729, 7
        %v731 = vsub.s32 %v728, %v730
        %v732 = vrot.slane %v725, %v731
        %v733 = vcombine.low %v713, %v715
        %v735 = vunpack.c.l.s4 1983009808
        %v736 = vunpack.c.0.s8 %v735
        %v737 = vlaneseq
        %v738 = vshrl.u32 %v737, 7
        %v739 = vsub.s32 %v736, %v738
        %v740 = vrot.slane %v733, %v739
        %v741 = vcombine.low %v714, %v716
        %v743 = vunpack.c.l.s4 1983009808
        %v744 = vunpack.c.0.s8 %v743
        %v745 = vlaneseq
        %v746 = vshrl.u32 %v745, 7
        %v747 = vsub.s32 %v744, %v746
        %v748 = vrot.slane %v741, %v747
        %v749 = vcombine.low %v724, %v732
        %v751 = vunpack.c.l.s4 1934713408
        %v752 = vunpack.c.0.s8 %v751
        %v753 = vlaneseq
        %v754 = vshrl.u32 %v753, 7
        %v755 = vsub.s32 %v752, %v754
        %v756 = vrot.slane %v749, %v755
        %v757 = vcombine.low %v740, %v748
        %v759 = vunpack.c.l.s4 1934713408
        %v760 = vunpack.c.0.s8 %v759
        %v761 = vlaneseq
        %v762 = vshrl.u32 %v761, 7
        %v763 = vsub.s32 %v760, %v762
        %v764 = vrot.slane %v757, %v763
        %v765 = vcombine.low %v756, %v764
        %v766 = vcombine.high %v756, %v764
        %768 = vrot.lane.b32.xlu0 %v766, 10
        %v769 = vpop.permute.xlu0 %768
        %v771 = vsel %vm338, %v765, %v769
        %v772 = vpack.c.bf16 %v771, %v771
        %s773 = scalar_lea.vmem %s236, 24
        %v774 = vld [vmem:[%s773] sm:$0xf]
        %v775 = vld [vmem:[%s773 + $0x4] sm:$0xf]
        %v778 = vunpack.c.l.b16 %v774
        %v779 = vunpack.c.l.b16 %v775
        %v780 = vpack.c.b16 %v779, %v778
        %v782 = vsel %vm439, %v780, 0
        %v785 = vsel %vm443, %v772, 0
        %787 = vmatprep.subr.bf16.mxu0 0
        %788 = vmatpush1.bf16.msra.mxu0 0
        %789 = vmatprep.subr.bf16.mxu0 0
        %790 = vmatpush1.bf16.msra.mxu0 0
        %791 = vmatprep.subr.bf16.mxu0 0
        %792 = vmatpush1.bf16.msra.mxu0 0
        %793 = vmatprep.subr.bf16.mxu0 0
        %794 = vmatpush1.bf16.msra.mxu0 0
        %795 = vmatprep.subr.bf16.mxu0 0
        %796 = vmatpush1.bf16.msra.mxu0 0
        %797 = vmatprep.subr.bf16.mxu0 0
        %798 = vmatpush1.bf16.msra.mxu0 0
        %799 = vmatprep.subr.bf16.mxu0 0
        %800 = vmatpush1.bf16.msra.mxu0 0
        %801 = vmatprep.subr.bf16.mxu0 0
        %802 = vmatpush1.bf16.msra.mxu0 %v785
        %803 = vmatprep.subr.bf16.mxu0 0
        %804 = vmatpush2.bf16.msra.mxu0 0
        %805 = vmatprep.subr.bf16.mxu0 0
        %806 = vmatpush2.bf16.msra.mxu0 0
        %807 = vmatprep.subr.bf16.mxu0 0
        %808 = vmatpush2.bf16.msra.mxu0 0
        %809 = vmatprep.subr.bf16.mxu0 0
        %810 = vmatpush2.bf16.msra.mxu0 0
        %811 = vmatprep.subr.bf16.mxu0 0
        %812 = vmatpush2.bf16.msra.mxu0 0
        %813 = vmatprep.subr.bf16.mxu0 0
        %814 = vmatpush2.bf16.msra.mxu0 0
        %815 = vmatprep.subr.bf16.mxu0 0
        %816 = vmatpush2.bf16.msra.mxu0 0
        %817 = vmatprep.subr.bf16.mxu0 0
        %818 = vmatpush2.bf16.msra.mxu0 0
        %819 = vmatprep.mubr.bf16.mxu0 0
        %820 = vmatmul.mubr.bf16.gmra.mxu0 %v782
        %v821 = vpop.f32.mrf.mxu0
        %v822 = vadd.f32 0.0, %v821
        %v823 = vpop.f32.mrf.mxu0
        %v824 = vpop.f32.mrf.mxu0
        %v825 = vadd.f32 0.0, %v824
        %v826 = vpop.f32.mrf.mxu0
        %827 = vdwg.mxu0
        %v828 = vadd.f32 %v683, %v822
        %v829 = vadd.f32 %v684, %v825
        %s830 = scalar_lea.vmem %s246, 4
        %v831 = vld [vmem:[%s830] ss:$3 sm:$0x3]
        %s832 = scalar_lea.vmem %s246, 12
        %v833 = vld [vmem:[%s832] ss:$3 sm:$0x3]
        %s834 = scalar_lea.vmem %s246, 20
        %v835 = vld [vmem:[%s834] ss:$3 sm:$0x3]
        %s836 = scalar_lea.vmem %s246, 28
        %v837 = vld [vmem:[%s836] ss:$3 sm:$0x3]
        %s838 = scalar_lea.vmem %s246, 36
        %v839 = vld [vmem:[%s838] ss:$3 sm:$0x3]
        %s840 = scalar_lea.vmem %s246, 44
        %v841 = vld [vmem:[%s840] ss:$3 sm:$0x3]
        %s842 = scalar_lea.vmem %s246, 52
        %v843 = vld [vmem:[%s842] ss:$3 sm:$0x3]
        %s844 = scalar_lea.vmem %s246, 60
        %v845 = vld [vmem:[%s844] ss:$3 sm:$0x3]
        %v846 = vmul.f32 %v831, 0.2
        %v847 = vmul.f32 %v833, 0.2
        %v848 = vmul.f32 %v835, 0.2
        %v849 = vmul.f32 %v837, 0.2
        %v850 = vmul.f32 %v839, 0.2
        %v851 = vmul.f32 %v841, 0.2
        %v852 = vmul.f32 %v843, 0.2
        %v853 = vmul.f32 %v845, 0.2
        %v854 = vmax.f32 %v831, %v846
        %v855 = vmax.f32 %v833, %v847
        %v856 = vmax.f32 %v835, %v848
        %v857 = vmax.f32 %v837, %v849
        %v858 = vmax.f32 %v839, %v850
        %v859 = vmax.f32 %v841, %v851
        %v860 = vmax.f32 %v843, %v852
        %v861 = vmax.f32 %v845, %v853
        %v862 = vcombine.low %v854, %v856
        %v864 = vunpack.c.l.s4 1983009808
        %v865 = vunpack.c.0.s8 %v864
        %v866 = vlaneseq
        %v867 = vshrl.u32 %v866, 7
        %v868 = vsub.s32 %v865, %v867
        %v869 = vrot.slane %v862, %v868
        %v870 = vcombine.low %v855, %v857
        %v872 = vunpack.c.l.s4 1983009808
        %v873 = vunpack.c.0.s8 %v872
        %v874 = vlaneseq
        %v875 = vshrl.u32 %v874, 7
        %v876 = vsub.s32 %v873, %v875
        %v877 = vrot.slane %v870, %v876
        %v878 = vcombine.low %v858, %v860
        %v880 = vunpack.c.l.s4 1983009808
        %v881 = vunpack.c.0.s8 %v880
        %v882 = vlaneseq
        %v883 = vshrl.u32 %v882, 7
        %v884 = vsub.s32 %v881, %v883
        %v885 = vrot.slane %v878, %v884
        %v886 = vcombine.low %v859, %v861
        %v888 = vunpack.c.l.s4 1983009808
        %v889 = vunpack.c.0.s8 %v888
        %v890 = vlaneseq
        %v891 = vshrl.u32 %v890, 7
        %v892 = vsub.s32 %v889, %v891
        %v893 = vrot.slane %v886, %v892
        %v894 = vcombine.low %v869, %v877
        %v896 = vunpack.c.l.s4 1934713408
        %v897 = vunpack.c.0.s8 %v896
        %v898 = vlaneseq
        %v899 = vshrl.u32 %v898, 7
        %v900 = vsub.s32 %v897, %v899
        %v901 = vrot.slane %v894, %v900
        %v902 = vcombine.low %v885, %v893
        %v904 = vunpack.c.l.s4 1934713408
        %v905 = vunpack.c.0.s8 %v904
        %v906 = vlaneseq
        %v907 = vshrl.u32 %v906, 7
        %v908 = vsub.s32 %v905, %v907
        %v909 = vrot.slane %v902, %v908
        %v910 = vcombine.low %v901, %v909
        %v911 = vcombine.high %v901, %v909
        %913 = vrot.lane.b32.xlu0 %v911, 10
        %v914 = vpop.permute.xlu0 %913
        %v916 = vsel %vm338, %v910, %v914
        %v917 = vpack.c.bf16 %v916, %v916
        %s918 = scalar_lea.vmem %s236, 32
        %v919 = vld [vmem:[%s918] sm:$0xf]
        %v920 = vld [vmem:[%s918 + $0x4] sm:$0xf]
        %v923 = vunpack.c.l.b16 %v919
        %v924 = vunpack.c.l.b16 %v920
        %v925 = vpack.c.b16 %v924, %v923
        %v927 = vsel %vm439, %v925, 0
        %v930 = vsel %vm443, %v917, 0
        %932 = vmatprep.subr.bf16.mxu0 0
        %933 = vmatpush1.bf16.msra.mxu0 0
        %934 = vmatprep.subr.bf16.mxu0 0
        %935 = vmatpush1.bf16.msra.mxu0 0
        %936 = vmatprep.subr.bf16.mxu0 0
        %937 = vmatpush1.bf16.msra.mxu0 0
        %938 = vmatprep.subr.bf16.mxu0 0
        %939 = vmatpush1.bf16.msra.mxu0 0
        %940 = vmatprep.subr.bf16.mxu0 0
        %941 = vmatpush1.bf16.msra.mxu0 0
        %942 = vmatprep.subr.bf16.mxu0 0
        %943 = vmatpush1.bf16.msra.mxu0 0
        %944 = vmatprep.subr.bf16.mxu0 0
        %945 = vmatpush1.bf16.msra.mxu0 0
        %946 = vmatprep.subr.bf16.mxu0 0
        %947 = vmatpush1.bf16.msra.mxu0 %v930
        %948 = vmatprep.subr.bf16.mxu0 0
        %949 = vmatpush2.bf16.msra.mxu0 0
        %950 = vmatprep.subr.bf16.mxu0 0
        %951 = vmatpush2.bf16.msra.mxu0 0
        %952 = vmatprep.subr.bf16.mxu0 0
        %953 = vmatpush2.bf16.msra.mxu0 0
        %954 = vmatprep.subr.bf16.mxu0 0
        %955 = vmatpush2.bf16.msra.mxu0 0
        %956 = vmatprep.subr.bf16.mxu0 0
        %957 = vmatpush2.bf16.msra.mxu0 0
        %958 = vmatprep.subr.bf16.mxu0 0
        %959 = vmatpush2.bf16.msra.mxu0 0
        %960 = vmatprep.subr.bf16.mxu0 0
        %961 = vmatpush2.bf16.msra.mxu0 0
        %962 = vmatprep.subr.bf16.mxu0 0
        %963 = vmatpush2.bf16.msra.mxu0 0
        %964 = vmatprep.mubr.bf16.mxu0 0
        %965 = vmatmul.mubr.bf16.gmra.mxu0 %v927
        %v966 = vpop.f32.mrf.mxu0
        %v967 = vadd.f32 0.0, %v966
        %v968 = vpop.f32.mrf.mxu0
        %v969 = vpop.f32.mrf.mxu0
        %v970 = vadd.f32 0.0, %v969
        %v971 = vpop.f32.mrf.mxu0
        %972 = vdwg.mxu0
        %v973 = vadd.f32 %v828, %v967
        %v974 = vadd.f32 %v829, %v970
        %v975 = vld [vmem:[%s241] sm:$0xff]
        %v976 = vld [vmem:[%s241 + $0x8] sm:$0xff]
        %978 = vset.pattern.permute.xlu0 0
        %979 = vperm.xlu0 %978, %v975
        %v980 = vpop.permute.xlu0 %979
        %983 = vset.pattern.permute.xlu0 0
        %984 = vperm.xlu0 %983, %v976
        %v985 = vpop.permute.xlu0 %984
        %v987 = vadd.f32 %v973, %v980
        %v988 = vadd.f32 %v974, %v985
        %s989 = sld [smem:[#allocation2 + %s16]]
        %v990 = vlaneseq
        %v991 = vand.u32 %v990, 127
        %s992 = smul.u32 %s989, 10
        %v993 = vstv %s992
        %vm994 = vcmp.lt.s32.totalorder %v991, %v993
        %v995 = vsel %vm994, 1, 0
        %vm996 = vcmp.eq.s32.totalorder %v995, 1
        %v997 = vsel %vm996, %v987, 0.0
        %v998 = vsel %vm996, %v988, 0.0
        %1001 = vrot.lane.b32.xlu0 %v997, 118
        %v1002 = vpop.permute.xlu0 %1001
        %1003 = vrot.lane.b32.xlu0 %v998, 118
        %v1004 = vpop.permute.xlu0 %1003
        %v1007 = vcombine.high %v997, 0.0
        %v1009 = vunpack.c.l.s4 1983009808
        %v1010 = vunpack.c.0.s8 %v1009
        %v1011 = vlaneseq
        %v1012 = vshrl.u32 %v1011, 7
        %v1013 = vsub.s32 %v1010, %v1012
        %v1014 = vrot.slane %v997, %v1013
        %v1016 = vunpack.c.l.s4 1983009808
        %v1017 = vunpack.c.0.s8 %v1016
        %v1018 = vlaneseq
        %v1019 = vshrl.u32 %v1018, 7
        %v1020 = vsub.s32 %v1017, %v1019
        %v1021 = vrot.slane %v1007, %v1020
        %v1022 = vcombine.high %v1002, 0.0
        %v1024 = vunpack.c.l.s4 1983009808
        %v1025 = vunpack.c.0.s8 %v1024
        %v1026 = vlaneseq
        %v1027 = vshrl.u32 %v1026, 7
        %v1028 = vsub.s32 %v1025, %v1027
        %v1029 = vrot.slane %v1002, %v1028
        %v1031 = vunpack.c.l.s4 1983009808
        %v1032 = vunpack.c.0.s8 %v1031
        %v1033 = vlaneseq
        %v1034 = vshrl.u32 %v1033, 7
        %v1035 = vsub.s32 %v1032, %v1034
        %v1036 = vrot.slane %v1022, %v1035
        %v1037 = vcombine.low %v1014, %v1029
        %v1038 = vcombine.high %v1014, %v1029
        %v1040 = vunpack.c.l.s4 1934713408
        %v1041 = vunpack.c.0.s8 %v1040
        %v1042 = vlaneseq
        %v1043 = vshrl.u32 %v1042, 7
        %v1044 = vsub.s32 %v1041, %v1043
        %v1045 = vrot.slane %v1037, %v1044
        %v1047 = vunpack.c.l.s4 1934713408
        %v1048 = vunpack.c.0.s8 %v1047
        %v1049 = vlaneseq
        %v1050 = vshrl.u32 %v1049, 7
        %v1051 = vsub.s32 %v1048, %v1050
        %v1052 = vrot.slane %v1038, %v1051
        %v1053 = vcombine.low %v1021, %v1036
        %v1054 = vcombine.high %v1021, %v1036
        %v1056 = vunpack.c.l.s4 1934713408
        %v1057 = vunpack.c.0.s8 %v1056
        %v1058 = vlaneseq
        %v1059 = vshrl.u32 %v1058, 7
        %v1060 = vsub.s32 %v1057, %v1059
        %v1061 = vrot.slane %v1053, %v1060
        %v1063 = vunpack.c.l.s4 1934713408
        %v1064 = vunpack.c.0.s8 %v1063
        %v1065 = vlaneseq
        %v1066 = vshrl.u32 %v1065, 7
        %v1067 = vsub.s32 %v1064, %v1066
        %v1068 = vrot.slane %v1054, %v1067
        %v1069 = vcombine.high %v1045, 0.0
        %v1070 = vcombine.high %v1052, 0.0
        %v1071 = vcombine.high %v1061, 0.0
        %v1072 = vcombine.high %v1068, 0.0
        %v1073 = vcombine.high %v998, 0.0
        %v1075 = vunpack.c.l.s4 1983009808
        %v1076 = vunpack.c.0.s8 %v1075
        %v1077 = vlaneseq
        %v1078 = vshrl.u32 %v1077, 7
        %v1079 = vsub.s32 %v1076, %v1078
        %v1080 = vrot.slane %v998, %v1079
        %v1082 = vunpack.c.l.s4 1983009808
        %v1083 = vunpack.c.0.s8 %v1082
        %v1084 = vlaneseq
        %v1085 = vshrl.u32 %v1084, 7
        %v1086 = vsub.s32 %v1083, %v1085
        %v1087 = vrot.slane %v1073, %v1086
        %v1088 = vcombine.high %v1004, 0.0
        %v1090 = vunpack.c.l.s4 1983009808
        %v1091 = vunpack.c.0.s8 %v1090
        %v1092 = vlaneseq
        %v1093 = vshrl.u32 %v1092, 7
        %v1094 = vsub.s32 %v1091, %v1093
        %v1095 = vrot.slane %v1004, %v1094
        %v1097 = vunpack.c.l.s4 1983009808
        %v1098 = vunpack.c.0.s8 %v1097
        %v1099 = vlaneseq
        %v1100 = vshrl.u32 %v1099, 7
        %v1101 = vsub.s32 %v1098, %v1100
        %v1102 = vrot.slane %v1088, %v1101
        %v1103 = vcombine.low %v1080, %v1095
        %v1104 = vcombine.high %v1080, %v1095
        %v1106 = vunpack.c.l.s4 1934713408
        %v1107 = vunpack.c.0.s8 %v1106
        %v1108 = vlaneseq
        %v1109 = vshrl.u32 %v1108, 7
        %v1110 = vsub.s32 %v1107, %v1109
        %v1111 = vrot.slane %v1103, %v1110
        %v1113 = vunpack.c.l.s4 1934713408
        %v1114 = vunpack.c.0.s8 %v1113
        %v1115 = vlaneseq
        %v1116 = vshrl.u32 %v1115, 7
        %v1117 = vsub.s32 %v1114, %v1116
        %v1118 = vrot.slane %v1104, %v1117
        %v1119 = vcombine.low %v1087, %v1102
        %v1120 = vcombine.high %v1087, %v1102
        %v1122 = vunpack.c.l.s4 1934713408
        %v1123 = vunpack.c.0.s8 %v1122
        %v1124 = vlaneseq
        %v1125 = vshrl.u32 %v1124, 7
        %v1126 = vsub.s32 %v1123, %v1125
        %v1127 = vrot.slane %v1119, %v1126
        %v1129 = vunpack.c.l.s4 1934713408
        %v1130 = vunpack.c.0.s8 %v1129
        %v1131 = vlaneseq
        %v1132 = vshrl.u32 %v1131, 7
        %v1133 = vsub.s32 %v1130, %v1132
        %v1134 = vrot.slane %v1120, %v1133
        %v1135 = vcombine.high %v1111, 0.0
        %v1136 = vcombine.high %v1118, 0.0
        %v1137 = vcombine.high %v1127, 0.0
        %v1138 = vcombine.high %v1134, 0.0
        %vm1139 = vcmask 74752
        %1140 = vst.msk [vmem:[%s251] sm:$0x3] %vm1139, %v1045
        %1141 = vst.msk [vmem:[%s251 + $0x2] sm:$0x3] %vm1139, %v1069
        %1142 = vst.msk [vmem:[%s251 + $0x4] sm:$0x3] %vm1139, %v1052
        %1143 = vst.msk [vmem:[%s251 + $0x6] sm:$0x3] %vm1139, %v1070
        %1144 = vst.msk [vmem:[%s251 + $0x8] sm:$0x3] %vm1139, %v1061
        %1145 = vst.msk [vmem:[%s251 + $0xa] sm:$0x3] %vm1139, %v1071
        %1146 = vst.msk [vmem:[%s251 + $0xc] sm:$0x3] %vm1139, %v1068
        %1147 = vst.msk [vmem:[%s251 + $0xe] sm:$0x3] %vm1139, %v1072
        %1148 = vst.msk [vmem:[%s251 + $0x10] sm:$0x3] %vm1139, %v1111
        %1149 = vst.msk [vmem:[%s251 + $0x12] sm:$0x3] %vm1139, %v1135
        %1150 = vst.msk [vmem:[%s251 + $0x14] sm:$0x3] %vm1139, %v1118
        %1151 = vst.msk [vmem:[%s251 + $0x16] sm:$0x3] %vm1139, %v1136
        %1152 = vst.msk [vmem:[%s251 + $0x18] sm:$0x3] %vm1139, %v1127
        %1153 = vst.msk [vmem:[%s251 + $0x1a] sm:$0x3] %vm1139, %v1137
        %1154 = vst.msk [vmem:[%s251 + $0x1c] sm:$0x3] %vm1139, %v1134
        %1155 = vst.msk [vmem:[%s251 + $0x1e] sm:$0x3] %vm1139, %v1138
        %p1156 = scmp.lt.s32.totalorder %s16, 2
        %s1157 = scalar_select %p1156, %s16, 2
        %s1158 = smul.addr %s1157, 16
        %s1159 = smul.addr %s1158, 2
        %s1160 = scalar_lea.vmem %s4, %s1159
        // Predicated region
        $region41: #{multi_period_discriminator.6} parent=35 // pred_check
          %p1161 = pneg %p133
        $region42: #{multi_period_discriminator.6} parent=35 // pred_check_branch
          %1163 = sbr.rel (%p1161) target = $region44
        $region43: #{multi_period_discriminator.6} parent=35 // pred_region
          _
        $region44: #{multi_period_discriminator.6} parent=35 // pred_fallthru
          _
      $region36: #{multi_period_discriminator.6} parent=5 // pred_fallthru
        _
      %p1164 = scmp.le.s32.totalorder 2, %s11
      // Predicated region
      $region45: #{multi_period_discriminator.6} parent=5 // pred_check
        %p1165 = pneg %p1164
      $region46: #{multi_period_discriminator.6} parent=5 // pred_check_branch
        %1167 = sbr.rel (%p1165) target = $region48
      $region47: #{multi_period_discriminator.6} parent=5 // pred_region
        %s1168 = ssub.s32 %s11, 2
        // Predicated region
        $region49: #{multi_period_discriminator.6} parent=47 // pred_check
          %p1169 = pneg %p139
        $region50: #{multi_period_discriminator.6} parent=47 // pred_check_branch
          %1171 = sbr.rel (%p1169) target = $region52
        $region51: #{multi_period_discriminator.6} parent=47 // pred_region
          %p1172 = scmp.lt.s32.totalorder %s17, 2
          %s1173 = scalar_select %p1172, %s17, 2
          %s1174 = smul.addr %s1173, 16
          %s1175 = smul.addr %s1174, 2
          %s1176 = scalar_lea.vmem %s4, %s1175
        $region52: #{multi_period_discriminator.6} parent=47 // pred_fallthru
          _
      $region48: #{multi_period_discriminator.6} parent=5 // pred_fallthru
        _
    $region6: #{multi_period_discriminator.6} parent=1 // loop_footer
      %s15 = sadd.s32 1, %s11
    $region7: #{multi_period_discriminator.6} parent=1 // loop_footer_branch
      %10 = sbr.rel target = $region3
    $region8: #{multi_period_discriminator.6} parent=1 // loop_exit
      _
    %1177 = vsyncpa [#allocation3], 1
    %s1178 = scalar_lea.sflag [#allocation3], 1
    %1179 = vsyncpa %s1178, 1

// kernel: squeeze.22
$region0: #{squeeze.22}
  %s0 = inlined_call_operand.vmem [shape: f32[10], index: 0, kind: input, shape index: {}]
  %s1 = inlined_call_operand.hbm [shape: f32[1,1,2,5], index: 1, kind: output, shape index: {}]
  $region1: #{squeeze.22} parent=0
    #allocation0 [shape = 'u8[1024]{0}', space=vmem, size = 0x400, scoped, tag = 'operand span for operand 1']
    #allocation1 [shape = 's32[1]{0}', space=sflag, size = 0x4, scoped, tag = 'scoped memory for squeeze.22']
    #allocation2 [shape = 'u8[4096]{0}', space=vmem, size = 0x1000, scoped, tag = 'scoped mem for output reshape']
    #allocation3 [shape = 'u8[4096]{0}', space=vmem, size = 0x1000, scoped, tag = 'scoped mem for input reshape']
    %2 = vsyncpa [#allocation1], 0
    %s4 = sshll.u32 1, 1
    %s5 = ssub.s32 %s4, 1
    %v6 = vld [vmem:[%s0] sm:%s5]
    %7 = vst [vmem:[#allocation3] sm:%s5] %v6
    %v8 = vld [vmem:[#allocation3] sm:$0x1]
    %vm9 = vcmask 39936
    %10 = vst.msk [vmem:[#allocation2] sm:$0x1] %vm9, %v8
    %v11 = vld [vmem:[#allocation3] sm:$0x1]
    %12 = vrot.lane.b32.xlu0 %v11, 123
    %v13 = vpop.permute.xlu0 %12
    %vm14 = vcmask 39936
    %s15 = scalar_lea.vmem [#allocation2], 1
    %16 = vst.msk [vmem:[%s15] sm:$0x1] %vm14, %v13
    %s18 = sshll.u32 1, 2
    %s19 = ssub.s32 %s18, 1
    %v21 = vld [vmem:[#allocation2] sm:%s19]
    %s22 = sshll.u32 1, 2
    %s23 = ssub.s32 %s22, 1
    %24 = vst [vmem:[#allocation0] sm:%s23] %v21
    %s26 = ssub.s32 32, 32
    %27 = vsyncadd [#allocation1], %s26
    %s29 = sshll.u32 [#allocation0], 4
    %s30 = int_to_ptr.vmem [resolvable:$true] %s29
    %32 = dma.vmem_to_hbm [thread:$0]  %s30, 32, %s1, [#allocation1]
    %33 = dma.done [#allocation1], 32
    %34 = vsyncpa [#allocation1], 1

// kernel: squeeze.21
$region0: #{squeeze.21}
  %s0 = inlined_call_operand.vmem [shape: f32[1,1,2,10], index: 0, kind: input, shape index: {}]
  %s1 = inlined_call_operand.vmem [shape: f32[1,2,2,5], index: 1, kind: output, shape index: {}]
  $region1: #{squeeze.21} parent=0
    #allocation0 [shape = 'u8[8192]{0}', space=vmem, size = 0x2000, scoped, tag = 'scoped mem for output reshape']
    #allocation1 [shape = 'u8[4096]{0}', space=vmem, size = 0x1000, scoped, tag = 'scoped mem for input reshape']
    %s3 = sshll.u32 1, 2
    %s4 = ssub.s32 %s3, 1
    %v5 = vld [vmem:[%s0] sm:%s4]
    %6 = vst [vmem:[#allocation1] sm:%s4] %v5
    %v7 = vld [vmem:[#allocation1] sm:$0x3]
    %vm8 = vcmask 39936
    %9 = vst.msk [vmem:[#allocation0] ss:$8 sm:$0x3] %vm8, %v7
    %v10 = vld [vmem:[#allocation1] sm:$0x3]
    %11 = vrot.lane.b32.xlu0 %v10, 123
    %v12 = vpop.permute.xlu0 %11
    %vm13 = vcmask 39936
    %s14 = scalar_lea.vmem [#allocation0], 1
    %15 = vst.msk [vmem:[%s14] ss:$8 sm:$0x3] %vm13, %v12
    %s17 = sshll.u32 1, 2
    %s18 = ssub.s32 %s17, 1
    %v20 = vld [vmem:[#allocation0] sm:%s18]
    %s21 = sshll.u32 1, 2
    %s22 = ssub.s32 %s21, 1
    %23 = vst [vmem:[%s1] sm:%s22] %v20
    %s24 = scalar_lea.vmem [#allocation0], 8
    %v25 = vld [vmem:[%s24] sm:%s18]
    %s26 = sshll.u32 1, 2
    %s27 = ssub.s32 %s26, 1
    %s28 = scalar_lea.vmem %s1, 2
    %29 = vst [vmem:[%s28] sm:%s27] %v25

</llo_original>
